<compile_context>
chip_gen: v7x
topology: tpu7x:2x2x1
jax: 0.10.0
libtpu: 0.0.40
codegen_flags: <defaults>
</compile_context>

<pallas_src>
import functools

import jax
import jax.numpy as jnp
from jax.experimental import pallas as pl
from jax.experimental.pallas import tpu as pltpu

BN_EPS = 1e-5
TARGET_ROWS = 2048            # output pixels per grid step (perf review: 1024-2048)
VMEM_FLOOR = 8 * 1024 * 1024
VMEM_CAP = 56 * 1024 * 1024   # stay under v7x's 64 MiB physical VMEM


def _pick_tile_ho(ho, wo):
    """Largest divisor of Ho whose row tile (tile_ho * Wo output pixels) fits TARGET_ROWS."""
    best = 1
    for t in range(1, ho + 1):
        if ho % t == 0 and t * wo <= TARGET_ROWS:
            best = t
    return best


@functools.partial(jax.jit, static_argnames=("stride", "padding", "out_layout"))
def cnn_block_forward(x, weight, gamma, beta, *, stride, padding, out_layout="NCHW"):
    """x: (N, C_in, H, W). weight: (C_out, C_in, KH, KW). gamma/beta: (C_out,).

    Default returns NCHW f32 (module parity). out_layout="NHWC" returns the kernel's
    native NHWC bf16 so a fused consumer avoids the extra transpose + f32 upcast.
    """
    n, c_in, h, w = x.shape
    c_out, _, kh, kw = weight.shape
    hp, wp = h + 2 * padding, w + 2 * padding
    ho = (hp - kh) // stride + 1
    wo = (wp - kw) // stride + 1

    tile_ho = _pick_tile_ho(ho, wo)
    tile_rows = tile_ho * wo
    n_hb = ho // tile_ho
    rows_in = (tile_ho - 1) * stride + kh       # input rows per tile (incl. halo)

    # ---- Wrapper-side layout prep (tiny vs the old HBM patch matrix). ----
    # NCHW -> NHWC, spatial zero-pad, bf16 MXU operand dtype.
    xp = jnp.pad(jnp.transpose(x, (0, 2, 3, 1)).astype(jnp.bfloat16),
                 ((0, 0), (padding, padding), (padding, padding), (0, 0)))
    # Split into row blocks (halo rows duplicated) so plain Blocked BlockSpecs — no
    # overlapping windows — drive the auto-pipeline; only (kh - stride) rows/block extra.
    x_blocks = jnp.stack(
        [xp[:, hb * tile_ho * stride: hb * tile_ho * stride + rows_in]
         for hb in range(n_hb)], axis=1)
    x_blocks = x_blocks.reshape(n * n_hb, rows_in, wp, c_in)

    # Weights as (kh*kw, C_in, C_out): one (C_in, C_out) matmul per filter tap.
    w_taps = jnp.transpose(weight.astype(jnp.float32), (2, 3, 1, 0)).reshape(
        kh * kw, c_in, c_out)

    def conv_tile(xin, w_ref):
        """In-kernel im2col: shift-and-matmul over kh*kw taps.
        xin: (rows_in, wp, c_in) bf16 -> (tile_rows, c_out) f32 accumulator."""
        acc = jnp.zeros((tile_rows, c_out), jnp.float32)
        for di in range(kh):
            for dj in range(kw):
                slab = xin[di:di + (tile_ho - 1) * stride + 1:stride,
                           dj:dj + (wo - 1) * stride + 1:stride, :]
                acc = acc + jnp.dot(slab.reshape(tile_rows, c_in),
                                    w_ref[di * kw + dj],
                                    preferred_element_type=jnp.float32)
        return acc

    def stats_kernel(x_ref, w_ref, sum_ref, sumsq_ref):
        # Per-batch-element partials: n axis 'parallel', hb axis 'arbitrary' accumulates.
        @pl.when(pl.program_id(1) == 0)
        def _():
            sum_ref[...] = jnp.zeros_like(sum_ref)
            sumsq_ref[...] = jnp.zeros_like(sumsq_ref)
        conv = conv_tile(x_ref[0], w_ref)
        sum_ref[...] += jnp.sum(conv, axis=0, keepdims=True)[None]
        sumsq_ref[...] += jnp.sum(conv * conv, axis=0, keepdims=True)[None]

    def apply_kernel(x_ref, w_ref, bias_ref, out_ref):
        conv = conv_tile(x_ref[0], w_ref)        # BN scale already folded into weights
        hpre = conv + bias_ref[0]
        # Single-transcendental SiLU: h * sigmoid(h) == 0.5*h*(1 + tanh(0.5*h)).
        out_ref[0] = (0.5 * hpre * (1.0 + jnp.tanh(0.5 * hpre))).astype(out_ref.dtype)

    # VMEM budget derived from actual tiles (double-buffered in/out + weights + accum).
    in_tile_b = rows_in * wp * c_in * 2
    out_tile_b = tile_rows * c_out * 2
    w_b = kh * kw * c_in * c_out * 2
    vmem_limit = int(min(max(2 * in_tile_b + 2 * out_tile_b + 2 * w_b
                             + tile_rows * c_out * 4 + (1 << 20),
                             VMEM_FLOOR), VMEM_CAP))

    x_spec = pl.BlockSpec((1, rows_in, wp, c_in),
                          lambda nn, hb: (nn * n_hb + hb, 0, 0, 0))
    w_spec = pl.BlockSpec((kh * kw, c_in, c_out), lambda nn, hb: (0, 0, 0))

    # ---- Pass 1: conv + per-channel sum / sum-of-squares (BN training-mode stats). ----
    ch_sum, ch_sumsq = pl.pallas_call(
        stats_kernel,
        out_shape=(jax.ShapeDtypeStruct((n, 1, c_out), jnp.float32),
                   jax.ShapeDtypeStruct((n, 1, c_out), jnp.float32)),
        grid=(n, n_hb),
        in_specs=[x_spec, w_spec],
        out_specs=(pl.BlockSpec((1, 1, c_out), lambda nn, hb: (nn, 0, 0)),
                   pl.BlockSpec((1, 1, c_out), lambda nn, hb: (nn, 0, 0))),
        compiler_params=pltpu.CompilerParams(
            dimension_semantics=("parallel", "arbitrary"),
            vmem_limit_bytes=vmem_limit),
    )(x_blocks, w_taps.astype(jnp.bfloat16))

    m_total = n * ho * wo
    mean = jnp.sum(ch_sum, axis=(0, 1)) / m_total
    var = jnp.maximum(jnp.sum(ch_sumsq, axis=(0, 1)) / m_total - mean * mean, 0.0)
    inv_std = jax.lax.rsqrt(var + BN_EPS)
    scale = gamma.astype(jnp.float32) * inv_std
    bias = beta.astype(jnp.float32) - mean * scale
    # Fold the BN scale into the (kh*kw, C_in, C_out) weights: O(K*C_out) one-time op.
    w_scaled = (w_taps * scale.reshape(1, 1, c_out)).astype(jnp.bfloat16)

    # ---- Pass 2: recompute conv from raw input tiles, + bias, SiLU.  bf16 output. ----
    out3 = pl.pallas_call(
        apply_kernel,
        out_shape=jax.ShapeDtypeStruct((n * n_hb, tile_rows, c_out), jnp.bfloat16),
        grid=(n, n_hb),
        in_specs=[x_spec, w_spec,
                  pl.BlockSpec((1, 1, c_out), lambda nn, hb: (0, 0, 0))],
        out_specs=pl.BlockSpec((1, tile_rows, c_out),
                               lambda nn, hb: (nn * n_hb + hb, 0, 0)),
        compiler_params=pltpu.CompilerParams(
            dimension_semantics=("parallel", "parallel"),
            vmem_limit_bytes=vmem_limit),
    )(x_blocks, w_scaled, bias.reshape(1, 1, c_out))

    out_nhwc = out3.reshape(n, n_hb, tile_ho, wo, c_out).reshape(n, ho, wo, c_out)
    if out_layout == "NHWC":
        return out_nhwc                       # kernel-native bf16 NHWC (no transpose)
    return jnp.transpose(out_nhwc, (0, 3, 1, 2)).astype(jnp.float32)


def _reference(x, weight, gamma, beta, stride, padding):
    conv = jax.lax.conv_general_dilated(
        x.astype(jnp.float32), weight.astype(jnp.float32),
        window_strides=(stride, stride),
        padding=[(padding, padding), (padding, padding)],
        dimension_numbers=("NCHW", "OIHW", "NCHW"))
    mean = conv.mean(axis=(0, 2, 3), keepdims=True)
    var = ((conv - mean) ** 2).mean(axis=(0, 2, 3), keepdims=True)
    hn = (conv - mean) / jnp.sqrt(var + BN_EPS)
    hn = hn * gamma.reshape(1, -1, 1, 1) + beta.reshape(1, -1, 1, 1)
    return hn * jax.nn.sigmoid(hn)


if __name__ == "__main__":
    # Module config: CNNBlock(c_in=4, c_out=8, kernel_size=3, stride=1, padding=1, group=1)
    c_in, c_out, ksize, stride, padding = 4, 8, 3, 1, 1
    n, hsp, wsp = 2, 16, 16

    key = jax.random.PRNGKey(0)
    kx, kw_, kg, kb = jax.random.split(key, 4)
    x = jax.random.normal(kx, (n, c_in, hsp, wsp), dtype=jnp.float32)
    weight = jax.random.normal(kw_, (c_out, c_in, ksize, ksize), dtype=jnp.float32) * 0.1
    gamma = 1.0 + 0.1 * jax.random.normal(kg, (c_out,), dtype=jnp.float32)
    beta = 0.1 * jax.random.normal(kb, (c_out,), dtype=jnp.float32)

    out = cnn_block_forward(x, weight, gamma, beta, stride=stride, padding=padding)
    out = jax.block_until_ready(out)

    ref = _reference(x, weight, gamma, beta, stride, padding)
    assert out.shape == ref.shape == (n, c_out, hsp, wsp)
    err = float(jnp.max(jnp.abs(out - ref)))
    # bf16 MXU operands + bf16 output store -> loosened tolerance vs the f32 reference.
    assert err < 7e-2, f"max abs err {err}"

    print("KERNEL_OK")
</pallas_src>

<mosaic_0001>
module attributes {stable_mosaic.version = 11 : i64} {
  func.func @stats_kernel(%arg0: i32, %arg1: i32, %arg2: memref<1x18x18x4xbf16, #tpu.memory_space<vmem>>, %arg3: memref<9x4x8xbf16, #tpu.memory_space<vmem>>, %arg4: memref<1x1x8xf32, #tpu.memory_space<vmem>>, %arg5: memref<1x1x8xf32, #tpu.memory_space<vmem>>) attributes {dimension_semantics = [#tpu.dimension_semantics<parallel>, #tpu.dimension_semantics<arbitrary>], iteration_bounds = array<i64: 2, 1>, scalar_prefetch = 0 : i64, scratch_operands = 0 : i64, tpu.core_type = #tpu.core_type<tc>, window_params = [{transform_indices = @transform_0, window_bounds = array<i64: 1, 18, 18, 4>}, {pipeline_mode = #tpu.pipeline_mode<synchronous>, transform_indices = @transform_1, window_bounds = array<i64: 9, 4, 8>}, {transform_indices = @transform_2, window_bounds = array<i64: 1, 1, 8>}, {transform_indices = @transform_3, window_bounds = array<i64: 1, 1, 8>}]} {
    %c0_i32 = arith.constant 0 : i32
    %0 = arith.cmpi eq, %arg1, %c0_i32 : i32
    %1 = arith.extui %0 : i1 to i32
    %c0_i32_0 = arith.constant 0 : i32
    %2 = arith.cmpi ne, %1, %c0_i32_0 : i32
    scf.if %2 {
      %cst_46 = arith.constant 0.000000e+00 : f32
      %73 = vector.broadcast %cst_46 : f32 to vector<1x1x8xf32>
      %c0_47 = arith.constant 0 : index
      %c0_48 = arith.constant 0 : index
      %c0_49 = arith.constant 0 : index
      %74 = vector.load %arg4[%c0_47, %c0_48, %c0_49] : memref<1x1x8xf32, #tpu.memory_space<vmem>>, vector<1x1x8xf32>
      tpu.vector_store %arg4[%c0_47, %c0_48, %c0_49], %73 {strides = array<i32>} : memref<1x1x8xf32, #tpu.memory_space<vmem>>, vector<1x1x8xf32>,
      %cst_50 = arith.constant 0.000000e+00 : f32
      %75 = vector.broadcast %cst_50 : f32 to vector<1x1x8xf32>
      %c0_51 = arith.constant 0 : index
      %c0_52 = arith.constant 0 : index
      %c0_53 = arith.constant 0 : index
      %76 = vector.load %arg5[%c0_51, %c0_52, %c0_53] : memref<1x1x8xf32, #tpu.memory_space<vmem>>, vector<1x1x8xf32>
      tpu.vector_store %arg5[%c0_51, %c0_52, %c0_53], %75 {strides = array<i32>} : memref<1x1x8xf32, #tpu.memory_space<vmem>>, vector<1x1x8xf32>,
    } else {
    }
    %c0 = arith.constant 0 : index
    %c0_1 = arith.constant 0 : index
    %c0_2 = arith.constant 0 : index
    %c0_3 = arith.constant 0 : index
    %3 = vector.load %arg2[%c0, %c0_1, %c0_2, %c0_3] : memref<1x18x18x4xbf16, #tpu.memory_space<vmem>>, vector<1x18x18x4xbf16>
    %4 = vector.shape_cast %3 : vector<1x18x18x4xbf16> to vector<18x18x4xbf16>
    %cst = arith.constant 0.000000e+00 : f32
    %5 = vector.broadcast %cst : f32 to vector<256x8xf32>
    %6 = vector.extract_strided_slice %4 {offsets = [0, 0, 0], sizes = [16, 16, 4], strides = [1, 1, 1]} : vector<18x18x4xbf16> to vector<16x16x4xbf16>
    %7 = vector.shape_cast %6 : vector<16x16x4xbf16> to vector<256x4xbf16>
    %c0_4 = arith.constant 0 : index
    %c0_5 = arith.constant 0 : index
    %c0_6 = arith.constant 0 : index
    %8 = vector.load %arg3[%c0_4, %c0_5, %c0_6] : memref<9x4x8xbf16, #tpu.memory_space<vmem>>, vector<1x4x8xbf16>
    %9 = vector.shape_cast %8 : vector<1x4x8xbf16> to vector<4x8xbf16>
    %cst_7 = arith.constant dense<0.000000e+00> : vector<256x8xf32>
    %10 = tpu.matmul %7, %9, %cst_7 {dimension_numbers = #tpu.dot_dimension_numbers<[1], [0], [0], [1], [0, 0, 1, 1], [], []>} : vector<256x4xbf16>, vector<4x8xbf16>, vector<256x8xf32> -> vector<256x8xf32>
    %11 = arith.addf %5, %10 : vector<256x8xf32>
    %12 = vector.extract_strided_slice %4 {offsets = [0, 1, 0], sizes = [16, 16, 4], strides = [1, 1, 1]} : vector<18x18x4xbf16> to vector<16x16x4xbf16>
    %13 = vector.shape_cast %12 : vector<16x16x4xbf16> to vector<256x4xbf16>
    %c1 = arith.constant 1 : index
    %c0_8 = arith.constant 0 : index
    %c0_9 = arith.constant 0 : index
    %14 = vector.load %arg3[%c1, %c0_8, %c0_9] : memref<9x4x8xbf16, #tpu.memory_space<vmem>>, vector<1x4x8xbf16>
    %15 = vector.shape_cast %14 : vector<1x4x8xbf16> to vector<4x8xbf16>
    %cst_10 = arith.constant dense<0.000000e+00> : vector<256x8xf32>
    %16 = tpu.matmul %13, %15, %cst_10 {dimension_numbers = #tpu.dot_dimension_numbers<[1], [0], [0], [1], [0, 0, 1, 1], [], []>} : vector<256x4xbf16>, vector<4x8xbf16>, vector<256x8xf32> -> vector<256x8xf32>
    %17 = arith.addf %11, %16 : vector<256x8xf32>
    %18 = vector.extract_strided_slice %4 {offsets = [0, 2, 0], sizes = [16, 16, 4], strides = [1, 1, 1]} : vector<18x18x4xbf16> to vector<16x16x4xbf16>
    %19 = vector.shape_cast %18 : vector<16x16x4xbf16> to vector<256x4xbf16>
    %c2 = arith.constant 2 : index
    %c0_11 = arith.constant 0 : index
    %c0_12 = arith.constant 0 : index
    %20 = vector.load %arg3[%c2, %c0_11, %c0_12] : memref<9x4x8xbf16, #tpu.memory_space<vmem>>, vector<1x4x8xbf16>
    %21 = vector.shape_cast %20 : vector<1x4x8xbf16> to vector<4x8xbf16>
    %cst_13 = arith.constant dense<0.000000e+00> : vector<256x8xf32>
    %22 = tpu.matmul %19, %21, %cst_13 {dimension_numbers = #tpu.dot_dimension_numbers<[1], [0], [0], [1], [0, 0, 1, 1], [], []>} : vector<256x4xbf16>, vector<4x8xbf16>, vector<256x8xf32> -> vector<256x8xf32>
    %23 = arith.addf %17, %22 : vector<256x8xf32>
    %24 = vector.extract_strided_slice %4 {offsets = [1, 0, 0], sizes = [16, 16, 4], strides = [1, 1, 1]} : vector<18x18x4xbf16> to vector<16x16x4xbf16>
    %25 = vector.shape_cast %24 : vector<16x16x4xbf16> to vector<256x4xbf16>
    %c3 = arith.constant 3 : index
    %c0_14 = arith.constant 0 : index
    %c0_15 = arith.constant 0 : index
    %26 = vector.load %arg3[%c3, %c0_14, %c0_15] : memref<9x4x8xbf16, #tpu.memory_space<vmem>>, vector<1x4x8xbf16>
    %27 = vector.shape_cast %26 : vector<1x4x8xbf16> to vector<4x8xbf16>
    %cst_16 = arith.constant dense<0.000000e+00> : vector<256x8xf32>
    %28 = tpu.matmul %25, %27, %cst_16 {dimension_numbers = #tpu.dot_dimension_numbers<[1], [0], [0], [1], [0, 0, 1, 1], [], []>} : vector<256x4xbf16>, vector<4x8xbf16>, vector<256x8xf32> -> vector<256x8xf32>
    %29 = arith.addf %23, %28 : vector<256x8xf32>
    %30 = vector.extract_strided_slice %4 {offsets = [1, 1, 0], sizes = [16, 16, 4], strides = [1, 1, 1]} : vector<18x18x4xbf16> to vector<16x16x4xbf16>
    %31 = vector.shape_cast %30 : vector<16x16x4xbf16> to vector<256x4xbf16>
    %c4 = arith.constant 4 : index
    %c0_17 = arith.constant 0 : index
    %c0_18 = arith.constant 0 : index
    %32 = vector.load %arg3[%c4, %c0_17, %c0_18] : memref<9x4x8xbf16, #tpu.memory_space<vmem>>, vector<1x4x8xbf16>
    %33 = vector.shape_cast %32 : vector<1x4x8xbf16> to vector<4x8xbf16>
    %cst_19 = arith.constant dense<0.000000e+00> : vector<256x8xf32>
    %34 = tpu.matmul %31, %33, %cst_19 {dimension_numbers = #tpu.dot_dimension_numbers<[1], [0], [0], [1], [0, 0, 1, 1], [], []>} : vector<256x4xbf16>, vector<4x8xbf16>, vector<256x8xf32> -> vector<256x8xf32>
    %35 = arith.addf %29, %34 : vector<256x8xf32>
    %36 = vector.extract_strided_slice %4 {offsets = [1, 2, 0], sizes = [16, 16, 4], strides = [1, 1, 1]} : vector<18x18x4xbf16> to vector<16x16x4xbf16>
    %37 = vector.shape_cast %36 : vector<16x16x4xbf16> to vector<256x4xbf16>
    %c5 = arith.constant 5 : index
    %c0_20 = arith.constant 0 : index
    %c0_21 = arith.constant 0 : index
    %38 = vector.load %arg3[%c5, %c0_20, %c0_21] : memref<9x4x8xbf16, #tpu.memory_space<vmem>>, vector<1x4x8xbf16>
    %39 = vector.shape_cast %38 : vector<1x4x8xbf16> to vector<4x8xbf16>
    %cst_22 = arith.constant dense<0.000000e+00> : vector<256x8xf32>
    %40 = tpu.matmul %37, %39, %cst_22 {dimension_numbers = #tpu.dot_dimension_numbers<[1], [0], [0], [1], [0, 0, 1, 1], [], []>} : vector<256x4xbf16>, vector<4x8xbf16>, vector<256x8xf32> -> vector<256x8xf32>
    %41 = arith.addf %35, %40 : vector<256x8xf32>
    %42 = vector.extract_strided_slice %4 {offsets = [2, 0, 0], sizes = [16, 16, 4], strides = [1, 1, 1]} : vector<18x18x4xbf16> to vector<16x16x4xbf16>
    %43 = vector.shape_cast %42 : vector<16x16x4xbf16> to vector<256x4xbf16>
    %c6 = arith.constant 6 : index
    %c0_23 = arith.constant 0 : index
    %c0_24 = arith.constant 0 : index
    %44 = vector.load %arg3[%c6, %c0_23, %c0_24] : memref<9x4x8xbf16, #tpu.memory_space<vmem>>, vector<1x4x8xbf16>
    %45 = vector.shape_cast %44 : vector<1x4x8xbf16> to vector<4x8xbf16>
    %cst_25 = arith.constant dense<0.000000e+00> : vector<256x8xf32>
    %46 = tpu.matmul %43, %45, %cst_25 {dimension_numbers = #tpu.dot_dimension_numbers<[1], [0], [0], [1], [0, 0, 1, 1], [], []>} : vector<256x4xbf16>, vector<4x8xbf16>, vector<256x8xf32> -> vector<256x8xf32>
    %47 = arith.addf %41, %46 : vector<256x8xf32>
    %48 = vector.extract_strided_slice %4 {offsets = [2, 1, 0], sizes = [16, 16, 4], strides = [1, 1, 1]} : vector<18x18x4xbf16> to vector<16x16x4xbf16>
    %49 = vector.shape_cast %48 : vector<16x16x4xbf16> to vector<256x4xbf16>
    %c7 = arith.constant 7 : index
    %c0_26 = arith.constant 0 : index
    %c0_27 = arith.constant 0 : index
    %50 = vector.load %arg3[%c7, %c0_26, %c0_27] : memref<9x4x8xbf16, #tpu.memory_space<vmem>>, vector<1x4x8xbf16>
    %51 = vector.shape_cast %50 : vector<1x4x8xbf16> to vector<4x8xbf16>
    %cst_28 = arith.constant dense<0.000000e+00> : vector<256x8xf32>
    %52 = tpu.matmul %49, %51, %cst_28 {dimension_numbers = #tpu.dot_dimension_numbers<[1], [0], [0], [1], [0, 0, 1, 1], [], []>} : vector<256x4xbf16>, vector<4x8xbf16>, vector<256x8xf32> -> vector<256x8xf32>
    %53 = arith.addf %47, %52 : vector<256x8xf32>
    %54 = vector.extract_strided_slice %4 {offsets = [2, 2, 0], sizes = [16, 16, 4], strides = [1, 1, 1]} : vector<18x18x4xbf16> to vector<16x16x4xbf16>
    %55 = vector.shape_cast %54 : vector<16x16x4xbf16> to vector<256x4xbf16>
    %c8 = arith.constant 8 : index
    %c0_29 = arith.constant 0 : index
    %c0_30 = arith.constant 0 : index
    %56 = vector.load %arg3[%c8, %c0_29, %c0_30] : memref<9x4x8xbf16, #tpu.memory_space<vmem>>, vector<1x4x8xbf16>
    %57 = vector.shape_cast %56 : vector<1x4x8xbf16> to vector<4x8xbf16>
    %cst_31 = arith.constant dense<0.000000e+00> : vector<256x8xf32>
    %58 = tpu.matmul %55, %57, %cst_31 {dimension_numbers = #tpu.dot_dimension_numbers<[1], [0], [0], [1], [0, 0, 1, 1], [], []>} : vector<256x4xbf16>, vector<4x8xbf16>, vector<256x8xf32> -> vector<256x8xf32>
    %59 = arith.addf %53, %58 : vector<256x8xf32>
    %c0_32 = arith.constant 0 : index
    %c0_33 = arith.constant 0 : index
    %c0_34 = arith.constant 0 : index
    %60 = vector.load %arg4[%c0_32, %c0_33, %c0_34] : memref<1x1x8xf32, #tpu.memory_space<vmem>>, vector<1x1x8xf32>
    %cst_35 = arith.constant dense<0.000000e+00> : vector<8xf32>
    %61 = vector.multi_reduction <add>, %59, %cst_35 [0] : vector<256x8xf32> to vector<8xf32>
    %62 = vector.shape_cast %61 : vector<8xf32> to vector<1x8xf32>
    %63 = vector.shape_cast %62 : vector<1x8xf32> to vector<1x1x8xf32>
    %64 = arith.addf %60, %63 : vector<1x1x8xf32>
    %c0_36 = arith.constant 0 : index
    %c0_37 = arith.constant 0 : index
    %c0_38 = arith.constant 0 : index
    %65 = vector.load %arg4[%c0_36, %c0_37, %c0_38] : memref<1x1x8xf32, #tpu.memory_space<vmem>>, vector<1x1x8xf32>
    tpu.vector_store %arg4[%c0_36, %c0_37, %c0_38], %64 {strides = array<i32>} : memref<1x1x8xf32, #tpu.memory_space<vmem>>, vector<1x1x8xf32>,
    %c0_39 = arith.constant 0 : index
    %c0_40 = arith.constant 0 : index
    %c0_41 = arith.constant 0 : index
    %66 = vector.load %arg5[%c0_39, %c0_40, %c0_41] : memref<1x1x8xf32, #tpu.memory_space<vmem>>, vector<1x1x8xf32>
    %67 = arith.mulf %59, %59 : vector<256x8xf32>
    %cst_42 = arith.constant dense<0.000000e+00> : vector<8xf32>
    %68 = vector.multi_reduction <add>, %67, %cst_42 [0] : vector<256x8xf32> to vector<8xf32>
    %69 = vector.shape_cast %68 : vector<8xf32> to vector<1x8xf32>
    %70 = vector.shape_cast %69 : vector<1x8xf32> to vector<1x1x8xf32>
    %71 = arith.addf %66, %70 : vector<1x1x8xf32>
    %c0_43 = arith.constant 0 : index
    %c0_44 = arith.constant 0 : index
    %c0_45 = arith.constant 0 : index
    %72 = vector.load %arg5[%c0_43, %c0_44, %c0_45] : memref<1x1x8xf32, #tpu.memory_space<vmem>>, vector<1x1x8xf32>
    tpu.vector_store %arg5[%c0_43, %c0_44, %c0_45], %71 {strides = array<i32>} : memref<1x1x8xf32, #tpu.memory_space<vmem>>, vector<1x1x8xf32>,
    return
  }
  func.func @transform_0(%arg0: i32, %arg1: i32) -> (i32, i32, i32, i32) {
    %c1_i32 = arith.constant 1 : i32
    %0 = arith.muli %arg0, %c1_i32 : i32
    %1 = arith.addi %0, %arg1 : i32
    %c0_i32 = arith.constant 0 : i32
    %c0_i32_0 = arith.constant 0 : i32
    %c0_i32_1 = arith.constant 0 : i32
    %c0_i32_2 = arith.constant 0 : i32
    return %1, %c0_i32, %c0_i32_0, %c0_i32_1 : i32, i32, i32, i32
  }
  func.func @transform_1(%arg0: i32, %arg1: i32) -> (i32, i32, i32) {
    %c0_i32 = arith.constant 0 : i32
    %c0_i32_0 = arith.constant 0 : i32
    %c0_i32_1 = arith.constant 0 : i32
    %c0_i32_2 = arith.constant 0 : i32
    return %c0_i32, %c0_i32_0, %c0_i32_1 : i32, i32, i32
  }
  func.func @transform_2(%arg0: i32, %arg1: i32) -> (i32, i32, i32) {
    %c0_i32 = arith.constant 0 : i32
    %c0_i32_0 = arith.constant 0 : i32
    %c0_i32_1 = arith.constant 0 : i32
    return %arg0, %c0_i32, %c0_i32_0 : i32, i32, i32
  }
  func.func @transform_3(%arg0: i32, %arg1: i32) -> (i32, i32, i32) {
    %c0_i32 = arith.constant 0 : i32
    %c0_i32_0 = arith.constant 0 : i32
    %c0_i32_1 = arith.constant 0 : i32
    return %arg0, %c0_i32, %c0_i32_0 : i32, i32, i32
  }
}

module attributes {stable_mosaic.version = 11 : i64} {
  func.func @apply_kernel(%arg0: i32, %arg1: i32, %arg2: memref<1x18x18x4xbf16, #tpu.memory_space<vmem>>, %arg3: memref<9x4x8xbf16, #tpu.memory_space<vmem>>, %arg4: memref<1x1x8xf32, #tpu.memory_space<vmem>>, %arg5: memref<1x256x8xbf16, #tpu.memory_space<vmem>>) attributes {dimension_semantics = [#tpu.dimension_semantics<parallel>, #tpu.dimension_semantics<parallel>], iteration_bounds = array<i64: 2, 1>, scalar_prefetch = 0 : i64, scratch_operands = 0 : i64, tpu.core_type = #tpu.core_type<tc>, window_params = [{transform_indices = @transform_0, window_bounds = array<i64: 1, 18, 18, 4>}, {pipeline_mode = #tpu.pipeline_mode<synchronous>, transform_indices = @transform_1, window_bounds = array<i64: 9, 4, 8>}, {pipeline_mode = #tpu.pipeline_mode<synchronous>, transform_indices = @transform_2, window_bounds = array<i64: 1, 1, 8>}, {transform_indices = @transform_3, window_bounds = array<i64: 1, 256, 8>}]} {
    %c0 = arith.constant 0 : index
    %c0_0 = arith.constant 0 : index
    %c0_1 = arith.constant 0 : index
    %c0_2 = arith.constant 0 : index
    %0 = vector.load %arg2[%c0, %c0_0, %c0_1, %c0_2] : memref<1x18x18x4xbf16, #tpu.memory_space<vmem>>, vector<1x18x18x4xbf16>
    %1 = vector.shape_cast %0 : vector<1x18x18x4xbf16> to vector<18x18x4xbf16>
    %cst = arith.constant 0.000000e+00 : f32
    %2 = vector.broadcast %cst : f32 to vector<256x8xf32>
    %3 = vector.extract_strided_slice %1 {offsets = [0, 0, 0], sizes = [16, 16, 4], strides = [1, 1, 1]} : vector<18x18x4xbf16> to vector<16x16x4xbf16>
    %4 = vector.shape_cast %3 : vector<16x16x4xbf16> to vector<256x4xbf16>
    %c0_3 = arith.constant 0 : index
    %c0_4 = arith.constant 0 : index
    %c0_5 = arith.constant 0 : index
    %5 = vector.load %arg3[%c0_3, %c0_4, %c0_5] : memref<9x4x8xbf16, #tpu.memory_space<vmem>>, vector<1x4x8xbf16>
    %6 = vector.shape_cast %5 : vector<1x4x8xbf16> to vector<4x8xbf16>
    %cst_6 = arith.constant dense<0.000000e+00> : vector<256x8xf32>
    %7 = tpu.matmul %4, %6, %cst_6 {dimension_numbers = #tpu.dot_dimension_numbers<[1], [0], [0], [1], [0, 0, 1, 1], [], []>} : vector<256x4xbf16>, vector<4x8xbf16>, vector<256x8xf32> -> vector<256x8xf32>
    %8 = arith.addf %2, %7 : vector<256x8xf32>
    %9 = vector.extract_strided_slice %1 {offsets = [0, 1, 0], sizes = [16, 16, 4], strides = [1, 1, 1]} : vector<18x18x4xbf16> to vector<16x16x4xbf16>
    %10 = vector.shape_cast %9 : vector<16x16x4xbf16> to vector<256x4xbf16>
    %c1 = arith.constant 1 : index
    %c0_7 = arith.constant 0 : index
    %c0_8 = arith.constant 0 : index
    %11 = vector.load %arg3[%c1, %c0_7, %c0_8] : memref<9x4x8xbf16, #tpu.memory_space<vmem>>, vector<1x4x8xbf16>
    %12 = vector.shape_cast %11 : vector<1x4x8xbf16> to vector<4x8xbf16>
    %cst_9 = arith.constant dense<0.000000e+00> : vector<256x8xf32>
    %13 = tpu.matmul %10, %12, %cst_9 {dimension_numbers = #tpu.dot_dimension_numbers<[1], [0], [0], [1], [0, 0, 1, 1], [], []>} : vector<256x4xbf16>, vector<4x8xbf16>, vector<256x8xf32> -> vector<256x8xf32>
    %14 = arith.addf %8, %13 : vector<256x8xf32>
    %15 = vector.extract_strided_slice %1 {offsets = [0, 2, 0], sizes = [16, 16, 4], strides = [1, 1, 1]} : vector<18x18x4xbf16> to vector<16x16x4xbf16>
    %16 = vector.shape_cast %15 : vector<16x16x4xbf16> to vector<256x4xbf16>
    %c2 = arith.constant 2 : index
    %c0_10 = arith.constant 0 : index
    %c0_11 = arith.constant 0 : index
    %17 = vector.load %arg3[%c2, %c0_10, %c0_11] : memref<9x4x8xbf16, #tpu.memory_space<vmem>>, vector<1x4x8xbf16>
    %18 = vector.shape_cast %17 : vector<1x4x8xbf16> to vector<4x8xbf16>
    %cst_12 = arith.constant dense<0.000000e+00> : vector<256x8xf32>
    %19 = tpu.matmul %16, %18, %cst_12 {dimension_numbers = #tpu.dot_dimension_numbers<[1], [0], [0], [1], [0, 0, 1, 1], [], []>} : vector<256x4xbf16>, vector<4x8xbf16>, vector<256x8xf32> -> vector<256x8xf32>
    %20 = arith.addf %14, %19 : vector<256x8xf32>
    %21 = vector.extract_strided_slice %1 {offsets = [1, 0, 0], sizes = [16, 16, 4], strides = [1, 1, 1]} : vector<18x18x4xbf16> to vector<16x16x4xbf16>
    %22 = vector.shape_cast %21 : vector<16x16x4xbf16> to vector<256x4xbf16>
    %c3 = arith.constant 3 : index
    %c0_13 = arith.constant 0 : index
    %c0_14 = arith.constant 0 : index
    %23 = vector.load %arg3[%c3, %c0_13, %c0_14] : memref<9x4x8xbf16, #tpu.memory_space<vmem>>, vector<1x4x8xbf16>
    %24 = vector.shape_cast %23 : vector<1x4x8xbf16> to vector<4x8xbf16>
    %cst_15 = arith.constant dense<0.000000e+00> : vector<256x8xf32>
    %25 = tpu.matmul %22, %24, %cst_15 {dimension_numbers = #tpu.dot_dimension_numbers<[1], [0], [0], [1], [0, 0, 1, 1], [], []>} : vector<256x4xbf16>, vector<4x8xbf16>, vector<256x8xf32> -> vector<256x8xf32>
    %26 = arith.addf %20, %25 : vector<256x8xf32>
    %27 = vector.extract_strided_slice %1 {offsets = [1, 1, 0], sizes = [16, 16, 4], strides = [1, 1, 1]} : vector<18x18x4xbf16> to vector<16x16x4xbf16>
    %28 = vector.shape_cast %27 : vector<16x16x4xbf16> to vector<256x4xbf16>
    %c4 = arith.constant 4 : index
    %c0_16 = arith.constant 0 : index
    %c0_17 = arith.constant 0 : index
    %29 = vector.load %arg3[%c4, %c0_16, %c0_17] : memref<9x4x8xbf16, #tpu.memory_space<vmem>>, vector<1x4x8xbf16>
    %30 = vector.shape_cast %29 : vector<1x4x8xbf16> to vector<4x8xbf16>
    %cst_18 = arith.constant dense<0.000000e+00> : vector<256x8xf32>
    %31 = tpu.matmul %28, %30, %cst_18 {dimension_numbers = #tpu.dot_dimension_numbers<[1], [0], [0], [1], [0, 0, 1, 1], [], []>} : vector<256x4xbf16>, vector<4x8xbf16>, vector<256x8xf32> -> vector<256x8xf32>
    %32 = arith.addf %26, %31 : vector<256x8xf32>
    %33 = vector.extract_strided_slice %1 {offsets = [1, 2, 0], sizes = [16, 16, 4], strides = [1, 1, 1]} : vector<18x18x4xbf16> to vector<16x16x4xbf16>
    %34 = vector.shape_cast %33 : vector<16x16x4xbf16> to vector<256x4xbf16>
    %c5 = arith.constant 5 : index
    %c0_19 = arith.constant 0 : index
    %c0_20 = arith.constant 0 : index
    %35 = vector.load %arg3[%c5, %c0_19, %c0_20] : memref<9x4x8xbf16, #tpu.memory_space<vmem>>, vector<1x4x8xbf16>
    %36 = vector.shape_cast %35 : vector<1x4x8xbf16> to vector<4x8xbf16>
    %cst_21 = arith.constant dense<0.000000e+00> : vector<256x8xf32>
    %37 = tpu.matmul %34, %36, %cst_21 {dimension_numbers = #tpu.dot_dimension_numbers<[1], [0], [0], [1], [0, 0, 1, 1], [], []>} : vector<256x4xbf16>, vector<4x8xbf16>, vector<256x8xf32> -> vector<256x8xf32>
    %38 = arith.addf %32, %37 : vector<256x8xf32>
    %39 = vector.extract_strided_slice %1 {offsets = [2, 0, 0], sizes = [16, 16, 4], strides = [1, 1, 1]} : vector<18x18x4xbf16> to vector<16x16x4xbf16>
    %40 = vector.shape_cast %39 : vector<16x16x4xbf16> to vector<256x4xbf16>
    %c6 = arith.constant 6 : index
    %c0_22 = arith.constant 0 : index
    %c0_23 = arith.constant 0 : index
    %41 = vector.load %arg3[%c6, %c0_22, %c0_23] : memref<9x4x8xbf16, #tpu.memory_space<vmem>>, vector<1x4x8xbf16>
    %42 = vector.shape_cast %41 : vector<1x4x8xbf16> to vector<4x8xbf16>
    %cst_24 = arith.constant dense<0.000000e+00> : vector<256x8xf32>
    %43 = tpu.matmul %40, %42, %cst_24 {dimension_numbers = #tpu.dot_dimension_numbers<[1], [0], [0], [1], [0, 0, 1, 1], [], []>} : vector<256x4xbf16>, vector<4x8xbf16>, vector<256x8xf32> -> vector<256x8xf32>
    %44 = arith.addf %38, %43 : vector<256x8xf32>
    %45 = vector.extract_strided_slice %1 {offsets = [2, 1, 0], sizes = [16, 16, 4], strides = [1, 1, 1]} : vector<18x18x4xbf16> to vector<16x16x4xbf16>
    %46 = vector.shape_cast %45 : vector<16x16x4xbf16> to vector<256x4xbf16>
    %c7 = arith.constant 7 : index
    %c0_25 = arith.constant 0 : index
    %c0_26 = arith.constant 0 : index
    %47 = vector.load %arg3[%c7, %c0_25, %c0_26] : memref<9x4x8xbf16, #tpu.memory_space<vmem>>, vector<1x4x8xbf16>
    %48 = vector.shape_cast %47 : vector<1x4x8xbf16> to vector<4x8xbf16>
    %cst_27 = arith.constant dense<0.000000e+00> : vector<256x8xf32>
    %49 = tpu.matmul %46, %48, %cst_27 {dimension_numbers = #tpu.dot_dimension_numbers<[1], [0], [0], [1], [0, 0, 1, 1], [], []>} : vector<256x4xbf16>, vector<4x8xbf16>, vector<256x8xf32> -> vector<256x8xf32>
    %50 = arith.addf %44, %49 : vector<256x8xf32>
    %51 = vector.extract_strided_slice %1 {offsets = [2, 2, 0], sizes = [16, 16, 4], strides = [1, 1, 1]} : vector<18x18x4xbf16> to vector<16x16x4xbf16>
    %52 = vector.shape_cast %51 : vector<16x16x4xbf16> to vector<256x4xbf16>
    %c8 = arith.constant 8 : index
    %c0_28 = arith.constant 0 : index
    %c0_29 = arith.constant 0 : index
    %53 = vector.load %arg3[%c8, %c0_28, %c0_29] : memref<9x4x8xbf16, #tpu.memory_space<vmem>>, vector<1x4x8xbf16>
    %54 = vector.shape_cast %53 : vector<1x4x8xbf16> to vector<4x8xbf16>
    %cst_30 = arith.constant dense<0.000000e+00> : vector<256x8xf32>
    %55 = tpu.matmul %52, %54, %cst_30 {dimension_numbers = #tpu.dot_dimension_numbers<[1], [0], [0], [1], [0, 0, 1, 1], [], []>} : vector<256x4xbf16>, vector<4x8xbf16>, vector<256x8xf32> -> vector<256x8xf32>
    %56 = arith.addf %50, %55 : vector<256x8xf32>
    %c0_31 = arith.constant 0 : index
    %c0_32 = arith.constant 0 : index
    %c0_33 = arith.constant 0 : index
    %57 = vector.load %arg4[%c0_31, %c0_32, %c0_33] : memref<1x1x8xf32, #tpu.memory_space<vmem>>, vector<1x1x8xf32>
    %58 = vector.shape_cast %57 : vector<1x1x8xf32> to vector<1x8xf32>
    %59 = vector.broadcast %58 : vector<1x8xf32> to vector<256x8xf32>
    %60 = arith.addf %56, %59 : vector<256x8xf32>
    %cst_34 = arith.constant 5.000000e-01 : f32
    %61 = vector.broadcast %cst_34 : f32 to vector<256x8xf32>
    %62 = arith.mulf %61, %60 : vector<256x8xf32>
    %cst_35 = arith.constant 5.000000e-01 : f32
    %63 = vector.broadcast %cst_35 : f32 to vector<256x8xf32>
    %64 = arith.mulf %63, %60 : vector<256x8xf32>
    %65 = math.tanh %64 : vector<256x8xf32>
    %cst_36 = arith.constant 1.000000e+00 : f32
    %66 = vector.broadcast %cst_36 : f32 to vector<256x8xf32>
    %67 = arith.addf %66, %65 : vector<256x8xf32>
    %68 = arith.mulf %62, %67 : vector<256x8xf32>
    %69 = arith.truncf %68 : vector<256x8xf32> to vector<256x8xbf16>
    %c0_37 = arith.constant 0 : index
    %c0_38 = arith.constant 0 : index
    %c0_39 = arith.constant 0 : index
    %70 = vector.load %arg5[%c0_37, %c0_38, %c0_39] : memref<1x256x8xbf16, #tpu.memory_space<vmem>>, vector<1x256x8xbf16>
    %71 = vector.shape_cast %70 : vector<1x256x8xbf16> to vector<256x8xbf16>
    %72 = vector.shape_cast %69 : vector<256x8xbf16> to vector<1x256x8xbf16>
    tpu.vector_store %arg5[%c0_37, %c0_38, %c0_39], %72 {strides = array<i32>} : memref<1x256x8xbf16, #tpu.memory_space<vmem>>, vector<1x256x8xbf16>,
    return
  }
  func.func @transform_0(%arg0: i32, %arg1: i32) -> (i32, i32, i32, i32) {
    %c1_i32 = arith.constant 1 : i32
    %0 = arith.muli %arg0, %c1_i32 : i32
    %1 = arith.addi %0, %arg1 : i32
    %c0_i32 = arith.constant 0 : i32
    %c0_i32_0 = arith.constant 0 : i32
    %c0_i32_1 = arith.constant 0 : i32
    %c0_i32_2 = arith.constant 0 : i32
    return %1, %c0_i32, %c0_i32_0, %c0_i32_1 : i32, i32, i32, i32
  }
  func.func @transform_1(%arg0: i32, %arg1: i32) -> (i32, i32, i32) {
    %c0_i32 = arith.constant 0 : i32
    %c0_i32_0 = arith.constant 0 : i32
    %c0_i32_1 = arith.constant 0 : i32
    %c0_i32_2 = arith.constant 0 : i32
    return %c0_i32, %c0_i32_0, %c0_i32_1 : i32, i32, i32
  }
  func.func @transform_2(%arg0: i32, %arg1: i32) -> (i32, i32, i32) {
    %c0_i32 = arith.constant 0 : i32
    %c0_i32_0 = arith.constant 0 : i32
    %c0_i32_1 = arith.constant 0 : i32
    %c0_i32_2 = arith.constant 0 : i32
    return %c0_i32, %c0_i32_0, %c0_i32_1 : i32, i32, i32
  }
  func.func @transform_3(%arg0: i32, %arg1: i32) -> (i32, i32, i32) {
    %c1_i32 = arith.constant 1 : i32
    %0 = arith.muli %arg0, %c1_i32 : i32
    %1 = arith.addi %0, %arg1 : i32
    %c0_i32 = arith.constant 0 : i32
    %c0_i32_0 = arith.constant 0 : i32
    %c0_i32_1 = arith.constant 0 : i32
    return %1, %c0_i32, %c0_i32_0 : i32, i32, i32
  }
}

</mosaic_0001>

<llo_original>
// kernel: cnn_block_forward.2
$region0: #{cnn_block_forward.2}
  #allocation0 [shape = 'u32[]', space=smem, size = 0x4, offset = 0x4, fixed_abs, tag = 'smem constant byte address 0x4 - core index']
  #allocation1 [shape = 'u32[144,128]{1,0:T(1,128)}', space=vmem, size = 0x12000, scoped, tag = 'internal scratch']
  %s0 = inlined_call_operand.vmem [shape: bf16[2,18,18,4], index: 0, kind: input, shape index: {}]
  %s1 = inlined_call_operand.vmem [shape: bf16[9,4,8], index: 1, kind: input, shape index: {}]
  %s2 = inlined_call_operand.vmem [shape: f32[2,1,8], index: 2, kind: output, shape index: {0}]
  %s3 = inlined_call_operand.vmem [shape: f32[2,1,8], index: 3, kind: output, shape index: {1}]
  %4 = xla_tuple %s2, %s3
  %s5 = sld [smem:[#allocation0]]
  $region53: #{cnn_block_forward.2} parent=0
    _
  %s7 = ssub.s32 1, %s5
  %s8 = scalar_select 0, %s7, %s5
  loop: start=0, step=1, limit=4
  $region2: #{cnn_block_forward.2} parent=0 // loop_pre_header
    _
  $region3: #{cnn_block_forward.2} parent=0 // loop_header
    %s10 = sphi 0, %s14
    %p11 = scmp.ge.s32.totalorder %s10, 4
    %s17 = sphi 0, %s29
    %s18 = sphi 0, %s25
    %s19 = sphi 0, %s17
    %s20 = sphi 0, %s18
    %s21 = sphi 0, %s19
    %s22 = sphi 0, %s20
    %s34 = sphi 0, %s36
    %s37 = sphi 0, %s34
    %s38 = sphi 0, %s37
    %s54 = sphi 0, %s38
    %s58 = sphi 0, %s58
    %s60 = sphi 0, %s58
    %s61 = sphi 0, %s60
    %s75 = sphi 0, %s61
    %s81 = sphi 0, %s83
    %s84 = sphi 0, %s81
    %s85 = sphi 0, %s84
    %s101 = sphi 0, %s85
    %s107 = sphi 0, %s109
    %s110 = sphi 0, %s107
    %s111 = sphi 0, %s110
    %s127 = sphi 0, %s111
  $region4: #{cnn_block_forward.2} parent=0 // loop_header_branch
    %13 = sbr.rel (%p11) target = $region8
  $region5: #{cnn_block_forward.2} parent=0 // loop_body
    %s15 = ssub.s32 %s10, 1
    %s16 = ssub.s32 %s10, 2
    %s23 = sadd.s32 1, %s18
    %p24 = scmp.ge.s32.totalorder %s23, 1
    %s25 = scalar_select %p24, 0, %s23
    %s26 = sadd.s32 1, %s17
    %s27 = scalar_select %p24, %s26, %s17
    %p28 = scmp.ge.s32.totalorder %s27, 2
    %s29 = scalar_select %p28, 0, %s27
    %s30 = sadd.s32 %s17, %s18
    %s31 = sadd.s32 %s29, %s25
    %s32 = ssub.s32 %s30, %s31
    %p33 = scmp.eq.s32.totalorder %s32, 0
    %s35 = sadd.s32 %s34, 1
    %s36 = scalar_select %p33, %s34, %s35
    %p39 = pneg %p33
    %p40 = scmp.eq.s32.totalorder %s10, 1
    %p41 = por %p39, %p40
    %p42 = scmp.ne.s32.totalorder %s34, %s37
    %p43 = scmp.eq.s32.totalorder %s10, 0
    %p44 = por %p42, %p43
    %p45 = scmp.ne.s32.totalorder %s34, %s37
    %p46 = scmp.eq.s32.totalorder %s15, 1
    %p47 = por %p45, %p46
    %p48 = scmp.ne.s32.totalorder %s37, %s38
    %p49 = scmp.eq.s32.totalorder %s15, 0
    %p50 = por %p48, %p49
    %p51 = scmp.ne.s32.totalorder %s37, %s38
    %p52 = scmp.eq.s32.totalorder %s16, 1
    %p53 = por %p51, %p52
    %p55 = scmp.ne.s32.totalorder %s38, %s54
    %p56 = scmp.eq.s32.totalorder %s16, 0
    %p57 = por %p55, %p56
    %s59 = sadd.s32 %s58, 1
    %p62 = scmp.eq.s32.totalorder %s10, 1
    %p63 = scmp.ne.s32.totalorder %s58, %s60
    %p64 = scmp.eq.s32.totalorder %s10, 0
    %p65 = por %p63, %p64
    %p66 = scmp.ne.s32.totalorder %s58, %s60
    %p67 = scmp.eq.s32.totalorder %s15, 1
    %p68 = por %p66, %p67
    %p69 = scmp.ne.s32.totalorder %s60, %s61
    %p70 = scmp.eq.s32.totalorder %s15, 0
    %p71 = por %p69, %p70
    %p72 = scmp.ne.s32.totalorder %s60, %s61
    %p73 = scmp.eq.s32.totalorder %s16, 1
    %p74 = por %p72, %p73
    %p76 = scmp.ne.s32.totalorder %s61, %s75
    %p77 = scmp.eq.s32.totalorder %s16, 0
    %p78 = por %p76, %p77
    %s79 = ssub.s32 %s17, %s29
    %p80 = scmp.eq.s32.totalorder %s79, 0
    %s82 = sadd.s32 %s81, 1
    %s83 = scalar_select %p80, %s81, %s82
    %p86 = pneg %p80
    %p87 = scmp.eq.s32.totalorder %s10, 1
    %p88 = por %p86, %p87
    %p89 = scmp.ne.s32.totalorder %s81, %s84
    %p90 = scmp.eq.s32.totalorder %s10, 0
    %p91 = por %p89, %p90
    %p92 = scmp.ne.s32.totalorder %s81, %s84
    %p93 = scmp.eq.s32.totalorder %s15, 1
    %p94 = por %p92, %p93
    %p95 = scmp.ne.s32.totalorder %s84, %s85
    %p96 = scmp.eq.s32.totalorder %s15, 0
    %p97 = por %p95, %p96
    %p98 = scmp.ne.s32.totalorder %s84, %s85
    %p99 = scmp.eq.s32.totalorder %s16, 1
    %p100 = por %p98, %p99
    %p102 = scmp.ne.s32.totalorder %s85, %s101
    %p103 = scmp.eq.s32.totalorder %s16, 0
    %p104 = por %p102, %p103
    %s105 = ssub.s32 %s17, %s29
    %p106 = scmp.eq.s32.totalorder %s105, 0
    %s108 = sadd.s32 %s107, 1
    %s109 = scalar_select %p106, %s107, %s108
    %p112 = pneg %p106
    %p113 = scmp.eq.s32.totalorder %s10, 1
    %p114 = por %p112, %p113
    %p115 = scmp.ne.s32.totalorder %s107, %s110
    %p116 = scmp.eq.s32.totalorder %s10, 0
    %p117 = por %p115, %p116
    %p118 = scmp.ne.s32.totalorder %s107, %s110
    %p119 = scmp.eq.s32.totalorder %s15, 1
    %p120 = por %p118, %p119
    %p121 = scmp.ne.s32.totalorder %s110, %s111
    %p122 = scmp.eq.s32.totalorder %s15, 0
    %p123 = por %p121, %p122
    %p124 = scmp.ne.s32.totalorder %s110, %s111
    %p125 = scmp.eq.s32.totalorder %s16, 1
    %p126 = por %p124, %p125
    %p128 = scmp.ne.s32.totalorder %s111, %s127
    %p129 = scmp.eq.s32.totalorder %s16, 0
    %p130 = por %p128, %p129
    %p131 = scmp.le.s32.totalorder 1, %s10
    %p132 = scmp.lt.s32.totalorder %s10, 3
    %p133 = pnand %p131, %p132
    %p134 = pneg %p133
    // Predicated region
    $region9: #{cnn_block_forward.2} parent=5 // pred_check
      _
    $region10: #{cnn_block_forward.2} parent=5 // pred_check_branch
      %136 = sbr.rel (%p133) target = $region12
    $region11: #{cnn_block_forward.2} parent=5 // pred_region
      %s137 = ssub.s32 %s10, 1
      // Predicated region
      $region13: #{cnn_block_forward.2} parent=11 // pred_check
        %p138 = pneg %p71
      $region14: #{cnn_block_forward.2} parent=11 // pred_check_branch
        %140 = sbr.rel (%p138) target = $region16
      $region15: #{cnn_block_forward.2} parent=11 // pred_region
        _
      $region16: #{cnn_block_forward.2} parent=11 // pred_fallthru
        _
    $region12: #{cnn_block_forward.2} parent=5 // pred_fallthru
      _
    %p141 = scmp.lt.s32.totalorder %s10, 2
    // Predicated region
    $region17: #{cnn_block_forward.2} parent=5 // pred_check
      %p142 = pneg %p141
    $region18: #{cnn_block_forward.2} parent=5 // pred_check_branch
      %144 = sbr.rel (%p142) target = $region20
    $region19: #{cnn_block_forward.2} parent=5 // pred_region
      // Predicated region
      $region21: #{cnn_block_forward.2} parent=19 // pred_check
        %p145 = pneg %p44
      $region22: #{cnn_block_forward.2} parent=19 // pred_check_branch
        %147 = sbr.rel (%p145) target = $region24
      $region23: #{cnn_block_forward.2} parent=19 // pred_region
        %s148 = sadd.s32 %s17, %s18
        %p149 = scmp.lt.s32.totalorder %s148, 1
        %s150 = scalar_select %p149, %s148, 1
        %s151 = smul.addr %s150, 54
        %s152 = smul.addr %s151, 4
        %s153 = scalar_lea.vmem %s0, %s152
        %s154 = sadd.s32 %s17, %s18
      $region24: #{cnn_block_forward.2} parent=19 // pred_fallthru
        _
    $region20: #{cnn_block_forward.2} parent=5 // pred_fallthru
      _
    %p155 = scmp.le.s32.totalorder 1, %s10
    %p156 = scmp.lt.s32.totalorder %s10, 3
    %p157 = pnand %p155, %p156
    %p158 = pneg %p157
    // Predicated region
    $region25: #{cnn_block_forward.2} parent=5 // pred_check
      _
    $region26: #{cnn_block_forward.2} parent=5 // pred_check_branch
      %160 = sbr.rel (%p157) target = $region28
    $region27: #{cnn_block_forward.2} parent=5 // pred_region
      %s161 = ssub.s32 %s10, 1
      %s162 = sadd.s32 %s19, %s20
      %p163 = scmp.lt.s32.totalorder %s162, 1
      %s164 = scalar_select %p163, %s162, 1
      %s165 = smul.addr %s164, 54
      %s166 = smul.addr %s165, 4
      %s167 = scalar_lea.vmem %s0, %s166
      %p168 = pneg %p50
      %p169 = pneg %p47
      %p170 = pneg %p71
      %p171 = pneg %p68
      %p172 = pneg %p97
      %p173 = pneg %p94
      %p174 = scmp.lt.s32.totalorder %s19, 1
      %s175 = scalar_select %p174, %s19, 1
      %s176 = scalar_lea.vmem %s2, %s175
      %p177 = pneg %p123
      %p178 = pneg %p120
      %p179 = scmp.lt.s32.totalorder %s19, 1
      %s180 = scalar_select %p179, %s19, 1
      %s181 = scalar_lea.vmem %s3, %s180
      %s182 = sadd.s32 %s19, %s20
      %p183 = scmp.lt.s32.totalorder %s182, 1
      %s184 = scalar_select %p183, %s182, 1
      %s185 = smul.addr %s184, 54
      %s186 = smul.addr %s185, 4
      %s187 = scalar_lea.vmem %s0, %s186
      %s188 = sadd.s32 %s19, %s20
      %p189 = scmp.lt.s32.totalorder %s19, 1
      %s190 = scalar_select %p189, %s19, 1
      %s191 = scalar_lea.vmem %s2, %s190
      %p192 = scmp.lt.s32.totalorder %s19, 1
      %s193 = scalar_select %p192, %s19, 1
      %s194 = scalar_lea.vmem %s3, %s193
      %p196 = scmp.eq.s32.totalorder %s20, 0
      // Predicated region
      $region29: #{cnn_block_forward.2} parent=27 // pred_check
        %p197 = pneg %p196
      $region30: #{cnn_block_forward.2} parent=27 // pred_check_branch
        %199 = sbr.rel (%p197) target = $region32
      $region31: #{cnn_block_forward.2} parent=27 // pred_region
        %vm200 = vcmask 57344
        %201 = vst.msk [vmem:[%s191] sm:$0x1] %vm200, 0.0
        %202 = vst.msk [vmem:[%s194] sm:$0x1] %vm200, 0.0
      $region32: #{cnn_block_forward.2} parent=27 // pred_fallthru
        _
      %v203 = vld [vmem:[%s187] sm:$0xf]
      %v204 = vld [vmem:[%s187 + $0x4] sm:$0xf]
      %v205 = vld [vmem:[%s187 + $0x8] sm:$0x1]
      %v206 = vld [vmem:[%s187 + $0xc] sm:$0xf]
      %v207 = vld [vmem:[%s187 + $0x10] sm:$0xf]
      %v208 = vld [vmem:[%s187 + $0x14] sm:$0x1]
      %v209 = vld [vmem:[%s187 + $0x18] sm:$0xf]
      %v210 = vld [vmem:[%s187 + $0x1c] sm:$0xf]
      %v211 = vld [vmem:[%s187 + $0x20] sm:$0x1]
      %v212 = vld [vmem:[%s187 + $0x24] sm:$0xf]
      %v213 = vld [vmem:[%s187 + $0x28] sm:$0xf]
      %v214 = vld [vmem:[%s187 + $0x2c] sm:$0x1]
      %v215 = vld [vmem:[%s187 + $0x30] sm:$0xf]
      %v216 = vld [vmem:[%s187 + $0x34] sm:$0xf]
      %v217 = vld [vmem:[%s187 + $0x38] sm:$0x1]
      %v218 = vld [vmem:[%s187 + $0x3c] sm:$0xf]
      %v219 = vld [vmem:[%s187 + $0x40] sm:$0xf]
      %v220 = vld [vmem:[%s187 + $0x44] sm:$0x1]
      %v221 = vld [vmem:[%s187 + $0x48] sm:$0xf]
      %v222 = vld [vmem:[%s187 + $0x4c] sm:$0xf]
      %v223 = vld [vmem:[%s187 + $0x50] sm:$0x1]
      %v224 = vld [vmem:[%s187 + $0x54] sm:$0xf]
      %v225 = vld [vmem:[%s187 + $0x58] sm:$0xf]
      %v226 = vld [vmem:[%s187 + $0x5c] sm:$0x1]
      %v227 = vld [vmem:[%s187 + $0x60] sm:$0xf]
      %v228 = vld [vmem:[%s187 + $0x64] sm:$0xf]
      %v229 = vld [vmem:[%s187 + $0x68] sm:$0x1]
      %v230 = vld [vmem:[%s187 + $0x6c] sm:$0xf]
      %v231 = vld [vmem:[%s187 + $0x70] sm:$0xf]
      %v232 = vld [vmem:[%s187 + $0x74] sm:$0x1]
      %v233 = vld [vmem:[%s187 + $0x78] sm:$0xf]
      %v234 = vld [vmem:[%s187 + $0x7c] sm:$0xf]
      %v235 = vld [vmem:[%s187 + $0x80] sm:$0x1]
      %v236 = vld [vmem:[%s187 + $0x84] sm:$0xf]
      %v237 = vld [vmem:[%s187 + $0x88] sm:$0xf]
      %v238 = vld [vmem:[%s187 + $0x8c] sm:$0x1]
      %v239 = vld [vmem:[%s187 + $0x90] sm:$0xf]
      %v240 = vld [vmem:[%s187 + $0x94] sm:$0xf]
      %v241 = vld [vmem:[%s187 + $0x98] sm:$0x1]
      %v242 = vld [vmem:[%s187 + $0x9c] sm:$0xf]
      %v243 = vld [vmem:[%s187 + $0xa0] sm:$0xf]
      %v244 = vld [vmem:[%s187 + $0xa4] sm:$0x1]
      %v245 = vld [vmem:[%s187 + $0xa8] sm:$0xf]
      %v246 = vld [vmem:[%s187 + $0xac] sm:$0xf]
      %v247 = vld [vmem:[%s187 + $0xb0] sm:$0x1]
      %v248 = vld [vmem:[%s187 + $0xb4] sm:$0xf]
      %v249 = vld [vmem:[%s187 + $0xb8] sm:$0xf]
      %v250 = vld [vmem:[%s187 + $0xbc] sm:$0x1]
      %v251 = vld [vmem:[%s187 + $0xc0] sm:$0xf]
      %v252 = vld [vmem:[%s187 + $0xc4] sm:$0xf]
      %v253 = vld [vmem:[%s187 + $0xc8] sm:$0x1]
      %v254 = vld [vmem:[%s187 + $0xcc] sm:$0xf]
      %v255 = vld [vmem:[%s187 + $0xd0] sm:$0xf]
      %v256 = vld [vmem:[%s187 + $0xd4] sm:$0x1]
      %v257 = vld [vmem:[%s1] sm:$0x3]
      %vm258 = vsmask.f32 3328
      %vm259 = vsmask.f32 7440
      %vm260 = vmor %vm258, %vm259
      %v262 = vshrl.u32 %v203, 16
      %v264 = vrot.slane %v262, 4
      %v265 = vshll.u32 %v203, 16
      %v267 = vrot.slane %v265, 5
      %v268 = vor.u32 %v264, %v267
      %v269 = vrot.slane %v268, 4
      %v271 = vshll.u32 %v204, 16
      %v273 = vrot.slane %v271, 5
      %v274 = vsel %vm260, %v269, %v273
      %v275 = vshrl.u32 %v204, 16
      %v277 = vrot.slane %v275, 4
      %v278 = vor.u32 %v277, %v273
      %v279 = vrot.slane %v278, 4
      %v281 = vshll.u32 %v205, 16
      %v283 = vrot.slane %v281, 5
      %v284 = vsel %vm260, %v279, %v283
      %v286 = vshrl.u32 %v206, 16
      %v288 = vrot.slane %v286, 4
      %v289 = vshll.u32 %v206, 16
      %v291 = vrot.slane %v289, 5
      %v292 = vor.u32 %v288, %v291
      %v293 = vrot.slane %v292, 4
      %v295 = vshll.u32 %v207, 16
      %v297 = vrot.slane %v295, 5
      %v298 = vsel %vm260, %v293, %v297
      %v299 = vshrl.u32 %v207, 16
      %v301 = vrot.slane %v299, 4
      %v302 = vor.u32 %v301, %v297
      %v303 = vrot.slane %v302, 4
      %v305 = vshll.u32 %v208, 16
      %v307 = vrot.slane %v305, 5
      %v308 = vsel %vm260, %v303, %v307
      %v310 = vshrl.u32 %v209, 16
      %v312 = vrot.slane %v310, 4
      %v313 = vshll.u32 %v209, 16
      %v315 = vrot.slane %v313, 5
      %v316 = vor.u32 %v312, %v315
      %v317 = vrot.slane %v316, 4
      %v319 = vshll.u32 %v210, 16
      %v321 = vrot.slane %v319, 5
      %v322 = vsel %vm260, %v317, %v321
      %v323 = vshrl.u32 %v210, 16
      %v325 = vrot.slane %v323, 4
      %v326 = vor.u32 %v325, %v321
      %v327 = vrot.slane %v326, 4
      %v329 = vshll.u32 %v211, 16
      %v331 = vrot.slane %v329, 5
      %v332 = vsel %vm260, %v327, %v331
      %v334 = vshrl.u32 %v212, 16
      %v336 = vrot.slane %v334, 4
      %v337 = vshll.u32 %v212, 16
      %v339 = vrot.slane %v337, 5
      %v340 = vor.u32 %v336, %v339
      %v341 = vrot.slane %v340, 4
      %v343 = vshll.u32 %v213, 16
      %v345 = vrot.slane %v343, 5
      %v346 = vsel %vm260, %v341, %v345
      %v347 = vshrl.u32 %v213, 16
      %v349 = vrot.slane %v347, 4
      %v350 = vor.u32 %v349, %v345
      %v351 = vrot.slane %v350, 4
      %v353 = vshll.u32 %v214, 16
      %v355 = vrot.slane %v353, 5
      %v356 = vsel %vm260, %v351, %v355
      %v358 = vshrl.u32 %v215, 16
      %v360 = vrot.slane %v358, 4
      %v361 = vshll.u32 %v215, 16
      %v363 = vrot.slane %v361, 5
      %v364 = vor.u32 %v360, %v363
      %v365 = vrot.slane %v364, 4
      %v367 = vshll.u32 %v216, 16
      %v369 = vrot.slane %v367, 5
      %v370 = vsel %vm260, %v365, %v369
      %v371 = vshrl.u32 %v216, 16
      %v373 = vrot.slane %v371, 4
      %v374 = vor.u32 %v373, %v369
      %v375 = vrot.slane %v374, 4
      %v377 = vshll.u32 %v217, 16
      %v379 = vrot.slane %v377, 5
      %v380 = vsel %vm260, %v375, %v379
      %v382 = vshrl.u32 %v218, 16
      %v384 = vrot.slane %v382, 4
      %v385 = vshll.u32 %v218, 16
      %v387 = vrot.slane %v385, 5
      %v388 = vor.u32 %v384, %v387
      %v389 = vrot.slane %v388, 4
      %v391 = vshll.u32 %v219, 16
      %v393 = vrot.slane %v391, 5
      %v394 = vsel %vm260, %v389, %v393
      %v395 = vshrl.u32 %v219, 16
      %v397 = vrot.slane %v395, 4
      %v398 = vor.u32 %v397, %v393
      %v399 = vrot.slane %v398, 4
      %v401 = vshll.u32 %v220, 16
      %v403 = vrot.slane %v401, 5
      %v404 = vsel %vm260, %v399, %v403
      %v406 = vshrl.u32 %v221, 16
      %v408 = vrot.slane %v406, 4
      %v409 = vshll.u32 %v221, 16
      %v411 = vrot.slane %v409, 5
      %v412 = vor.u32 %v408, %v411
      %v413 = vrot.slane %v412, 4
      %v415 = vshll.u32 %v222, 16
      %v417 = vrot.slane %v415, 5
      %v418 = vsel %vm260, %v413, %v417
      %v419 = vshrl.u32 %v222, 16
      %v421 = vrot.slane %v419, 4
      %v422 = vor.u32 %v421, %v417
      %v423 = vrot.slane %v422, 4
      %v425 = vshll.u32 %v223, 16
      %v427 = vrot.slane %v425, 5
      %v428 = vsel %vm260, %v423, %v427
      %v430 = vshrl.u32 %v224, 16
      %v432 = vrot.slane %v430, 4
      %v433 = vshll.u32 %v224, 16
      %v435 = vrot.slane %v433, 5
      %v436 = vor.u32 %v432, %v435
      %v437 = vrot.slane %v436, 4
      %v439 = vshll.u32 %v225, 16
      %v441 = vrot.slane %v439, 5
      %v442 = vsel %vm260, %v437, %v441
      %v443 = vshrl.u32 %v225, 16
      %v445 = vrot.slane %v443, 4
      %v446 = vor.u32 %v445, %v441
      %v447 = vrot.slane %v446, 4
      %v449 = vshll.u32 %v226, 16
      %v451 = vrot.slane %v449, 5
      %v452 = vsel %vm260, %v447, %v451
      %v454 = vshrl.u32 %v227, 16
      %v456 = vrot.slane %v454, 4
      %v457 = vshll.u32 %v227, 16
      %v459 = vrot.slane %v457, 5
      %v460 = vor.u32 %v456, %v459
      %v461 = vrot.slane %v460, 4
      %v463 = vshll.u32 %v228, 16
      %v465 = vrot.slane %v463, 5
      %v466 = vsel %vm260, %v461, %v465
      %v467 = vshrl.u32 %v228, 16
      %v469 = vrot.slane %v467, 4
      %v470 = vor.u32 %v469, %v465
      %v471 = vrot.slane %v470, 4
      %v473 = vshll.u32 %v229, 16
      %v475 = vrot.slane %v473, 5
      %v476 = vsel %vm260, %v471, %v475
      %v478 = vshrl.u32 %v230, 16
      %v480 = vrot.slane %v478, 4
      %v481 = vshll.u32 %v230, 16
      %v483 = vrot.slane %v481, 5
      %v484 = vor.u32 %v480, %v483
      %v485 = vrot.slane %v484, 4
      %v487 = vshll.u32 %v231, 16
      %v489 = vrot.slane %v487, 5
      %v490 = vsel %vm260, %v485, %v489
      %v491 = vshrl.u32 %v231, 16
      %v493 = vrot.slane %v491, 4
      %v494 = vor.u32 %v493, %v489
      %v495 = vrot.slane %v494, 4
      %v497 = vshll.u32 %v232, 16
      %v499 = vrot.slane %v497, 5
      %v500 = vsel %vm260, %v495, %v499
      %v502 = vshrl.u32 %v233, 16
      %v504 = vrot.slane %v502, 4
      %v505 = vshll.u32 %v233, 16
      %v507 = vrot.slane %v505, 5
      %v508 = vor.u32 %v504, %v507
      %v509 = vrot.slane %v508, 4
      %v511 = vshll.u32 %v234, 16
      %v513 = vrot.slane %v511, 5
      %v514 = vsel %vm260, %v509, %v513
      %v515 = vshrl.u32 %v234, 16
      %v517 = vrot.slane %v515, 4
      %v518 = vor.u32 %v517, %v513
      %v519 = vrot.slane %v518, 4
      %v521 = vshll.u32 %v235, 16
      %v523 = vrot.slane %v521, 5
      %v524 = vsel %vm260, %v519, %v523
      %v526 = vshrl.u32 %v236, 16
      %v528 = vrot.slane %v526, 4
      %v529 = vshll.u32 %v236, 16
      %v531 = vrot.slane %v529, 5
      %v532 = vor.u32 %v528, %v531
      %v533 = vrot.slane %v532, 4
      %v535 = vshll.u32 %v237, 16
      %v537 = vrot.slane %v535, 5
      %v538 = vsel %vm260, %v533, %v537
      %v539 = vshrl.u32 %v237, 16
      %v541 = vrot.slane %v539, 4
      %v542 = vor.u32 %v541, %v537
      %v543 = vrot.slane %v542, 4
      %v545 = vshll.u32 %v238, 16
      %v547 = vrot.slane %v545, 5
      %v548 = vsel %vm260, %v543, %v547
      %v550 = vshrl.u32 %v239, 16
      %v552 = vrot.slane %v550, 4
      %v553 = vshll.u32 %v239, 16
      %v555 = vrot.slane %v553, 5
      %v556 = vor.u32 %v552, %v555
      %v557 = vrot.slane %v556, 4
      %v559 = vshll.u32 %v240, 16
      %v561 = vrot.slane %v559, 5
      %v562 = vsel %vm260, %v557, %v561
      %v563 = vshrl.u32 %v240, 16
      %v565 = vrot.slane %v563, 4
      %v566 = vor.u32 %v565, %v561
      %v567 = vrot.slane %v566, 4
      %v569 = vshll.u32 %v241, 16
      %v571 = vrot.slane %v569, 5
      %v572 = vsel %vm260, %v567, %v571
      %v574 = vshrl.u32 %v242, 16
      %v576 = vrot.slane %v574, 4
      %v577 = vshll.u32 %v242, 16
      %v579 = vrot.slane %v577, 5
      %v580 = vor.u32 %v576, %v579
      %v581 = vrot.slane %v580, 4
      %v583 = vshll.u32 %v243, 16
      %v585 = vrot.slane %v583, 5
      %v586 = vsel %vm260, %v581, %v585
      %v587 = vshrl.u32 %v243, 16
      %v589 = vrot.slane %v587, 4
      %v590 = vor.u32 %v589, %v585
      %v591 = vrot.slane %v590, 4
      %v593 = vshll.u32 %v244, 16
      %v595 = vrot.slane %v593, 5
      %v596 = vsel %vm260, %v591, %v595
      %v598 = vshrl.u32 %v245, 16
      %v600 = vrot.slane %v598, 4
      %v601 = vshll.u32 %v245, 16
      %v603 = vrot.slane %v601, 5
      %v604 = vor.u32 %v600, %v603
      %v605 = vrot.slane %v604, 4
      %v607 = vshll.u32 %v246, 16
      %v609 = vrot.slane %v607, 5
      %v610 = vsel %vm260, %v605, %v609
      %v611 = vshrl.u32 %v246, 16
      %v613 = vrot.slane %v611, 4
      %v614 = vor.u32 %v613, %v609
      %v615 = vrot.slane %v614, 4
      %v617 = vshll.u32 %v247, 16
      %v619 = vrot.slane %v617, 5
      %v620 = vsel %vm260, %v615, %v619
      %v622 = vshrl.u32 %v248, 16
      %v624 = vrot.slane %v622, 4
      %v625 = vshll.u32 %v248, 16
      %v627 = vrot.slane %v625, 5
      %v628 = vor.u32 %v624, %v627
      %v629 = vrot.slane %v628, 4
      %v631 = vshll.u32 %v249, 16
      %v633 = vrot.slane %v631, 5
      %v634 = vsel %vm260, %v629, %v633
      %v635 = vshrl.u32 %v249, 16
      %v637 = vrot.slane %v635, 4
      %v638 = vor.u32 %v637, %v633
      %v639 = vrot.slane %v638, 4
      %v641 = vshll.u32 %v250, 16
      %v643 = vrot.slane %v641, 5
      %v644 = vsel %vm260, %v639, %v643
      %s645 = scalar_lea.vmem %s1, 2
      %v646 = vld [vmem:[%s645] sm:$0x3]
      %v647 = vunpack.c.l.b16 %v274
      %v648 = vunpack.c.l.b16 %v284
      %v649 = vunpack.c.l.b16 %v298
      %v650 = vunpack.c.l.b16 %v308
      %v651 = vunpack.c.l.b16 %v322
      %v652 = vunpack.c.l.b16 %v332
      %v653 = vunpack.c.l.b16 %v346
      %v654 = vunpack.c.l.b16 %v356
      %v655 = vunpack.c.l.b16 %v370
      %v656 = vunpack.c.l.b16 %v380
      %v657 = vunpack.c.l.b16 %v394
      %v658 = vunpack.c.l.b16 %v404
      %v659 = vunpack.c.l.b16 %v418
      %v660 = vunpack.c.l.b16 %v428
      %v661 = vunpack.c.l.b16 %v442
      %v662 = vunpack.c.l.b16 %v452
      %v663 = vunpack.c.l.b16 %v466
      %v664 = vunpack.c.l.b16 %v476
      %v665 = vunpack.c.l.b16 %v490
      %v666 = vunpack.c.l.b16 %v500
      %v667 = vunpack.c.l.b16 %v514
      %v668 = vunpack.c.l.b16 %v524
      %v669 = vunpack.c.l.b16 %v538
      %v670 = vunpack.c.l.b16 %v548
      %v671 = vunpack.c.l.b16 %v562
      %v672 = vunpack.c.l.b16 %v572
      %v673 = vunpack.c.l.b16 %v586
      %v674 = vunpack.c.l.b16 %v596
      %v675 = vunpack.c.l.b16 %v610
      %v676 = vunpack.c.l.b16 %v620
      %v677 = vunpack.c.l.b16 %v634
      %v678 = vunpack.c.l.b16 %v644
      %v679 = vpack.c.b16 %v648, %v647
      %v680 = vpack.c.b16 %v650, %v649
      %v681 = vpack.c.b16 %v652, %v651
      %v682 = vpack.c.b16 %v654, %v653
      %v683 = vpack.c.b16 %v656, %v655
      %v684 = vpack.c.b16 %v658, %v657
      %v685 = vpack.c.b16 %v660, %v659
      %v686 = vpack.c.b16 %v662, %v661
      %v687 = vpack.c.b16 %v664, %v663
      %v688 = vpack.c.b16 %v666, %v665
      %v689 = vpack.c.b16 %v668, %v667
      %v690 = vpack.c.b16 %v670, %v669
      %v691 = vpack.c.b16 %v672, %v671
      %v692 = vpack.c.b16 %v674, %v673
      %v693 = vpack.c.b16 %v676, %v675
      %v694 = vpack.c.b16 %v678, %v677
      %vm695 = vcmask 31744
      %v697 = vsel %vm695, %v679, 0
      %v700 = vsel %vm695, %v680, 0
      %v703 = vsel %vm695, %v681, 0
      %v706 = vsel %vm695, %v682, 0
      %v709 = vsel %vm695, %v683, 0
      %v712 = vsel %vm695, %v684, 0
      %v715 = vsel %vm695, %v685, 0
      %v718 = vsel %vm695, %v686, 0
      %v721 = vsel %vm695, %v687, 0
      %v724 = vsel %vm695, %v688, 0
      %v727 = vsel %vm695, %v689, 0
      %v730 = vsel %vm695, %v690, 0
      %v733 = vsel %vm695, %v691, 0
      %v736 = vsel %vm695, %v692, 0
      %v739 = vsel %vm695, %v693, 0
      %v742 = vsel %vm695, %v694, 0
      %vm744 = vcmask 1041408
      %v746 = vsel %vm744, %v646, 0
      %748 = vmatprep.subr.bf16.mxu0 0
      %749 = vmatpush1.bf16.msra.mxu0 %v746
      %750 = vmatprep.subr.bf16.mxu0 0
      %751 = vmatpush1.bf16.msra.mxu0 0
      %752 = vmatprep.subr.bf16.mxu0 0
      %753 = vmatpush1.bf16.msra.mxu0 0
      %754 = vmatprep.subr.bf16.mxu0 0
      %755 = vmatpush1.bf16.msra.mxu0 0
      %756 = vmatprep.subr.bf16.mxu0 0
      %757 = vmatpush1.bf16.msra.mxu0 0
      %758 = vmatprep.subr.bf16.mxu0 0
      %759 = vmatpush1.bf16.msra.mxu0 0
      %760 = vmatprep.subr.bf16.mxu0 0
      %761 = vmatpush1.bf16.msra.mxu0 0
      %762 = vmatprep.subr.bf16.mxu0 0
      %763 = vmatpush1.bf16.msra.mxu0 0
      %764 = vmatprep.subr.bf16.mxu0 0
      %765 = vmatpush1.bf16.msra.mxu0 0
      %766 = vmatprep.subr.bf16.mxu0 0
      %767 = vmatpush1.bf16.msra.mxu0 0
      %768 = vmatprep.subr.bf16.mxu0 0
      %769 = vmatpush1.bf16.msra.mxu0 0
      %770 = vmatprep.subr.bf16.mxu0 0
      %771 = vmatpush1.bf16.msra.mxu0 0
      %772 = vmatprep.subr.bf16.mxu0 0
      %773 = vmatpush1.bf16.msra.mxu0 0
      %774 = vmatprep.subr.bf16.mxu0 0
      %775 = vmatpush1.bf16.msra.mxu0 0
      %776 = vmatprep.subr.bf16.mxu0 0
      %777 = vmatpush1.bf16.msra.mxu0 0
      %778 = vmatprep.subr.bf16.mxu0 0
      %779 = vmatpush1.bf16.msra.mxu0 0
      %780 = vmatprep.mubr.bf16.mxu0 0
      %781 = vmatmul.mubr.bf16.gmra.mrb[0].mxu0 %v697
      %v782 = vpop.f32.mrb[0].mxu0
      %v783 = vadd.f32 0.0, %v782
      %v784 = vpop.f32.mrb[0].mxu0
      %v785 = vpop.f32.mrb[0].mxu0
      %v786 = vadd.f32 0.0, %v785
      %v787 = vpop.f32.mrb[0].mxu0
      %788 = vmatprep.mubr.bf16.mxu0 0
      %789 = vmatmul.mubr.bf16.gmra.mrb[0].mxu0 %v700
      %v790 = vpop.f32.mrb[0].mxu0
      %v791 = vadd.f32 0.0, %v790
      %v792 = vpop.f32.mrb[0].mxu0
      %v793 = vpop.f32.mrb[0].mxu0
      %v794 = vadd.f32 0.0, %v793
      %v795 = vpop.f32.mrb[0].mxu0
      %796 = vmatprep.mubr.bf16.mxu0 0
      %797 = vmatmul.mubr.bf16.gmra.mrb[0].mxu0 %v703
      %v798 = vpop.f32.mrb[0].mxu0
      %v799 = vadd.f32 0.0, %v798
      %v800 = vpop.f32.mrb[0].mxu0
      %v801 = vpop.f32.mrb[0].mxu0
      %v802 = vadd.f32 0.0, %v801
      %v803 = vpop.f32.mrb[0].mxu0
      %804 = vmatprep.mubr.bf16.mxu0 0
      %805 = vmatmul.mubr.bf16.gmra.mrb[0].mxu0 %v706
      %v806 = vpop.f32.mrb[0].mxu0
      %v807 = vadd.f32 0.0, %v806
      %v808 = vpop.f32.mrb[0].mxu0
      %v809 = vpop.f32.mrb[0].mxu0
      %v810 = vadd.f32 0.0, %v809
      %v811 = vpop.f32.mrb[0].mxu0
      %812 = vmatprep.mubr.bf16.mxu0 0
      %813 = vmatmul.mubr.bf16.gmra.mrb[0].mxu0 %v709
      %v814 = vpop.f32.mrb[0].mxu0
      %v815 = vadd.f32 0.0, %v814
      %v816 = vpop.f32.mrb[0].mxu0
      %v817 = vpop.f32.mrb[0].mxu0
      %v818 = vadd.f32 0.0, %v817
      %v819 = vpop.f32.mrb[0].mxu0
      %820 = vmatprep.mubr.bf16.mxu0 0
      %821 = vmatmul.mubr.bf16.gmra.mrb[0].mxu0 %v712
      %v822 = vpop.f32.mrb[0].mxu0
      %v823 = vadd.f32 0.0, %v822
      %v824 = vpop.f32.mrb[0].mxu0
      %v825 = vpop.f32.mrb[0].mxu0
      %v826 = vadd.f32 0.0, %v825
      %v827 = vpop.f32.mrb[0].mxu0
      %828 = vmatprep.mubr.bf16.mxu0 0
      %829 = vmatmul.mubr.bf16.gmra.mrb[0].mxu0 %v715
      %v830 = vpop.f32.mrb[0].mxu0
      %v831 = vadd.f32 0.0, %v830
      %v832 = vpop.f32.mrb[0].mxu0
      %v833 = vpop.f32.mrb[0].mxu0
      %v834 = vadd.f32 0.0, %v833
      %v835 = vpop.f32.mrb[0].mxu0
      %836 = vmatprep.mubr.bf16.mxu0 0
      %837 = vmatmul.mubr.bf16.gmra.mrb[0].mxu0 %v718
      %v838 = vpop.f32.mrb[0].mxu0
      %v839 = vadd.f32 0.0, %v838
      %v840 = vpop.f32.mrb[0].mxu0
      %v841 = vpop.f32.mrb[0].mxu0
      %v842 = vadd.f32 0.0, %v841
      %v843 = vpop.f32.mrb[0].mxu0
      %844 = vmatprep.mubr.bf16.mxu0 0
      %845 = vmatmul.mubr.bf16.gmra.mrb[0].mxu0 %v721
      %v846 = vpop.f32.mrb[0].mxu0
      %v847 = vadd.f32 0.0, %v846
      %v848 = vpop.f32.mrb[0].mxu0
      %v849 = vpop.f32.mrb[0].mxu0
      %v850 = vadd.f32 0.0, %v849
      %v851 = vpop.f32.mrb[0].mxu0
      %852 = vmatprep.mubr.bf16.mxu0 0
      %853 = vmatmul.mubr.bf16.gmra.mrb[0].mxu0 %v724
      %v854 = vpop.f32.mrb[0].mxu0
      %v855 = vadd.f32 0.0, %v854
      %v856 = vpop.f32.mrb[0].mxu0
      %v857 = vpop.f32.mrb[0].mxu0
      %v858 = vadd.f32 0.0, %v857
      %v859 = vpop.f32.mrb[0].mxu0
      %860 = vmatprep.mubr.bf16.mxu0 0
      %861 = vmatmul.mubr.bf16.gmra.mrb[0].mxu0 %v727
      %v862 = vpop.f32.mrb[0].mxu0
      %v863 = vadd.f32 0.0, %v862
      %v864 = vpop.f32.mrb[0].mxu0
      %v865 = vpop.f32.mrb[0].mxu0
      %v866 = vadd.f32 0.0, %v865
      %v867 = vpop.f32.mrb[0].mxu0
      %868 = vmatprep.mubr.bf16.mxu0 0
      %869 = vmatmul.mubr.bf16.gmra.mrb[0].mxu0 %v730
      %v870 = vpop.f32.mrb[0].mxu0
      %v871 = vadd.f32 0.0, %v870
      %v872 = vpop.f32.mrb[0].mxu0
      %v873 = vpop.f32.mrb[0].mxu0
      %v874 = vadd.f32 0.0, %v873
      %v875 = vpop.f32.mrb[0].mxu0
      %876 = vmatprep.mubr.bf16.mxu0 0
      %877 = vmatmul.mubr.bf16.gmra.mrb[0].mxu0 %v733
      %v878 = vpop.f32.mrb[0].mxu0
      %v879 = vadd.f32 0.0, %v878
      %v880 = vpop.f32.mrb[0].mxu0
      %v881 = vpop.f32.mrb[0].mxu0
      %v882 = vadd.f32 0.0, %v881
      %v883 = vpop.f32.mrb[0].mxu0
      %884 = vmatprep.mubr.bf16.mxu0 0
      %885 = vmatmul.mubr.bf16.gmra.mrb[0].mxu0 %v736
      %v886 = vpop.f32.mrb[0].mxu0
      %v887 = vadd.f32 0.0, %v886
      %v888 = vpop.f32.mrb[0].mxu0
      %v889 = vpop.f32.mrb[0].mxu0
      %v890 = vadd.f32 0.0, %v889
      %v891 = vpop.f32.mrb[0].mxu0
      %892 = vmatprep.mubr.bf16.mxu0 0
      %893 = vmatmul.mubr.bf16.gmra.mrb[0].mxu0 %v739
      %v894 = vpop.f32.mrb[0].mxu0
      %v895 = vadd.f32 0.0, %v894
      %v896 = vpop.f32.mrb[0].mxu0
      %v897 = vpop.f32.mrb[0].mxu0
      %v898 = vadd.f32 0.0, %v897
      %v899 = vpop.f32.mrb[0].mxu0
      %900 = vmatprep.mubr.bf16.mxu0 0
      %901 = vmatmul.mubr.bf16.gmra.mrb[0].mxu0 %v742
      %v902 = vpop.f32.mrb[0].mxu0
      %v903 = vadd.f32 0.0, %v902
      %v904 = vpop.f32.mrb[0].mxu0
      %v905 = vpop.f32.mrb[0].mxu0
      %v906 = vadd.f32 0.0, %v905
      %v907 = vpop.f32.mrb[0].mxu0
      %908 = vdwg.mxu0
      %v941 = vunpack.c.l.b16 %v203
      %v942 = vunpack.c.l.b16 %v204
      %v943 = vunpack.c.l.b16 %v206
      %v944 = vunpack.c.l.b16 %v207
      %v945 = vunpack.c.l.b16 %v209
      %v946 = vunpack.c.l.b16 %v210
      %v947 = vunpack.c.l.b16 %v212
      %v948 = vunpack.c.l.b16 %v213
      %v949 = vunpack.c.l.b16 %v215
      %v950 = vunpack.c.l.b16 %v216
      %v951 = vunpack.c.l.b16 %v218
      %v952 = vunpack.c.l.b16 %v219
      %v953 = vunpack.c.l.b16 %v221
      %v954 = vunpack.c.l.b16 %v222
      %v955 = vunpack.c.l.b16 %v224
      %v956 = vunpack.c.l.b16 %v225
      %v957 = vunpack.c.l.b16 %v227
      %v958 = vunpack.c.l.b16 %v228
      %v959 = vunpack.c.l.b16 %v230
      %v960 = vunpack.c.l.b16 %v231
      %v961 = vunpack.c.l.b16 %v233
      %v962 = vunpack.c.l.b16 %v234
      %v963 = vunpack.c.l.b16 %v236
      %v964 = vunpack.c.l.b16 %v237
      %v965 = vunpack.c.l.b16 %v239
      %v966 = vunpack.c.l.b16 %v240
      %v967 = vunpack.c.l.b16 %v242
      %v968 = vunpack.c.l.b16 %v243
      %v969 = vunpack.c.l.b16 %v245
      %v970 = vunpack.c.l.b16 %v246
      %v971 = vunpack.c.l.b16 %v248
      %v972 = vunpack.c.l.b16 %v249
      %v973 = vpack.c.b16 %v942, %v941
      %v974 = vpack.c.b16 %v944, %v943
      %v975 = vpack.c.b16 %v946, %v945
      %v976 = vpack.c.b16 %v948, %v947
      %v977 = vpack.c.b16 %v950, %v949
      %v978 = vpack.c.b16 %v952, %v951
      %v979 = vpack.c.b16 %v954, %v953
      %v980 = vpack.c.b16 %v956, %v955
      %v981 = vpack.c.b16 %v958, %v957
      %v982 = vpack.c.b16 %v960, %v959
      %v983 = vpack.c.b16 %v962, %v961
      %v984 = vpack.c.b16 %v964, %v963
      %v985 = vpack.c.b16 %v966, %v965
      %v986 = vpack.c.b16 %v968, %v967
      %v987 = vpack.c.b16 %v970, %v969
      %v988 = vpack.c.b16 %v972, %v971
      %v990 = vsel %vm695, %v973, 0
      %v993 = vsel %vm695, %v974, 0
      %v996 = vsel %vm695, %v975, 0
      %v999 = vsel %vm695, %v976, 0
      %v1002 = vsel %vm695, %v977, 0
      %v1005 = vsel %vm695, %v978, 0
      %v1008 = vsel %vm695, %v979, 0
      %v1011 = vsel %vm695, %v980, 0
      %v1014 = vsel %vm695, %v981, 0
      %v1017 = vsel %vm695, %v982, 0
      %v1020 = vsel %vm695, %v983, 0
      %v1023 = vsel %vm695, %v984, 0
      %v1026 = vsel %vm695, %v985, 0
      %v1029 = vsel %vm695, %v986, 0
      %v1032 = vsel %vm695, %v987, 0
      %v1035 = vsel %vm695, %v988, 0
      %v1038 = vsel %vm744, %v257, 0
      %1040 = vmatprep.subr.bf16.mxu0 0
      %1041 = vmatpush1.bf16.msra.mxu0 %v1038
      %1042 = vmatprep.subr.bf16.mxu0 0
      %1043 = vmatpush1.bf16.msra.mxu0 0
      %1044 = vmatprep.subr.bf16.mxu0 0
      %1045 = vmatpush1.bf16.msra.mxu0 0
      %1046 = vmatprep.subr.bf16.mxu0 0
      %1047 = vmatpush1.bf16.msra.mxu0 0
      %1048 = vmatprep.subr.bf16.mxu0 0
      %1049 = vmatpush1.bf16.msra.mxu0 0
      %1050 = vmatprep.subr.bf16.mxu0 0
      %1051 = vmatpush1.bf16.msra.mxu0 0
      %1052 = vmatprep.subr.bf16.mxu0 0
      %1053 = vmatpush1.bf16.msra.mxu0 0
      %1054 = vmatprep.subr.bf16.mxu0 0
      %1055 = vmatpush1.bf16.msra.mxu0 0
      %1056 = vmatprep.subr.bf16.mxu0 0
      %1057 = vmatpush1.bf16.msra.mxu0 0
      %1058 = vmatprep.subr.bf16.mxu0 0
      %1059 = vmatpush1.bf16.msra.mxu0 0
      %1060 = vmatprep.subr.bf16.mxu0 0
      %1061 = vmatpush1.bf16.msra.mxu0 0
      %1062 = vmatprep.subr.bf16.mxu0 0
      %1063 = vmatpush1.bf16.msra.mxu0 0
      %1064 = vmatprep.subr.bf16.mxu0 0
      %1065 = vmatpush1.bf16.msra.mxu0 0
      %1066 = vmatprep.subr.bf16.mxu0 0
      %1067 = vmatpush1.bf16.msra.mxu0 0
      %1068 = vmatprep.subr.bf16.mxu0 0
      %1069 = vmatpush1.bf16.msra.mxu0 0
      %1070 = vmatprep.subr.bf16.mxu0 0
      %1071 = vmatpush1.bf16.msra.mxu0 0
      %1072 = vmatprep.mubr.bf16.mxu0 0
      %1073 = vmatmul.mubr.bf16.gmra.mrb[0].mxu0 %v990
      %v1074 = vpop.f32.mrb[0].mxu0
      %v1075 = vadd.f32 %v783, %v1074
      %v1076 = vpop.f32.mrb[0].mxu0
      %v1077 = vpop.f32.mrb[0].mxu0
      %v1078 = vadd.f32 %v786, %v1077
      %v1079 = vpop.f32.mrb[0].mxu0
      %1080 = vmatprep.mubr.bf16.mxu0 0
      %1081 = vmatmul.mubr.bf16.gmra.mrb[0].mxu0 %v993
      %v1082 = vpop.f32.mrb[0].mxu0
      %v1083 = vadd.f32 %v791, %v1082
      %v1084 = vpop.f32.mrb[0].mxu0
      %v1085 = vpop.f32.mrb[0].mxu0
      %v1086 = vadd.f32 %v794, %v1085
      %v1087 = vpop.f32.mrb[0].mxu0
      %1088 = vmatprep.mubr.bf16.mxu0 0
      %1089 = vmatmul.mubr.bf16.gmra.mrb[0].mxu0 %v996
      %v1090 = vpop.f32.mrb[0].mxu0
      %v1091 = vadd.f32 %v799, %v1090
      %v1092 = vpop.f32.mrb[0].mxu0
      %v1093 = vpop.f32.mrb[0].mxu0
      %v1094 = vadd.f32 %v802, %v1093
      %v1095 = vpop.f32.mrb[0].mxu0
      %1096 = vmatprep.mubr.bf16.mxu0 0
      %1097 = vmatmul.mubr.bf16.gmra.mrb[0].mxu0 %v999
      %v1098 = vpop.f32.mrb[0].mxu0
      %v1099 = vadd.f32 %v807, %v1098
      %v1100 = vpop.f32.mrb[0].mxu0
      %v1101 = vpop.f32.mrb[0].mxu0
      %v1102 = vadd.f32 %v810, %v1101
      %v1103 = vpop.f32.mrb[0].mxu0
      %1104 = vmatprep.mubr.bf16.mxu0 0
      %1105 = vmatmul.mubr.bf16.gmra.mrb[0].mxu0 %v1002
      %v1106 = vpop.f32.mrb[0].mxu0
      %v1107 = vadd.f32 %v815, %v1106
      %v1108 = vpop.f32.mrb[0].mxu0
      %v1109 = vpop.f32.mrb[0].mxu0
      %v1110 = vadd.f32 %v818, %v1109
      %v1111 = vpop.f32.mrb[0].mxu0
      %1112 = vmatprep.mubr.bf16.mxu0 0
      %1113 = vmatmul.mubr.bf16.gmra.mrb[0].mxu0 %v1005
      %v1114 = vpop.f32.mrb[0].mxu0
      %v1115 = vadd.f32 %v823, %v1114
      %v1116 = vpop.f32.mrb[0].mxu0
      %v1117 = vpop.f32.mrb[0].mxu0
      %v1118 = vadd.f32 %v826, %v1117
      %v1119 = vpop.f32.mrb[0].mxu0
      %1120 = vmatprep.mubr.bf16.mxu0 0
      %1121 = vmatmul.mubr.bf16.gmra.mrb[0].mxu0 %v1008
      %v1122 = vpop.f32.mrb[0].mxu0
      %v1123 = vadd.f32 %v831, %v1122
      %v1124 = vpop.f32.mrb[0].mxu0
      %v1125 = vpop.f32.mrb[0].mxu0
      %v1126 = vadd.f32 %v834, %v1125
      %v1127 = vpop.f32.mrb[0].mxu0
      %1128 = vmatprep.mubr.bf16.mxu0 0
      %1129 = vmatmul.mubr.bf16.gmra.mrb[0].mxu0 %v1011
      %v1130 = vpop.f32.mrb[0].mxu0
      %v1131 = vadd.f32 %v839, %v1130
      %v1132 = vpop.f32.mrb[0].mxu0
      %v1133 = vpop.f32.mrb[0].mxu0
      %v1134 = vadd.f32 %v842, %v1133
      %v1135 = vpop.f32.mrb[0].mxu0
      %1136 = vmatprep.mubr.bf16.mxu0 0
      %1137 = vmatmul.mubr.bf16.gmra.mrb[0].mxu0 %v1014
      %v1138 = vpop.f32.mrb[0].mxu0
      %v1139 = vadd.f32 %v847, %v1138
      %v1140 = vpop.f32.mrb[0].mxu0
      %v1141 = vpop.f32.mrb[0].mxu0
      %v1142 = vadd.f32 %v850, %v1141
      %v1143 = vpop.f32.mrb[0].mxu0
      %1144 = vmatprep.mubr.bf16.mxu0 0
      %1145 = vmatmul.mubr.bf16.gmra.mrb[0].mxu0 %v1017
      %v1146 = vpop.f32.mrb[0].mxu0
      %v1147 = vadd.f32 %v855, %v1146
      %v1148 = vpop.f32.mrb[0].mxu0
      %v1149 = vpop.f32.mrb[0].mxu0
      %v1150 = vadd.f32 %v858, %v1149
      %v1151 = vpop.f32.mrb[0].mxu0
      %1152 = vmatprep.mubr.bf16.mxu0 0
      %1153 = vmatmul.mubr.bf16.gmra.mrb[0].mxu0 %v1020
      %v1154 = vpop.f32.mrb[0].mxu0
      %v1155 = vadd.f32 %v863, %v1154
      %v1156 = vpop.f32.mrb[0].mxu0
      %v1157 = vpop.f32.mrb[0].mxu0
      %v1158 = vadd.f32 %v866, %v1157
      %v1159 = vpop.f32.mrb[0].mxu0
      %1160 = vmatprep.mubr.bf16.mxu0 0
      %1161 = vmatmul.mubr.bf16.gmra.mrb[0].mxu0 %v1023
      %v1162 = vpop.f32.mrb[0].mxu0
      %v1163 = vadd.f32 %v871, %v1162
      %v1164 = vpop.f32.mrb[0].mxu0
      %v1165 = vpop.f32.mrb[0].mxu0
      %v1166 = vadd.f32 %v874, %v1165
      %v1167 = vpop.f32.mrb[0].mxu0
      %1168 = vmatprep.mubr.bf16.mxu0 0
      %1169 = vmatmul.mubr.bf16.gmra.mrb[0].mxu0 %v1026
      %v1170 = vpop.f32.mrb[0].mxu0
      %v1171 = vadd.f32 %v879, %v1170
      %v1172 = vpop.f32.mrb[0].mxu0
      %v1173 = vpop.f32.mrb[0].mxu0
      %v1174 = vadd.f32 %v882, %v1173
      %v1175 = vpop.f32.mrb[0].mxu0
      %1176 = vmatprep.mubr.bf16.mxu0 0
      %1177 = vmatmul.mubr.bf16.gmra.mrb[0].mxu0 %v1029
      %v1178 = vpop.f32.mrb[0].mxu0
      %v1179 = vadd.f32 %v887, %v1178
      %v1180 = vpop.f32.mrb[0].mxu0
      %v1181 = vpop.f32.mrb[0].mxu0
      %v1182 = vadd.f32 %v890, %v1181
      %v1183 = vpop.f32.mrb[0].mxu0
      %1184 = vmatprep.mubr.bf16.mxu0 0
      %1185 = vmatmul.mubr.bf16.gmra.mrb[0].mxu0 %v1032
      %v1186 = vpop.f32.mrb[0].mxu0
      %v1187 = vadd.f32 %v895, %v1186
      %v1188 = vpop.f32.mrb[0].mxu0
      %v1189 = vpop.f32.mrb[0].mxu0
      %v1190 = vadd.f32 %v898, %v1189
      %v1191 = vpop.f32.mrb[0].mxu0
      %1192 = vmatprep.mubr.bf16.mxu0 0
      %1193 = vmatmul.mubr.bf16.gmra.mrb[0].mxu0 %v1035
      %v1194 = vpop.f32.mrb[0].mxu0
      %v1195 = vadd.f32 %v903, %v1194
      %v1196 = vpop.f32.mrb[0].mxu0
      %v1197 = vpop.f32.mrb[0].mxu0
      %v1198 = vadd.f32 %v906, %v1197
      %v1199 = vpop.f32.mrb[0].mxu0
      %1200 = vdwg.mxu0
      %vm1217 = vcmask 1042432
      %vm1218 = vcmask 1046532
      %vm1219 = vmor %vm1217, %vm1218
      %v1220 = vrot.slane %v203, 5
      %v1221 = vrot.slane %v1220, 4
      %v1222 = vrot.slane %v204, 5
      %v1223 = vsel %vm1219, %v1221, %v1222
      %v1224 = vrot.slane %v1222, 4
      %v1225 = vrot.slane %v205, 5
      %v1226 = vsel %vm1219, %v1224, %v1225
      %v1227 = vrot.slane %v206, 5
      %v1228 = vrot.slane %v1227, 4
      %v1229 = vrot.slane %v207, 5
      %v1230 = vsel %vm1219, %v1228, %v1229
      %v1231 = vrot.slane %v1229, 4
      %v1232 = vrot.slane %v208, 5
      %v1233 = vsel %vm1219, %v1231, %v1232
      %v1234 = vrot.slane %v209, 5
      %v1235 = vrot.slane %v1234, 4
      %v1236 = vrot.slane %v210, 5
      %v1237 = vsel %vm1219, %v1235, %v1236
      %v1238 = vrot.slane %v1236, 4
      %v1239 = vrot.slane %v211, 5
      %v1240 = vsel %vm1219, %v1238, %v1239
      %v1241 = vrot.slane %v212, 5
      %v1242 = vrot.slane %v1241, 4
      %v1243 = vrot.slane %v213, 5
      %v1244 = vsel %vm1219, %v1242, %v1243
      %v1245 = vrot.slane %v1243, 4
      %v1246 = vrot.slane %v214, 5
      %v1247 = vsel %vm1219, %v1245, %v1246
      %v1248 = vrot.slane %v215, 5
      %v1249 = vrot.slane %v1248, 4
      %v1250 = vrot.slane %v216, 5
      %v1251 = vsel %vm1219, %v1249, %v1250
      %v1252 = vrot.slane %v1250, 4
      %v1253 = vrot.slane %v217, 5
      %v1254 = vsel %vm1219, %v1252, %v1253
      %v1255 = vrot.slane %v218, 5
      %v1256 = vrot.slane %v1255, 4
      %v1257 = vrot.slane %v219, 5
      %v1258 = vsel %vm1219, %v1256, %v1257
      %v1259 = vrot.slane %v1257, 4
      %v1260 = vrot.slane %v220, 5
      %v1261 = vsel %vm1219, %v1259, %v1260
      %v1262 = vrot.slane %v221, 5
      %v1263 = vrot.slane %v1262, 4
      %v1264 = vrot.slane %v222, 5
      %v1265 = vsel %vm1219, %v1263, %v1264
      %v1266 = vrot.slane %v1264, 4
      %v1267 = vrot.slane %v223, 5
      %v1268 = vsel %vm1219, %v1266, %v1267
      %v1269 = vrot.slane %v224, 5
      %v1270 = vrot.slane %v1269, 4
      %v1271 = vrot.slane %v225, 5
      %v1272 = vsel %vm1219, %v1270, %v1271
      %v1273 = vrot.slane %v1271, 4
      %v1274 = vrot.slane %v226, 5
      %v1275 = vsel %vm1219, %v1273, %v1274
      %v1276 = vrot.slane %v227, 5
      %v1277 = vrot.slane %v1276, 4
      %v1278 = vrot.slane %v228, 5
      %v1279 = vsel %vm1219, %v1277, %v1278
      %v1280 = vrot.slane %v1278, 4
      %v1281 = vrot.slane %v229, 5
      %v1282 = vsel %vm1219, %v1280, %v1281
      %v1283 = vrot.slane %v230, 5
      %v1284 = vrot.slane %v1283, 4
      %v1285 = vrot.slane %v231, 5
      %v1286 = vsel %vm1219, %v1284, %v1285
      %v1287 = vrot.slane %v1285, 4
      %v1288 = vrot.slane %v232, 5
      %v1289 = vsel %vm1219, %v1287, %v1288
      %v1290 = vrot.slane %v233, 5
      %v1291 = vrot.slane %v1290, 4
      %v1292 = vrot.slane %v234, 5
      %v1293 = vsel %vm1219, %v1291, %v1292
      %v1294 = vrot.slane %v1292, 4
      %v1295 = vrot.slane %v235, 5
      %v1296 = vsel %vm1219, %v1294, %v1295
      %v1297 = vrot.slane %v236, 5
      %v1298 = vrot.slane %v1297, 4
      %v1299 = vrot.slane %v237, 5
      %v1300 = vsel %vm1219, %v1298, %v1299
      %v1301 = vrot.slane %v1299, 4
      %v1302 = vrot.slane %v238, 5
      %v1303 = vsel %vm1219, %v1301, %v1302
      %v1304 = vrot.slane %v239, 5
      %v1305 = vrot.slane %v1304, 4
      %v1306 = vrot.slane %v240, 5
      %v1307 = vsel %vm1219, %v1305, %v1306
      %v1308 = vrot.slane %v1306, 4
      %v1309 = vrot.slane %v241, 5
      %v1310 = vsel %vm1219, %v1308, %v1309
      %v1311 = vrot.slane %v242, 5
      %v1312 = vrot.slane %v1311, 4
      %v1313 = vrot.slane %v243, 5
      %v1314 = vsel %vm1219, %v1312, %v1313
      %v1315 = vrot.slane %v1313, 4
      %v1316 = vrot.slane %v244, 5
      %v1317 = vsel %vm1219, %v1315, %v1316
      %v1318 = vrot.slane %v245, 5
      %v1319 = vrot.slane %v1318, 4
      %v1320 = vrot.slane %v246, 5
      %v1321 = vsel %vm1219, %v1319, %v1320
      %v1322 = vrot.slane %v1320, 4
      %v1323 = vrot.slane %v247, 5
      %v1324 = vsel %vm1219, %v1322, %v1323
      %v1325 = vrot.slane %v248, 5
      %v1326 = vrot.slane %v1325, 4
      %v1327 = vrot.slane %v249, 5
      %v1328 = vsel %vm1219, %v1326, %v1327
      %v1329 = vrot.slane %v1327, 4
      %v1330 = vrot.slane %v250, 5
      %v1331 = vsel %vm1219, %v1329, %v1330
      %s1332 = scalar_lea.vmem %s1, 4
      %v1333 = vld [vmem:[%s1332] sm:$0x3]
      %v1334 = vunpack.c.l.b16 %v1223
      %v1335 = vunpack.c.l.b16 %v1226
      %v1336 = vunpack.c.l.b16 %v1230
      %v1337 = vunpack.c.l.b16 %v1233
      %v1338 = vunpack.c.l.b16 %v1237
      %v1339 = vunpack.c.l.b16 %v1240
      %v1340 = vunpack.c.l.b16 %v1244
      %v1341 = vunpack.c.l.b16 %v1247
      %v1342 = vunpack.c.l.b16 %v1251
      %v1343 = vunpack.c.l.b16 %v1254
      %v1344 = vunpack.c.l.b16 %v1258
      %v1345 = vunpack.c.l.b16 %v1261
      %v1346 = vunpack.c.l.b16 %v1265
      %v1347 = vunpack.c.l.b16 %v1268
      %v1348 = vunpack.c.l.b16 %v1272
      %v1349 = vunpack.c.l.b16 %v1275
      %v1350 = vunpack.c.l.b16 %v1279
      %v1351 = vunpack.c.l.b16 %v1282
      %v1352 = vunpack.c.l.b16 %v1286
      %v1353 = vunpack.c.l.b16 %v1289
      %v1354 = vunpack.c.l.b16 %v1293
      %v1355 = vunpack.c.l.b16 %v1296
      %v1356 = vunpack.c.l.b16 %v1300
      %v1357 = vunpack.c.l.b16 %v1303
      %v1358 = vunpack.c.l.b16 %v1307
      %v1359 = vunpack.c.l.b16 %v1310
      %v1360 = vunpack.c.l.b16 %v1314
      %v1361 = vunpack.c.l.b16 %v1317
      %v1362 = vunpack.c.l.b16 %v1321
      %v1363 = vunpack.c.l.b16 %v1324
      %v1364 = vunpack.c.l.b16 %v1328
      %v1365 = vunpack.c.l.b16 %v1331
      %v1366 = vpack.c.b16 %v1335, %v1334
      %v1367 = vpack.c.b16 %v1337, %v1336
      %v1368 = vpack.c.b16 %v1339, %v1338
      %v1369 = vpack.c.b16 %v1341, %v1340
      %v1370 = vpack.c.b16 %v1343, %v1342
      %v1371 = vpack.c.b16 %v1345, %v1344
      %v1372 = vpack.c.b16 %v1347, %v1346
      %v1373 = vpack.c.b16 %v1349, %v1348
      %v1374 = vpack.c.b16 %v1351, %v1350
      %v1375 = vpack.c.b16 %v1353, %v1352
      %v1376 = vpack.c.b16 %v1355, %v1354
      %v1377 = vpack.c.b16 %v1357, %v1356
      %v1378 = vpack.c.b16 %v1359, %v1358
      %v1379 = vpack.c.b16 %v1361, %v1360
      %v1380 = vpack.c.b16 %v1363, %v1362
      %v1381 = vpack.c.b16 %v1365, %v1364
      %v1383 = vsel %vm695, %v1366, 0
      %v1386 = vsel %vm695, %v1367, 0
      %v1389 = vsel %vm695, %v1368, 0
      %v1392 = vsel %vm695, %v1369, 0
      %v1395 = vsel %vm695, %v1370, 0
      %v1398 = vsel %vm695, %v1371, 0
      %v1401 = vsel %vm695, %v1372, 0
      %v1404 = vsel %vm695, %v1373, 0
      %v1407 = vsel %vm695, %v1374, 0
      %v1410 = vsel %vm695, %v1375, 0
      %v1413 = vsel %vm695, %v1376, 0
      %v1416 = vsel %vm695, %v1377, 0
      %v1419 = vsel %vm695, %v1378, 0
      %v1422 = vsel %vm695, %v1379, 0
      %v1425 = vsel %vm695, %v1380, 0
      %v1428 = vsel %vm695, %v1381, 0
      %v1431 = vsel %vm744, %v1333, 0
      %1433 = vmatprep.subr.bf16.mxu0 0
      %1434 = vmatpush1.bf16.msra.mxu0 %v1431
      %1435 = vmatprep.subr.bf16.mxu0 0
      %1436 = vmatpush1.bf16.msra.mxu0 0
      %1437 = vmatprep.subr.bf16.mxu0 0
      %1438 = vmatpush1.bf16.msra.mxu0 0
      %1439 = vmatprep.subr.bf16.mxu0 0
      %1440 = vmatpush1.bf16.msra.mxu0 0
      %1441 = vmatprep.subr.bf16.mxu0 0
      %1442 = vmatpush1.bf16.msra.mxu0 0
      %1443 = vmatprep.subr.bf16.mxu0 0
      %1444 = vmatpush1.bf16.msra.mxu0 0
      %1445 = vmatprep.subr.bf16.mxu0 0
      %1446 = vmatpush1.bf16.msra.mxu0 0
      %1447 = vmatprep.subr.bf16.mxu0 0
      %1448 = vmatpush1.bf16.msra.mxu0 0
      %1449 = vmatprep.subr.bf16.mxu0 0
      %1450 = vmatpush1.bf16.msra.mxu0 0
      %1451 = vmatprep.subr.bf16.mxu0 0
      %1452 = vmatpush1.bf16.msra.mxu0 0
      %1453 = vmatprep.subr.bf16.mxu0 0
      %1454 = vmatpush1.bf16.msra.mxu0 0
      %1455 = vmatprep.subr.bf16.mxu0 0
      %1456 = vmatpush1.bf16.msra.mxu0 0
      %1457 = vmatprep.subr.bf16.mxu0 0
      %1458 = vmatpush1.bf16.msra.mxu0 0
      %1459 = vmatprep.subr.bf16.mxu0 0
      %1460 = vmatpush1.bf16.msra.mxu0 0
      %1461 = vmatprep.subr.bf16.mxu0 0
      %1462 = vmatpush1.bf16.msra.mxu0 0
      %1463 = vmatprep.subr.bf16.mxu0 0
      %1464 = vmatpush1.bf16.msra.mxu0 0
      %1465 = vmatprep.mubr.bf16.mxu0 0
      %1466 = vmatmul.mubr.bf16.gmra.mrb[0].mxu0 %v1383
      %v1467 = vpop.f32.mrb[0].mxu0
      %v1468 = vadd.f32 0.0, %v1467
      %v1469 = vpop.f32.mrb[0].mxu0
      %v1470 = vpop.f32.mrb[0].mxu0
      %v1471 = vadd.f32 0.0, %v1470
      %v1472 = vpop.f32.mrb[0].mxu0
      %1473 = vmatprep.mubr.bf16.mxu0 0
      %1474 = vmatmul.mubr.bf16.gmra.mrb[0].mxu0 %v1386
      %v1475 = vpop.f32.mrb[0].mxu0
      %v1476 = vadd.f32 0.0, %v1475
      %v1477 = vpop.f32.mrb[0].mxu0
      %v1478 = vpop.f32.mrb[0].mxu0
      %v1479 = vadd.f32 0.0, %v1478
      %v1480 = vpop.f32.mrb[0].mxu0
      %1481 = vmatprep.mubr.bf16.mxu0 0
      %1482 = vmatmul.mubr.bf16.gmra.mrb[0].mxu0 %v1389
      %v1483 = vpop.f32.mrb[0].mxu0
      %v1484 = vadd.f32 0.0, %v1483
      %v1485 = vpop.f32.mrb[0].mxu0
      %v1486 = vpop.f32.mrb[0].mxu0
      %v1487 = vadd.f32 0.0, %v1486
      %v1488 = vpop.f32.mrb[0].mxu0
      %1489 = vmatprep.mubr.bf16.mxu0 0
      %1490 = vmatmul.mubr.bf16.gmra.mrb[0].mxu0 %v1392
      %v1491 = vpop.f32.mrb[0].mxu0
      %v1492 = vadd.f32 0.0, %v1491
      %v1493 = vpop.f32.mrb[0].mxu0
      %v1494 = vpop.f32.mrb[0].mxu0
      %v1495 = vadd.f32 0.0, %v1494
      %v1496 = vpop.f32.mrb[0].mxu0
      %1497 = vmatprep.mubr.bf16.mxu0 0
      %1498 = vmatmul.mubr.bf16.gmra.mrb[0].mxu0 %v1395
      %v1499 = vpop.f32.mrb[0].mxu0
      %v1500 = vadd.f32 0.0, %v1499
      %v1501 = vpop.f32.mrb[0].mxu0
      %v1502 = vpop.f32.mrb[0].mxu0
      %v1503 = vadd.f32 0.0, %v1502
      %v1504 = vpop.f32.mrb[0].mxu0
      %1505 = vmatprep.mubr.bf16.mxu0 0
      %1506 = vmatmul.mubr.bf16.gmra.mrb[0].mxu0 %v1398
      %v1507 = vpop.f32.mrb[0].mxu0
      %v1508 = vadd.f32 0.0, %v1507
      %v1509 = vpop.f32.mrb[0].mxu0
      %v1510 = vpop.f32.mrb[0].mxu0
      %v1511 = vadd.f32 0.0, %v1510
      %v1512 = vpop.f32.mrb[0].mxu0
      %1513 = vmatprep.mubr.bf16.mxu0 0
      %1514 = vmatmul.mubr.bf16.gmra.mrb[0].mxu0 %v1401
      %v1515 = vpop.f32.mrb[0].mxu0
      %v1516 = vadd.f32 0.0, %v1515
      %v1517 = vpop.f32.mrb[0].mxu0
      %v1518 = vpop.f32.mrb[0].mxu0
      %v1519 = vadd.f32 0.0, %v1518
      %v1520 = vpop.f32.mrb[0].mxu0
      %1521 = vmatprep.mubr.bf16.mxu0 0
      %1522 = vmatmul.mubr.bf16.gmra.mrb[0].mxu0 %v1404
      %v1523 = vpop.f32.mrb[0].mxu0
      %v1524 = vadd.f32 0.0, %v1523
      %v1525 = vpop.f32.mrb[0].mxu0
      %v1526 = vpop.f32.mrb[0].mxu0
      %v1527 = vadd.f32 0.0, %v1526
      %v1528 = vpop.f32.mrb[0].mxu0
      %1529 = vmatprep.mubr.bf16.mxu0 0
      %1530 = vmatmul.mubr.bf16.gmra.mrb[0].mxu0 %v1407
      %v1531 = vpop.f32.mrb[0].mxu0
      %v1532 = vadd.f32 0.0, %v1531
      %v1533 = vpop.f32.mrb[0].mxu0
      %v1534 = vpop.f32.mrb[0].mxu0
      %v1535 = vadd.f32 0.0, %v1534
      %v1536 = vpop.f32.mrb[0].mxu0
      %1537 = vmatprep.mubr.bf16.mxu0 0
      %1538 = vmatmul.mubr.bf16.gmra.mrb[0].mxu0 %v1410
      %v1539 = vpop.f32.mrb[0].mxu0
      %v1540 = vadd.f32 0.0, %v1539
      %v1541 = vpop.f32.mrb[0].mxu0
      %v1542 = vpop.f32.mrb[0].mxu0
      %v1543 = vadd.f32 0.0, %v1542
      %v1544 = vpop.f32.mrb[0].mxu0
      %1545 = vmatprep.mubr.bf16.mxu0 0
      %1546 = vmatmul.mubr.bf16.gmra.mrb[0].mxu0 %v1413
      %v1547 = vpop.f32.mrb[0].mxu0
      %v1548 = vadd.f32 0.0, %v1547
      %v1549 = vpop.f32.mrb[0].mxu0
      %v1550 = vpop.f32.mrb[0].mxu0
      %v1551 = vadd.f32 0.0, %v1550
      %v1552 = vpop.f32.mrb[0].mxu0
      %1553 = vmatprep.mubr.bf16.mxu0 0
      %1554 = vmatmul.mubr.bf16.gmra.mrb[0].mxu0 %v1416
      %v1555 = vpop.f32.mrb[0].mxu0
      %v1556 = vadd.f32 0.0, %v1555
      %v1557 = vpop.f32.mrb[0].mxu0
      %v1558 = vpop.f32.mrb[0].mxu0
      %v1559 = vadd.f32 0.0, %v1558
      %v1560 = vpop.f32.mrb[0].mxu0
      %1561 = vmatprep.mubr.bf16.mxu0 0
      %1562 = vmatmul.mubr.bf16.gmra.mrb[0].mxu0 %v1419
      %v1563 = vpop.f32.mrb[0].mxu0
      %v1564 = vadd.f32 0.0, %v1563
      %v1565 = vpop.f32.mrb[0].mxu0
      %v1566 = vpop.f32.mrb[0].mxu0
      %v1567 = vadd.f32 0.0, %v1566
      %v1568 = vpop.f32.mrb[0].mxu0
      %1569 = vmatprep.mubr.bf16.mxu0 0
      %1570 = vmatmul.mubr.bf16.gmra.mrb[0].mxu0 %v1422
      %v1571 = vpop.f32.mrb[0].mxu0
      %v1572 = vadd.f32 0.0, %v1571
      %v1573 = vpop.f32.mrb[0].mxu0
      %v1574 = vpop.f32.mrb[0].mxu0
      %v1575 = vadd.f32 0.0, %v1574
      %v1576 = vpop.f32.mrb[0].mxu0
      %1577 = vmatprep.mubr.bf16.mxu0 0
      %1578 = vmatmul.mubr.bf16.gmra.mrb[0].mxu0 %v1425
      %v1579 = vpop.f32.mrb[0].mxu0
      %v1580 = vadd.f32 0.0, %v1579
      %v1581 = vpop.f32.mrb[0].mxu0
      %v1582 = vpop.f32.mrb[0].mxu0
      %v1583 = vadd.f32 0.0, %v1582
      %v1584 = vpop.f32.mrb[0].mxu0
      %1585 = vmatprep.mubr.bf16.mxu0 0
      %1586 = vmatmul.mubr.bf16.gmra.mrb[0].mxu0 %v1428
      %v1587 = vpop.f32.mrb[0].mxu0
      %v1588 = vadd.f32 0.0, %v1587
      %v1589 = vpop.f32.mrb[0].mxu0
      %v1590 = vpop.f32.mrb[0].mxu0
      %v1591 = vadd.f32 0.0, %v1590
      %v1592 = vpop.f32.mrb[0].mxu0
      %1593 = vdwg.mxu0
      %v1594 = vadd.f32 %v1075, %v1468
      %v1595 = vadd.f32 %v1078, %v1471
      %v1596 = vadd.f32 %v1083, %v1476
      %v1597 = vadd.f32 %v1086, %v1479
      %v1598 = vadd.f32 %v1091, %v1484
      %v1599 = vadd.f32 %v1094, %v1487
      %v1600 = vadd.f32 %v1099, %v1492
      %v1601 = vadd.f32 %v1102, %v1495
      %v1602 = vadd.f32 %v1107, %v1500
      %v1603 = vadd.f32 %v1110, %v1503
      %v1604 = vadd.f32 %v1115, %v1508
      %v1605 = vadd.f32 %v1118, %v1511
      %v1606 = vadd.f32 %v1123, %v1516
      %v1607 = vadd.f32 %v1126, %v1519
      %v1608 = vadd.f32 %v1131, %v1524
      %v1609 = vadd.f32 %v1134, %v1527
      %v1610 = vadd.f32 %v1139, %v1532
      %v1611 = vadd.f32 %v1142, %v1535
      %v1612 = vadd.f32 %v1147, %v1540
      %v1613 = vadd.f32 %v1150, %v1543
      %v1614 = vadd.f32 %v1155, %v1548
      %v1615 = vadd.f32 %v1158, %v1551
      %v1616 = vadd.f32 %v1163, %v1556
      %v1617 = vadd.f32 %v1166, %v1559
      %v1618 = vadd.f32 %v1171, %v1564
      %v1619 = vadd.f32 %v1174, %v1567
      %v1620 = vadd.f32 %v1179, %v1572
      %v1621 = vadd.f32 %v1182, %v1575
      %v1622 = vadd.f32 %v1187, %v1580
      %v1623 = vadd.f32 %v1190, %v1583
      %v1624 = vadd.f32 %v1195, %v1588
      %v1625 = vadd.f32 %v1198, %v1591
      %s1626 = scalar_lea.vmem %s1, 6
      %v1627 = vld [vmem:[%s1626] sm:$0x3]
      %v1630 = vunpack.c.l.b16 %v251
      %v1631 = vunpack.c.l.b16 %v252
      %v1632 = vpack.c.b16 %v1631, %v1630
      %v1634 = vsel %vm695, %v1632, 0
      %v1637 = vsel %vm744, %v1627, 0
      %1639 = vmatprep.subr.bf16.mxu0 0
      %1640 = vmatpush1.bf16.msra.mxu0 %v1637
      %1641 = vmatprep.subr.bf16.mxu0 0
      %1642 = vmatpush1.bf16.msra.mxu0 0
      %1643 = vmatprep.subr.bf16.mxu0 0
      %1644 = vmatpush1.bf16.msra.mxu0 0
      %1645 = vmatprep.subr.bf16.mxu0 0
      %1646 = vmatpush1.bf16.msra.mxu0 0
      %1647 = vmatprep.subr.bf16.mxu0 0
      %1648 = vmatpush1.bf16.msra.mxu0 0
      %1649 = vmatprep.subr.bf16.mxu0 0
      %1650 = vmatpush1.bf16.msra.mxu0 0
      %1651 = vmatprep.subr.bf16.mxu0 0
      %1652 = vmatpush1.bf16.msra.mxu0 0
      %1653 = vmatprep.subr.bf16.mxu0 0
      %1654 = vmatpush1.bf16.msra.mxu0 0
      %1655 = vmatprep.subr.bf16.mxu0 0
      %1656 = vmatpush1.bf16.msra.mxu0 0
      %1657 = vmatprep.subr.bf16.mxu0 0
      %1658 = vmatpush1.bf16.msra.mxu0 0
      %1659 = vmatprep.subr.bf16.mxu0 0
      %1660 = vmatpush1.bf16.msra.mxu0 0
      %1661 = vmatprep.subr.bf16.mxu0 0
      %1662 = vmatpush1.bf16.msra.mxu0 0
      %1663 = vmatprep.subr.bf16.mxu0 0
      %1664 = vmatpush1.bf16.msra.mxu0 0
      %1665 = vmatprep.subr.bf16.mxu0 0
      %1666 = vmatpush1.bf16.msra.mxu0 0
      %1667 = vmatprep.subr.bf16.mxu0 0
      %1668 = vmatpush1.bf16.msra.mxu0 0
      %1669 = vmatprep.subr.bf16.mxu0 0
      %1670 = vmatpush1.bf16.msra.mxu0 0
      %1671 = vmatprep.mubr.bf16.mxu0 0
      %1672 = vmatmul.mubr.bf16.gmra.mrb[0].mxu0 %v993
      %v1673 = vpop.f32.mrb[0].mxu0
      %v1674 = vadd.f32 0.0, %v1673
      %v1675 = vpop.f32.mrb[0].mxu0
      %v1676 = vpop.f32.mrb[0].mxu0
      %v1677 = vadd.f32 0.0, %v1676
      %v1678 = vpop.f32.mrb[0].mxu0
      %1679 = vmatprep.mubr.bf16.mxu0 0
      %1680 = vmatmul.mubr.bf16.gmra.mrb[0].mxu0 %v996
      %v1681 = vpop.f32.mrb[0].mxu0
      %v1682 = vadd.f32 0.0, %v1681
      %v1683 = vpop.f32.mrb[0].mxu0
      %v1684 = vpop.f32.mrb[0].mxu0
      %v1685 = vadd.f32 0.0, %v1684
      %v1686 = vpop.f32.mrb[0].mxu0
      %1687 = vmatprep.mubr.bf16.mxu0 0
      %1688 = vmatmul.mubr.bf16.gmra.mrb[0].mxu0 %v999
      %v1689 = vpop.f32.mrb[0].mxu0
      %v1690 = vadd.f32 0.0, %v1689
      %v1691 = vpop.f32.mrb[0].mxu0
      %v1692 = vpop.f32.mrb[0].mxu0
      %v1693 = vadd.f32 0.0, %v1692
      %v1694 = vpop.f32.mrb[0].mxu0
      %1695 = vmatprep.mubr.bf16.mxu0 0
      %1696 = vmatmul.mubr.bf16.gmra.mrb[0].mxu0 %v1002
      %v1697 = vpop.f32.mrb[0].mxu0
      %v1698 = vadd.f32 0.0, %v1697
      %v1699 = vpop.f32.mrb[0].mxu0
      %v1700 = vpop.f32.mrb[0].mxu0
      %v1701 = vadd.f32 0.0, %v1700
      %v1702 = vpop.f32.mrb[0].mxu0
      %1703 = vmatprep.mubr.bf16.mxu0 0
      %1704 = vmatmul.mubr.bf16.gmra.mrb[0].mxu0 %v1005
      %v1705 = vpop.f32.mrb[0].mxu0
      %v1706 = vadd.f32 0.0, %v1705
      %v1707 = vpop.f32.mrb[0].mxu0
      %v1708 = vpop.f32.mrb[0].mxu0
      %v1709 = vadd.f32 0.0, %v1708
      %v1710 = vpop.f32.mrb[0].mxu0
      %1711 = vmatprep.mubr.bf16.mxu0 0
      %1712 = vmatmul.mubr.bf16.gmra.mrb[0].mxu0 %v1008
      %v1713 = vpop.f32.mrb[0].mxu0
      %v1714 = vadd.f32 0.0, %v1713
      %v1715 = vpop.f32.mrb[0].mxu0
      %v1716 = vpop.f32.mrb[0].mxu0
      %v1717 = vadd.f32 0.0, %v1716
      %v1718 = vpop.f32.mrb[0].mxu0
      %1719 = vmatprep.mubr.bf16.mxu0 0
      %1720 = vmatmul.mubr.bf16.gmra.mrb[0].mxu0 %v1011
      %v1721 = vpop.f32.mrb[0].mxu0
      %v1722 = vadd.f32 0.0, %v1721
      %v1723 = vpop.f32.mrb[0].mxu0
      %v1724 = vpop.f32.mrb[0].mxu0
      %v1725 = vadd.f32 0.0, %v1724
      %v1726 = vpop.f32.mrb[0].mxu0
      %1727 = vmatprep.mubr.bf16.mxu0 0
      %1728 = vmatmul.mubr.bf16.gmra.mrb[0].mxu0 %v1014
      %v1729 = vpop.f32.mrb[0].mxu0
      %v1730 = vadd.f32 0.0, %v1729
      %v1731 = vpop.f32.mrb[0].mxu0
      %v1732 = vpop.f32.mrb[0].mxu0
      %v1733 = vadd.f32 0.0, %v1732
      %v1734 = vpop.f32.mrb[0].mxu0
      %1735 = vmatprep.mubr.bf16.mxu0 0
      %1736 = vmatmul.mubr.bf16.gmra.mrb[0].mxu0 %v1017
      %v1737 = vpop.f32.mrb[0].mxu0
      %v1738 = vadd.f32 0.0, %v1737
      %v1739 = vpop.f32.mrb[0].mxu0
      %v1740 = vpop.f32.mrb[0].mxu0
      %v1741 = vadd.f32 0.0, %v1740
      %v1742 = vpop.f32.mrb[0].mxu0
      %1743 = vmatprep.mubr.bf16.mxu0 0
      %1744 = vmatmul.mubr.bf16.gmra.mrb[0].mxu0 %v1020
      %v1745 = vpop.f32.mrb[0].mxu0
      %v1746 = vadd.f32 0.0, %v1745
      %v1747 = vpop.f32.mrb[0].mxu0
      %v1748 = vpop.f32.mrb[0].mxu0
      %v1749 = vadd.f32 0.0, %v1748
      %v1750 = vpop.f32.mrb[0].mxu0
      %1751 = vmatprep.mubr.bf16.mxu0 0
      %1752 = vmatmul.mubr.bf16.gmra.mrb[0].mxu0 %v1023
      %v1753 = vpop.f32.mrb[0].mxu0
      %v1754 = vadd.f32 0.0, %v1753
      %v1755 = vpop.f32.mrb[0].mxu0
      %v1756 = vpop.f32.mrb[0].mxu0
      %v1757 = vadd.f32 0.0, %v1756
      %v1758 = vpop.f32.mrb[0].mxu0
      %1759 = vmatprep.mubr.bf16.mxu0 0
      %1760 = vmatmul.mubr.bf16.gmra.mrb[0].mxu0 %v1026
      %v1761 = vpop.f32.mrb[0].mxu0
      %v1762 = vadd.f32 0.0, %v1761
      %v1763 = vpop.f32.mrb[0].mxu0
      %v1764 = vpop.f32.mrb[0].mxu0
      %v1765 = vadd.f32 0.0, %v1764
      %v1766 = vpop.f32.mrb[0].mxu0
      %1767 = vmatprep.mubr.bf16.mxu0 0
      %1768 = vmatmul.mubr.bf16.gmra.mrb[0].mxu0 %v1029
      %v1769 = vpop.f32.mrb[0].mxu0
      %v1770 = vadd.f32 0.0, %v1769
      %v1771 = vpop.f32.mrb[0].mxu0
      %v1772 = vpop.f32.mrb[0].mxu0
      %v1773 = vadd.f32 0.0, %v1772
      %v1774 = vpop.f32.mrb[0].mxu0
      %1775 = vmatprep.mubr.bf16.mxu0 0
      %1776 = vmatmul.mubr.bf16.gmra.mrb[0].mxu0 %v1032
      %v1777 = vpop.f32.mrb[0].mxu0
      %v1778 = vadd.f32 0.0, %v1777
      %v1779 = vpop.f32.mrb[0].mxu0
      %v1780 = vpop.f32.mrb[0].mxu0
      %v1781 = vadd.f32 0.0, %v1780
      %v1782 = vpop.f32.mrb[0].mxu0
      %1783 = vmatprep.mubr.bf16.mxu0 0
      %1784 = vmatmul.mubr.bf16.gmra.mrb[0].mxu0 %v1035
      %v1785 = vpop.f32.mrb[0].mxu0
      %v1786 = vadd.f32 0.0, %v1785
      %v1787 = vpop.f32.mrb[0].mxu0
      %v1788 = vpop.f32.mrb[0].mxu0
      %v1789 = vadd.f32 0.0, %v1788
      %v1790 = vpop.f32.mrb[0].mxu0
      %1791 = vmatprep.mubr.bf16.mxu0 0
      %1792 = vmatmul.mubr.bf16.gmra.mrb[0].mxu0 %v1634
      %v1793 = vpop.f32.mrb[0].mxu0
      %v1794 = vadd.f32 0.0, %v1793
      %v1795 = vpop.f32.mrb[0].mxu0
      %v1796 = vpop.f32.mrb[0].mxu0
      %v1797 = vadd.f32 0.0, %v1796
      %v1798 = vpop.f32.mrb[0].mxu0
      %1799 = vdwg.mxu0
      %v1800 = vadd.f32 %v1594, %v1674
      %v1801 = vadd.f32 %v1595, %v1677
      %v1802 = vadd.f32 %v1596, %v1682
      %v1803 = vadd.f32 %v1597, %v1685
      %v1804 = vadd.f32 %v1598, %v1690
      %v1805 = vadd.f32 %v1599, %v1693
      %v1806 = vadd.f32 %v1600, %v1698
      %v1807 = vadd.f32 %v1601, %v1701
      %v1808 = vadd.f32 %v1602, %v1706
      %v1809 = vadd.f32 %v1603, %v1709
      %v1810 = vadd.f32 %v1604, %v1714
      %v1811 = vadd.f32 %v1605, %v1717
      %v1812 = vadd.f32 %v1606, %v1722
      %v1813 = vadd.f32 %v1607, %v1725
      %v1814 = vadd.f32 %v1608, %v1730
      %v1815 = vadd.f32 %v1609, %v1733
      %v1816 = vadd.f32 %v1610, %v1738
      %v1817 = vadd.f32 %v1611, %v1741
      %v1818 = vadd.f32 %v1612, %v1746
      %v1819 = vadd.f32 %v1613, %v1749
      %v1820 = vadd.f32 %v1614, %v1754
      %v1821 = vadd.f32 %v1615, %v1757
      %v1822 = vadd.f32 %v1616, %v1762
      %v1823 = vadd.f32 %v1617, %v1765
      %v1824 = vadd.f32 %v1618, %v1770
      %v1825 = vadd.f32 %v1619, %v1773
      %v1826 = vadd.f32 %v1620, %v1778
      %v1827 = vadd.f32 %v1621, %v1781
      %v1828 = vadd.f32 %v1622, %v1786
      %v1829 = vadd.f32 %v1623, %v1789
      %v1830 = vadd.f32 %v1624, %v1794
      %v1831 = vadd.f32 %v1625, %v1797
      %v1833 = vshrl.u32 %v251, 16
      %v1835 = vrot.slane %v1833, 4
      %v1836 = vshll.u32 %v251, 16
      %v1838 = vrot.slane %v1836, 5
      %v1839 = vor.u32 %v1835, %v1838
      %v1840 = vrot.slane %v1839, 4
      %v1842 = vshll.u32 %v252, 16
      %v1844 = vrot.slane %v1842, 5
      %v1845 = vsel %vm260, %v1840, %v1844
      %v1846 = vshrl.u32 %v252, 16
      %v1848 = vrot.slane %v1846, 4
      %v1849 = vor.u32 %v1848, %v1844
      %v1850 = vrot.slane %v1849, 4
      %v1852 = vshll.u32 %v253, 16
      %v1854 = vrot.slane %v1852, 5
      %v1855 = vsel %vm260, %v1850, %v1854
      %s1856 = scalar_lea.vmem %s1, 8
      %v1857 = vld [vmem:[%s1856] sm:$0x3]
      %v1858 = vunpack.c.l.b16 %v1845
      %v1859 = vunpack.c.l.b16 %v1855
      %v1860 = vpack.c.b16 %v1859, %v1858
      %v1862 = vsel %vm695, %v1860, 0
      %v1865 = vsel %vm744, %v1857, 0
      %1867 = vmatprep.subr.bf16.mxu0 0
      %1868 = vmatpush1.bf16.msra.mxu0 %v1865
      %1869 = vmatprep.subr.bf16.mxu0 0
      %1870 = vmatpush1.bf16.msra.mxu0 0
      %1871 = vmatprep.subr.bf16.mxu0 0
      %1872 = vmatpush1.bf16.msra.mxu0 0
      %1873 = vmatprep.subr.bf16.mxu0 0
      %1874 = vmatpush1.bf16.msra.mxu0 0
      %1875 = vmatprep.subr.bf16.mxu0 0
      %1876 = vmatpush1.bf16.msra.mxu0 0
      %1877 = vmatprep.subr.bf16.mxu0 0
      %1878 = vmatpush1.bf16.msra.mxu0 0
      %1879 = vmatprep.subr.bf16.mxu0 0
      %1880 = vmatpush1.bf16.msra.mxu0 0
      %1881 = vmatprep.subr.bf16.mxu0 0
      %1882 = vmatpush1.bf16.msra.mxu0 0
      %1883 = vmatprep.subr.bf16.mxu0 0
      %1884 = vmatpush1.bf16.msra.mxu0 0
      %1885 = vmatprep.subr.bf16.mxu0 0
      %1886 = vmatpush1.bf16.msra.mxu0 0
      %1887 = vmatprep.subr.bf16.mxu0 0
      %1888 = vmatpush1.bf16.msra.mxu0 0
      %1889 = vmatprep.subr.bf16.mxu0 0
      %1890 = vmatpush1.bf16.msra.mxu0 0
      %1891 = vmatprep.subr.bf16.mxu0 0
      %1892 = vmatpush1.bf16.msra.mxu0 0
      %1893 = vmatprep.subr.bf16.mxu0 0
      %1894 = vmatpush1.bf16.msra.mxu0 0
      %1895 = vmatprep.subr.bf16.mxu0 0
      %1896 = vmatpush1.bf16.msra.mxu0 0
      %1897 = vmatprep.subr.bf16.mxu0 0
      %1898 = vmatpush1.bf16.msra.mxu0 0
      %1899 = vmatprep.mubr.bf16.mxu0 0
      %1900 = vmatmul.mubr.bf16.gmra.mrb[0].mxu0 %v700
      %v1901 = vpop.f32.mrb[0].mxu0
      %v1902 = vadd.f32 0.0, %v1901
      %v1903 = vpop.f32.mrb[0].mxu0
      %v1904 = vpop.f32.mrb[0].mxu0
      %v1905 = vadd.f32 0.0, %v1904
      %v1906 = vpop.f32.mrb[0].mxu0
      %1907 = vmatprep.mubr.bf16.mxu0 0
      %1908 = vmatmul.mubr.bf16.gmra.mrb[0].mxu0 %v703
      %v1909 = vpop.f32.mrb[0].mxu0
      %v1910 = vadd.f32 0.0, %v1909
      %v1911 = vpop.f32.mrb[0].mxu0
      %v1912 = vpop.f32.mrb[0].mxu0
      %v1913 = vadd.f32 0.0, %v1912
      %v1914 = vpop.f32.mrb[0].mxu0
      %1915 = vmatprep.mubr.bf16.mxu0 0
      %1916 = vmatmul.mubr.bf16.gmra.mrb[0].mxu0 %v706
      %v1917 = vpop.f32.mrb[0].mxu0
      %v1918 = vadd.f32 0.0, %v1917
      %v1919 = vpop.f32.mrb[0].mxu0
      %v1920 = vpop.f32.mrb[0].mxu0
      %v1921 = vadd.f32 0.0, %v1920
      %v1922 = vpop.f32.mrb[0].mxu0
      %1923 = vmatprep.mubr.bf16.mxu0 0
      %1924 = vmatmul.mubr.bf16.gmra.mrb[0].mxu0 %v709
      %v1925 = vpop.f32.mrb[0].mxu0
      %v1926 = vadd.f32 0.0, %v1925
      %v1927 = vpop.f32.mrb[0].mxu0
      %v1928 = vpop.f32.mrb[0].mxu0
      %v1929 = vadd.f32 0.0, %v1928
      %v1930 = vpop.f32.mrb[0].mxu0
      %1931 = vmatprep.mubr.bf16.mxu0 0
      %1932 = vmatmul.mubr.bf16.gmra.mrb[0].mxu0 %v712
      %v1933 = vpop.f32.mrb[0].mxu0
      %v1934 = vadd.f32 0.0, %v1933
      %v1935 = vpop.f32.mrb[0].mxu0
      %v1936 = vpop.f32.mrb[0].mxu0
      %v1937 = vadd.f32 0.0, %v1936
      %v1938 = vpop.f32.mrb[0].mxu0
      %1939 = vmatprep.mubr.bf16.mxu0 0
      %1940 = vmatmul.mubr.bf16.gmra.mrb[0].mxu0 %v715
      %v1941 = vpop.f32.mrb[0].mxu0
      %v1942 = vadd.f32 0.0, %v1941
      %v1943 = vpop.f32.mrb[0].mxu0
      %v1944 = vpop.f32.mrb[0].mxu0
      %v1945 = vadd.f32 0.0, %v1944
      %v1946 = vpop.f32.mrb[0].mxu0
      %1947 = vmatprep.mubr.bf16.mxu0 0
      %1948 = vmatmul.mubr.bf16.gmra.mrb[0].mxu0 %v718
      %v1949 = vpop.f32.mrb[0].mxu0
      %v1950 = vadd.f32 0.0, %v1949
      %v1951 = vpop.f32.mrb[0].mxu0
      %v1952 = vpop.f32.mrb[0].mxu0
      %v1953 = vadd.f32 0.0, %v1952
      %v1954 = vpop.f32.mrb[0].mxu0
      %1955 = vmatprep.mubr.bf16.mxu0 0
      %1956 = vmatmul.mubr.bf16.gmra.mrb[0].mxu0 %v721
      %v1957 = vpop.f32.mrb[0].mxu0
      %v1958 = vadd.f32 0.0, %v1957
      %v1959 = vpop.f32.mrb[0].mxu0
      %v1960 = vpop.f32.mrb[0].mxu0
      %v1961 = vadd.f32 0.0, %v1960
      %v1962 = vpop.f32.mrb[0].mxu0
      %1963 = vmatprep.mubr.bf16.mxu0 0
      %1964 = vmatmul.mubr.bf16.gmra.mrb[0].mxu0 %v724
      %v1965 = vpop.f32.mrb[0].mxu0
      %v1966 = vadd.f32 0.0, %v1965
      %v1967 = vpop.f32.mrb[0].mxu0
      %v1968 = vpop.f32.mrb[0].mxu0
      %v1969 = vadd.f32 0.0, %v1968
      %v1970 = vpop.f32.mrb[0].mxu0
      %1971 = vmatprep.mubr.bf16.mxu0 0
      %1972 = vmatmul.mubr.bf16.gmra.mrb[0].mxu0 %v727
      %v1973 = vpop.f32.mrb[0].mxu0
      %v1974 = vadd.f32 0.0, %v1973
      %v1975 = vpop.f32.mrb[0].mxu0
      %v1976 = vpop.f32.mrb[0].mxu0
      %v1977 = vadd.f32 0.0, %v1976
      %v1978 = vpop.f32.mrb[0].mxu0
      %1979 = vmatprep.mubr.bf16.mxu0 0
      %1980 = vmatmul.mubr.bf16.gmra.mrb[0].mxu0 %v730
      %v1981 = vpop.f32.mrb[0].mxu0
      %v1982 = vadd.f32 0.0, %v1981
      %v1983 = vpop.f32.mrb[0].mxu0
      %v1984 = vpop.f32.mrb[0].mxu0
      %v1985 = vadd.f32 0.0, %v1984
      %v1986 = vpop.f32.mrb[0].mxu0
      %1987 = vmatprep.mubr.bf16.mxu0 0
      %1988 = vmatmul.mubr.bf16.gmra.mrb[0].mxu0 %v733
      %v1989 = vpop.f32.mrb[0].mxu0
      %v1990 = vadd.f32 0.0, %v1989
      %v1991 = vpop.f32.mrb[0].mxu0
      %v1992 = vpop.f32.mrb[0].mxu0
      %v1993 = vadd.f32 0.0, %v1992
      %v1994 = vpop.f32.mrb[0].mxu0
      %1995 = vmatprep.mubr.bf16.mxu0 0
      %1996 = vmatmul.mubr.bf16.gmra.mrb[0].mxu0 %v736
      %v1997 = vpop.f32.mrb[0].mxu0
      %v1998 = vadd.f32 0.0, %v1997
      %v1999 = vpop.f32.mrb[0].mxu0
      %v2000 = vpop.f32.mrb[0].mxu0
      %v2001 = vadd.f32 0.0, %v2000
      %v2002 = vpop.f32.mrb[0].mxu0
      %2003 = vmatprep.mubr.bf16.mxu0 0
      %2004 = vmatmul.mubr.bf16.gmra.mrb[0].mxu0 %v739
      %v2005 = vpop.f32.mrb[0].mxu0
      %v2006 = vadd.f32 0.0, %v2005
      %v2007 = vpop.f32.mrb[0].mxu0
      %v2008 = vpop.f32.mrb[0].mxu0
      %v2009 = vadd.f32 0.0, %v2008
      %v2010 = vpop.f32.mrb[0].mxu0
      %2011 = vmatprep.mubr.bf16.mxu0 0
      %2012 = vmatmul.mubr.bf16.gmra.mrb[0].mxu0 %v742
      %v2013 = vpop.f32.mrb[0].mxu0
      %v2014 = vadd.f32 0.0, %v2013
      %v2015 = vpop.f32.mrb[0].mxu0
      %v2016 = vpop.f32.mrb[0].mxu0
      %v2017 = vadd.f32 0.0, %v2016
      %v2018 = vpop.f32.mrb[0].mxu0
      %2019 = vmatprep.mubr.bf16.mxu0 0
      %2020 = vmatmul.mubr.bf16.gmra.mrb[0].mxu0 %v1862
      %v2021 = vpop.f32.mrb[0].mxu0
      %v2022 = vadd.f32 0.0, %v2021
      %v2023 = vpop.f32.mrb[0].mxu0
      %v2024 = vpop.f32.mrb[0].mxu0
      %v2025 = vadd.f32 0.0, %v2024
      %v2026 = vpop.f32.mrb[0].mxu0
      %2027 = vdwg.mxu0
      %v2028 = vadd.f32 %v1800, %v1902
      %v2029 = vadd.f32 %v1801, %v1905
      %v2030 = vadd.f32 %v1802, %v1910
      %v2031 = vadd.f32 %v1803, %v1913
      %v2032 = vadd.f32 %v1804, %v1918
      %v2033 = vadd.f32 %v1805, %v1921
      %v2034 = vadd.f32 %v1806, %v1926
      %v2035 = vadd.f32 %v1807, %v1929
      %v2036 = vadd.f32 %v1808, %v1934
      %v2037 = vadd.f32 %v1809, %v1937
      %v2038 = vadd.f32 %v1810, %v1942
      %v2039 = vadd.f32 %v1811, %v1945
      %v2040 = vadd.f32 %v1812, %v1950
      %v2041 = vadd.f32 %v1813, %v1953
      %v2042 = vadd.f32 %v1814, %v1958
      %v2043 = vadd.f32 %v1815, %v1961
      %v2044 = vadd.f32 %v1816, %v1966
      %v2045 = vadd.f32 %v1817, %v1969
      %v2046 = vadd.f32 %v1818, %v1974
      %v2047 = vadd.f32 %v1819, %v1977
      %v2048 = vadd.f32 %v1820, %v1982
      %v2049 = vadd.f32 %v1821, %v1985
      %v2050 = vadd.f32 %v1822, %v1990
      %v2051 = vadd.f32 %v1823, %v1993
      %v2052 = vadd.f32 %v1824, %v1998
      %v2053 = vadd.f32 %v1825, %v2001
      %v2054 = vadd.f32 %v1826, %v2006
      %v2055 = vadd.f32 %v1827, %v2009
      %v2056 = vadd.f32 %v1828, %v2014
      %v2057 = vadd.f32 %v1829, %v2017
      %v2058 = vadd.f32 %v1830, %v2022
      %v2059 = vadd.f32 %v1831, %v2025
      %v2061 = vrot.slane %v251, 5
      %v2062 = vrot.slane %v2061, 4
      %v2063 = vrot.slane %v252, 5
      %v2064 = vsel %vm1219, %v2062, %v2063
      %v2065 = vrot.slane %v2063, 4
      %v2066 = vrot.slane %v253, 5
      %v2067 = vsel %vm1219, %v2065, %v2066
      %s2068 = scalar_lea.vmem %s1, 10
      %v2069 = vld [vmem:[%s2068] sm:$0x3]
      %v2070 = vunpack.c.l.b16 %v2064
      %v2071 = vunpack.c.l.b16 %v2067
      %v2072 = vpack.c.b16 %v2071, %v2070
      %v2074 = vsel %vm695, %v2072, 0
      %v2077 = vsel %vm744, %v2069, 0
      %2079 = vmatprep.subr.bf16.mxu0 0
      %2080 = vmatpush1.bf16.msra.mxu0 %v2077
      %2081 = vmatprep.subr.bf16.mxu0 0
      %2082 = vmatpush1.bf16.msra.mxu0 0
      %2083 = vmatprep.subr.bf16.mxu0 0
      %2084 = vmatpush1.bf16.msra.mxu0 0
      %2085 = vmatprep.subr.bf16.mxu0 0
      %2086 = vmatpush1.bf16.msra.mxu0 0
      %2087 = vmatprep.subr.bf16.mxu0 0
      %2088 = vmatpush1.bf16.msra.mxu0 0
      %2089 = vmatprep.subr.bf16.mxu0 0
      %2090 = vmatpush1.bf16.msra.mxu0 0
      %2091 = vmatprep.subr.bf16.mxu0 0
      %2092 = vmatpush1.bf16.msra.mxu0 0
      %2093 = vmatprep.subr.bf16.mxu0 0
      %2094 = vmatpush1.bf16.msra.mxu0 0
      %2095 = vmatprep.subr.bf16.mxu0 0
      %2096 = vmatpush1.bf16.msra.mxu0 0
      %2097 = vmatprep.subr.bf16.mxu0 0
      %2098 = vmatpush1.bf16.msra.mxu0 0
      %2099 = vmatprep.subr.bf16.mxu0 0
      %2100 = vmatpush1.bf16.msra.mxu0 0
      %2101 = vmatprep.subr.bf16.mxu0 0
      %2102 = vmatpush1.bf16.msra.mxu0 0
      %2103 = vmatprep.subr.bf16.mxu0 0
      %2104 = vmatpush1.bf16.msra.mxu0 0
      %2105 = vmatprep.subr.bf16.mxu0 0
      %2106 = vmatpush1.bf16.msra.mxu0 0
      %2107 = vmatprep.subr.bf16.mxu0 0
      %2108 = vmatpush1.bf16.msra.mxu0 0
      %2109 = vmatprep.subr.bf16.mxu0 0
      %2110 = vmatpush1.bf16.msra.mxu0 0
      %2111 = vmatprep.mubr.bf16.mxu0 0
      %2112 = vmatmul.mubr.bf16.gmra.mrb[0].mxu0 %v1386
      %v2113 = vpop.f32.mrb[0].mxu0
      %v2114 = vadd.f32 0.0, %v2113
      %v2115 = vpop.f32.mrb[0].mxu0
      %v2116 = vpop.f32.mrb[0].mxu0
      %v2117 = vadd.f32 0.0, %v2116
      %v2118 = vpop.f32.mrb[0].mxu0
      %2119 = vmatprep.mubr.bf16.mxu0 0
      %2120 = vmatmul.mubr.bf16.gmra.mrb[0].mxu0 %v1389
      %v2121 = vpop.f32.mrb[0].mxu0
      %v2122 = vadd.f32 0.0, %v2121
      %v2123 = vpop.f32.mrb[0].mxu0
      %v2124 = vpop.f32.mrb[0].mxu0
      %v2125 = vadd.f32 0.0, %v2124
      %v2126 = vpop.f32.mrb[0].mxu0
      %2127 = vmatprep.mubr.bf16.mxu0 0
      %2128 = vmatmul.mubr.bf16.gmra.mrb[0].mxu0 %v1392
      %v2129 = vpop.f32.mrb[0].mxu0
      %v2130 = vadd.f32 0.0, %v2129
      %v2131 = vpop.f32.mrb[0].mxu0
      %v2132 = vpop.f32.mrb[0].mxu0
      %v2133 = vadd.f32 0.0, %v2132
      %v2134 = vpop.f32.mrb[0].mxu0
      %2135 = vmatprep.mubr.bf16.mxu0 0
      %2136 = vmatmul.mubr.bf16.gmra.mrb[0].mxu0 %v1395
      %v2137 = vpop.f32.mrb[0].mxu0
      %v2138 = vadd.f32 0.0, %v2137
      %v2139 = vpop.f32.mrb[0].mxu0
      %v2140 = vpop.f32.mrb[0].mxu0
      %v2141 = vadd.f32 0.0, %v2140
      %v2142 = vpop.f32.mrb[0].mxu0
      %2143 = vmatprep.mubr.bf16.mxu0 0
      %2144 = vmatmul.mubr.bf16.gmra.mrb[0].mxu0 %v1398
      %v2145 = vpop.f32.mrb[0].mxu0
      %v2146 = vadd.f32 0.0, %v2145
      %v2147 = vpop.f32.mrb[0].mxu0
      %v2148 = vpop.f32.mrb[0].mxu0
      %v2149 = vadd.f32 0.0, %v2148
      %v2150 = vpop.f32.mrb[0].mxu0
      %2151 = vmatprep.mubr.bf16.mxu0 0
      %2152 = vmatmul.mubr.bf16.gmra.mrb[0].mxu0 %v1401
      %v2153 = vpop.f32.mrb[0].mxu0
      %v2154 = vadd.f32 0.0, %v2153
      %v2155 = vpop.f32.mrb[0].mxu0
      %v2156 = vpop.f32.mrb[0].mxu0
      %v2157 = vadd.f32 0.0, %v2156
      %v2158 = vpop.f32.mrb[0].mxu0
      %2159 = vmatprep.mubr.bf16.mxu0 0
      %2160 = vmatmul.mubr.bf16.gmra.mrb[0].mxu0 %v1404
      %v2161 = vpop.f32.mrb[0].mxu0
      %v2162 = vadd.f32 0.0, %v2161
      %v2163 = vpop.f32.mrb[0].mxu0
      %v2164 = vpop.f32.mrb[0].mxu0
      %v2165 = vadd.f32 0.0, %v2164
      %v2166 = vpop.f32.mrb[0].mxu0
      %2167 = vmatprep.mubr.bf16.mxu0 0
      %2168 = vmatmul.mubr.bf16.gmra.mrb[0].mxu0 %v1407
      %v2169 = vpop.f32.mrb[0].mxu0
      %v2170 = vadd.f32 0.0, %v2169
      %v2171 = vpop.f32.mrb[0].mxu0
      %v2172 = vpop.f32.mrb[0].mxu0
      %v2173 = vadd.f32 0.0, %v2172
      %v2174 = vpop.f32.mrb[0].mxu0
      %2175 = vmatprep.mubr.bf16.mxu0 0
      %2176 = vmatmul.mubr.bf16.gmra.mrb[0].mxu0 %v1410
      %v2177 = vpop.f32.mrb[0].mxu0
      %v2178 = vadd.f32 0.0, %v2177
      %v2179 = vpop.f32.mrb[0].mxu0
      %v2180 = vpop.f32.mrb[0].mxu0
      %v2181 = vadd.f32 0.0, %v2180
      %v2182 = vpop.f32.mrb[0].mxu0
      %2183 = vmatprep.mubr.bf16.mxu0 0
      %2184 = vmatmul.mubr.bf16.gmra.mrb[0].mxu0 %v1413
      %v2185 = vpop.f32.mrb[0].mxu0
      %v2186 = vadd.f32 0.0, %v2185
      %v2187 = vpop.f32.mrb[0].mxu0
      %v2188 = vpop.f32.mrb[0].mxu0
      %v2189 = vadd.f32 0.0, %v2188
      %v2190 = vpop.f32.mrb[0].mxu0
      %2191 = vmatprep.mubr.bf16.mxu0 0
      %2192 = vmatmul.mubr.bf16.gmra.mrb[0].mxu0 %v1416
      %v2193 = vpop.f32.mrb[0].mxu0
      %v2194 = vadd.f32 0.0, %v2193
      %v2195 = vpop.f32.mrb[0].mxu0
      %v2196 = vpop.f32.mrb[0].mxu0
      %v2197 = vadd.f32 0.0, %v2196
      %v2198 = vpop.f32.mrb[0].mxu0
      %2199 = vmatprep.mubr.bf16.mxu0 0
      %2200 = vmatmul.mubr.bf16.gmra.mrb[0].mxu0 %v1419
      %v2201 = vpop.f32.mrb[0].mxu0
      %v2202 = vadd.f32 0.0, %v2201
      %v2203 = vpop.f32.mrb[0].mxu0
      %v2204 = vpop.f32.mrb[0].mxu0
      %v2205 = vadd.f32 0.0, %v2204
      %v2206 = vpop.f32.mrb[0].mxu0
      %2207 = vmatprep.mubr.bf16.mxu0 0
      %2208 = vmatmul.mubr.bf16.gmra.mrb[0].mxu0 %v1422
      %v2209 = vpop.f32.mrb[0].mxu0
      %v2210 = vadd.f32 0.0, %v2209
      %v2211 = vpop.f32.mrb[0].mxu0
      %v2212 = vpop.f32.mrb[0].mxu0
      %v2213 = vadd.f32 0.0, %v2212
      %v2214 = vpop.f32.mrb[0].mxu0
      %2215 = vmatprep.mubr.bf16.mxu0 0
      %2216 = vmatmul.mubr.bf16.gmra.mrb[0].mxu0 %v1425
      %v2217 = vpop.f32.mrb[0].mxu0
      %v2218 = vadd.f32 0.0, %v2217
      %v2219 = vpop.f32.mrb[0].mxu0
      %v2220 = vpop.f32.mrb[0].mxu0
      %v2221 = vadd.f32 0.0, %v2220
      %v2222 = vpop.f32.mrb[0].mxu0
      %2223 = vmatprep.mubr.bf16.mxu0 0
      %2224 = vmatmul.mubr.bf16.gmra.mrb[0].mxu0 %v1428
      %v2225 = vpop.f32.mrb[0].mxu0
      %v2226 = vadd.f32 0.0, %v2225
      %v2227 = vpop.f32.mrb[0].mxu0
      %v2228 = vpop.f32.mrb[0].mxu0
      %v2229 = vadd.f32 0.0, %v2228
      %v2230 = vpop.f32.mrb[0].mxu0
      %2231 = vmatprep.mubr.bf16.mxu0 0
      %2232 = vmatmul.mubr.bf16.gmra.mrb[0].mxu0 %v2074
      %v2233 = vpop.f32.mrb[0].mxu0
      %v2234 = vadd.f32 0.0, %v2233
      %v2235 = vpop.f32.mrb[0].mxu0
      %v2236 = vpop.f32.mrb[0].mxu0
      %v2237 = vadd.f32 0.0, %v2236
      %v2238 = vpop.f32.mrb[0].mxu0
      %2239 = vdwg.mxu0
      %v2240 = vadd.f32 %v2028, %v2114
      %v2241 = vadd.f32 %v2029, %v2117
      %v2242 = vadd.f32 %v2030, %v2122
      %v2243 = vadd.f32 %v2031, %v2125
      %v2244 = vadd.f32 %v2032, %v2130
      %v2245 = vadd.f32 %v2033, %v2133
      %v2246 = vadd.f32 %v2034, %v2138
      %v2247 = vadd.f32 %v2035, %v2141
      %v2248 = vadd.f32 %v2036, %v2146
      %v2249 = vadd.f32 %v2037, %v2149
      %v2250 = vadd.f32 %v2038, %v2154
      %v2251 = vadd.f32 %v2039, %v2157
      %v2252 = vadd.f32 %v2040, %v2162
      %v2253 = vadd.f32 %v2041, %v2165
      %v2254 = vadd.f32 %v2042, %v2170
      %v2255 = vadd.f32 %v2043, %v2173
      %v2256 = vadd.f32 %v2044, %v2178
      %v2257 = vadd.f32 %v2045, %v2181
      %v2258 = vadd.f32 %v2046, %v2186
      %v2259 = vadd.f32 %v2047, %v2189
      %v2260 = vadd.f32 %v2048, %v2194
      %v2261 = vadd.f32 %v2049, %v2197
      %v2262 = vadd.f32 %v2050, %v2202
      %v2263 = vadd.f32 %v2051, %v2205
      %v2264 = vadd.f32 %v2052, %v2210
      %v2265 = vadd.f32 %v2053, %v2213
      %v2266 = vadd.f32 %v2054, %v2218
      %v2267 = vadd.f32 %v2055, %v2221
      %v2268 = vadd.f32 %v2056, %v2226
      %v2269 = vadd.f32 %v2057, %v2229
      %v2270 = vadd.f32 %v2058, %v2234
      %v2271 = vadd.f32 %v2059, %v2237
      %s2272 = scalar_lea.vmem %s1, 12
      %v2273 = vld [vmem:[%s2272] sm:$0x3]
      %v2276 = vunpack.c.l.b16 %v254
      %v2277 = vunpack.c.l.b16 %v255
      %v2278 = vpack.c.b16 %v2277, %v2276
      %v2280 = vsel %vm695, %v2278, 0
      %v2283 = vsel %vm744, %v2273, 0
      %2285 = vmatprep.subr.bf16.mxu0 0
      %2286 = vmatpush1.bf16.msra.mxu0 %v2283
      %2287 = vmatprep.subr.bf16.mxu0 0
      %2288 = vmatpush1.bf16.msra.mxu0 0
      %2289 = vmatprep.subr.bf16.mxu0 0
      %2290 = vmatpush1.bf16.msra.mxu0 0
      %2291 = vmatprep.subr.bf16.mxu0 0
      %2292 = vmatpush1.bf16.msra.mxu0 0
      %2293 = vmatprep.subr.bf16.mxu0 0
      %2294 = vmatpush1.bf16.msra.mxu0 0
      %2295 = vmatprep.subr.bf16.mxu0 0
      %2296 = vmatpush1.bf16.msra.mxu0 0
      %2297 = vmatprep.subr.bf16.mxu0 0
      %2298 = vmatpush1.bf16.msra.mxu0 0
      %2299 = vmatprep.subr.bf16.mxu0 0
      %2300 = vmatpush1.bf16.msra.mxu0 0
      %2301 = vmatprep.subr.bf16.mxu0 0
      %2302 = vmatpush1.bf16.msra.mxu0 0
      %2303 = vmatprep.subr.bf16.mxu0 0
      %2304 = vmatpush1.bf16.msra.mxu0 0
      %2305 = vmatprep.subr.bf16.mxu0 0
      %2306 = vmatpush1.bf16.msra.mxu0 0
      %2307 = vmatprep.subr.bf16.mxu0 0
      %2308 = vmatpush1.bf16.msra.mxu0 0
      %2309 = vmatprep.subr.bf16.mxu0 0
      %2310 = vmatpush1.bf16.msra.mxu0 0
      %2311 = vmatprep.subr.bf16.mxu0 0
      %2312 = vmatpush1.bf16.msra.mxu0 0
      %2313 = vmatprep.subr.bf16.mxu0 0
      %2314 = vmatpush1.bf16.msra.mxu0 0
      %2315 = vmatprep.subr.bf16.mxu0 0
      %2316 = vmatpush1.bf16.msra.mxu0 0
      %2317 = vmatprep.mubr.bf16.mxu0 0
      %2318 = vmatmul.mubr.bf16.gmra.mrb[0].mxu0 %v996
      %v2319 = vpop.f32.mrb[0].mxu0
      %v2320 = vadd.f32 0.0, %v2319
      %v2321 = vpop.f32.mrb[0].mxu0
      %v2322 = vpop.f32.mrb[0].mxu0
      %v2323 = vadd.f32 0.0, %v2322
      %v2324 = vpop.f32.mrb[0].mxu0
      %2325 = vmatprep.mubr.bf16.mxu0 0
      %2326 = vmatmul.mubr.bf16.gmra.mrb[0].mxu0 %v999
      %v2327 = vpop.f32.mrb[0].mxu0
      %v2328 = vadd.f32 0.0, %v2327
      %v2329 = vpop.f32.mrb[0].mxu0
      %v2330 = vpop.f32.mrb[0].mxu0
      %v2331 = vadd.f32 0.0, %v2330
      %v2332 = vpop.f32.mrb[0].mxu0
      %2333 = vmatprep.mubr.bf16.mxu0 0
      %2334 = vmatmul.mubr.bf16.gmra.mrb[0].mxu0 %v1002
      %v2335 = vpop.f32.mrb[0].mxu0
      %v2336 = vadd.f32 0.0, %v2335
      %v2337 = vpop.f32.mrb[0].mxu0
      %v2338 = vpop.f32.mrb[0].mxu0
      %v2339 = vadd.f32 0.0, %v2338
      %v2340 = vpop.f32.mrb[0].mxu0
      %2341 = vmatprep.mubr.bf16.mxu0 0
      %2342 = vmatmul.mubr.bf16.gmra.mrb[0].mxu0 %v1005
      %v2343 = vpop.f32.mrb[0].mxu0
      %v2344 = vadd.f32 0.0, %v2343
      %v2345 = vpop.f32.mrb[0].mxu0
      %v2346 = vpop.f32.mrb[0].mxu0
      %v2347 = vadd.f32 0.0, %v2346
      %v2348 = vpop.f32.mrb[0].mxu0
      %2349 = vmatprep.mubr.bf16.mxu0 0
      %2350 = vmatmul.mubr.bf16.gmra.mrb[0].mxu0 %v1008
      %v2351 = vpop.f32.mrb[0].mxu0
      %v2352 = vadd.f32 0.0, %v2351
      %v2353 = vpop.f32.mrb[0].mxu0
      %v2354 = vpop.f32.mrb[0].mxu0
      %v2355 = vadd.f32 0.0, %v2354
      %v2356 = vpop.f32.mrb[0].mxu0
      %2357 = vmatprep.mubr.bf16.mxu0 0
      %2358 = vmatmul.mubr.bf16.gmra.mrb[0].mxu0 %v1011
      %v2359 = vpop.f32.mrb[0].mxu0
      %v2360 = vadd.f32 0.0, %v2359
      %v2361 = vpop.f32.mrb[0].mxu0
      %v2362 = vpop.f32.mrb[0].mxu0
      %v2363 = vadd.f32 0.0, %v2362
      %v2364 = vpop.f32.mrb[0].mxu0
      %2365 = vmatprep.mubr.bf16.mxu0 0
      %2366 = vmatmul.mubr.bf16.gmra.mrb[0].mxu0 %v1014
      %v2367 = vpop.f32.mrb[0].mxu0
      %v2368 = vadd.f32 0.0, %v2367
      %v2369 = vpop.f32.mrb[0].mxu0
      %v2370 = vpop.f32.mrb[0].mxu0
      %v2371 = vadd.f32 0.0, %v2370
      %v2372 = vpop.f32.mrb[0].mxu0
      %2373 = vmatprep.mubr.bf16.mxu0 0
      %2374 = vmatmul.mubr.bf16.gmra.mrb[0].mxu0 %v1017
      %v2375 = vpop.f32.mrb[0].mxu0
      %v2376 = vadd.f32 0.0, %v2375
      %v2377 = vpop.f32.mrb[0].mxu0
      %v2378 = vpop.f32.mrb[0].mxu0
      %v2379 = vadd.f32 0.0, %v2378
      %v2380 = vpop.f32.mrb[0].mxu0
      %2381 = vmatprep.mubr.bf16.mxu0 0
      %2382 = vmatmul.mubr.bf16.gmra.mrb[0].mxu0 %v1020
      %v2383 = vpop.f32.mrb[0].mxu0
      %v2384 = vadd.f32 0.0, %v2383
      %v2385 = vpop.f32.mrb[0].mxu0
      %v2386 = vpop.f32.mrb[0].mxu0
      %v2387 = vadd.f32 0.0, %v2386
      %v2388 = vpop.f32.mrb[0].mxu0
      %2389 = vmatprep.mubr.bf16.mxu0 0
      %2390 = vmatmul.mubr.bf16.gmra.mrb[0].mxu0 %v1023
      %v2391 = vpop.f32.mrb[0].mxu0
      %v2392 = vadd.f32 0.0, %v2391
      %v2393 = vpop.f32.mrb[0].mxu0
      %v2394 = vpop.f32.mrb[0].mxu0
      %v2395 = vadd.f32 0.0, %v2394
      %v2396 = vpop.f32.mrb[0].mxu0
      %2397 = vmatprep.mubr.bf16.mxu0 0
      %2398 = vmatmul.mubr.bf16.gmra.mrb[0].mxu0 %v1026
      %v2399 = vpop.f32.mrb[0].mxu0
      %v2400 = vadd.f32 0.0, %v2399
      %v2401 = vpop.f32.mrb[0].mxu0
      %v2402 = vpop.f32.mrb[0].mxu0
      %v2403 = vadd.f32 0.0, %v2402
      %v2404 = vpop.f32.mrb[0].mxu0
      %2405 = vmatprep.mubr.bf16.mxu0 0
      %2406 = vmatmul.mubr.bf16.gmra.mrb[0].mxu0 %v1029
      %v2407 = vpop.f32.mrb[0].mxu0
      %v2408 = vadd.f32 0.0, %v2407
      %v2409 = vpop.f32.mrb[0].mxu0
      %v2410 = vpop.f32.mrb[0].mxu0
      %v2411 = vadd.f32 0.0, %v2410
      %v2412 = vpop.f32.mrb[0].mxu0
      %2413 = vmatprep.mubr.bf16.mxu0 0
      %2414 = vmatmul.mubr.bf16.gmra.mrb[0].mxu0 %v1032
      %v2415 = vpop.f32.mrb[0].mxu0
      %v2416 = vadd.f32 0.0, %v2415
      %v2417 = vpop.f32.mrb[0].mxu0
      %v2418 = vpop.f32.mrb[0].mxu0
      %v2419 = vadd.f32 0.0, %v2418
      %v2420 = vpop.f32.mrb[0].mxu0
      %2421 = vmatprep.mubr.bf16.mxu0 0
      %2422 = vmatmul.mubr.bf16.gmra.mrb[0].mxu0 %v1035
      %v2423 = vpop.f32.mrb[0].mxu0
      %v2424 = vadd.f32 0.0, %v2423
      %v2425 = vpop.f32.mrb[0].mxu0
      %v2426 = vpop.f32.mrb[0].mxu0
      %v2427 = vadd.f32 0.0, %v2426
      %v2428 = vpop.f32.mrb[0].mxu0
      %2429 = vmatprep.mubr.bf16.mxu0 0
      %2430 = vmatmul.mubr.bf16.gmra.mrb[0].mxu0 %v1634
      %v2431 = vpop.f32.mrb[0].mxu0
      %v2432 = vadd.f32 0.0, %v2431
      %v2433 = vpop.f32.mrb[0].mxu0
      %v2434 = vpop.f32.mrb[0].mxu0
      %v2435 = vadd.f32 0.0, %v2434
      %v2436 = vpop.f32.mrb[0].mxu0
      %2437 = vmatprep.mubr.bf16.mxu0 0
      %2438 = vmatmul.mubr.bf16.gmra.mrb[0].mxu0 %v2280
      %v2439 = vpop.f32.mrb[0].mxu0
      %v2440 = vadd.f32 0.0, %v2439
      %v2441 = vpop.f32.mrb[0].mxu0
      %v2442 = vpop.f32.mrb[0].mxu0
      %v2443 = vadd.f32 0.0, %v2442
      %v2444 = vpop.f32.mrb[0].mxu0
      %2445 = vdwg.mxu0
      %v2446 = vadd.f32 %v2240, %v2320
      %v2447 = vadd.f32 %v2241, %v2323
      %v2448 = vadd.f32 %v2242, %v2328
      %v2449 = vadd.f32 %v2243, %v2331
      %v2450 = vadd.f32 %v2244, %v2336
      %v2451 = vadd.f32 %v2245, %v2339
      %v2452 = vadd.f32 %v2246, %v2344
      %v2453 = vadd.f32 %v2247, %v2347
      %v2454 = vadd.f32 %v2248, %v2352
      %v2455 = vadd.f32 %v2249, %v2355
      %v2456 = vadd.f32 %v2250, %v2360
      %v2457 = vadd.f32 %v2251, %v2363
      %v2458 = vadd.f32 %v2252, %v2368
      %v2459 = vadd.f32 %v2253, %v2371
      %v2460 = vadd.f32 %v2254, %v2376
      %v2461 = vadd.f32 %v2255, %v2379
      %v2462 = vadd.f32 %v2256, %v2384
      %v2463 = vadd.f32 %v2257, %v2387
      %v2464 = vadd.f32 %v2258, %v2392
      %v2465 = vadd.f32 %v2259, %v2395
      %v2466 = vadd.f32 %v2260, %v2400
      %v2467 = vadd.f32 %v2261, %v2403
      %v2468 = vadd.f32 %v2262, %v2408
      %v2469 = vadd.f32 %v2263, %v2411
      %v2470 = vadd.f32 %v2264, %v2416
      %v2471 = vadd.f32 %v2265, %v2419
      %v2472 = vadd.f32 %v2266, %v2424
      %v2473 = vadd.f32 %v2267, %v2427
      %v2474 = vadd.f32 %v2268, %v2432
      %v2475 = vadd.f32 %v2269, %v2435
      %v2476 = vadd.f32 %v2270, %v2440
      %v2477 = vadd.f32 %v2271, %v2443
      %v2479 = vshrl.u32 %v254, 16
      %v2481 = vrot.slane %v2479, 4
      %v2482 = vshll.u32 %v254, 16
      %v2484 = vrot.slane %v2482, 5
      %v2485 = vor.u32 %v2481, %v2484
      %v2486 = vrot.slane %v2485, 4
      %v2488 = vshll.u32 %v255, 16
      %v2490 = vrot.slane %v2488, 5
      %v2491 = vsel %vm260, %v2486, %v2490
      %v2492 = vshrl.u32 %v255, 16
      %v2494 = vrot.slane %v2492, 4
      %v2495 = vor.u32 %v2494, %v2490
      %v2496 = vrot.slane %v2495, 4
      %v2498 = vshll.u32 %v256, 16
      %v2500 = vrot.slane %v2498, 5
      %v2501 = vsel %vm260, %v2496, %v2500
      %s2502 = scalar_lea.vmem %s1, 14
      %v2503 = vld [vmem:[%s2502] sm:$0x3]
      %v2504 = vunpack.c.l.b16 %v2491
      %v2505 = vunpack.c.l.b16 %v2501
      %v2506 = vpack.c.b16 %v2505, %v2504
      %v2508 = vsel %vm695, %v2506, 0
      %v2511 = vsel %vm744, %v2503, 0
      %2513 = vmatprep.subr.bf16.mxu0 0
      %2514 = vmatpush1.bf16.msra.mxu0 %v2511
      %2515 = vmatprep.subr.bf16.mxu0 0
      %2516 = vmatpush1.bf16.msra.mxu0 0
      %2517 = vmatprep.subr.bf16.mxu0 0
      %2518 = vmatpush1.bf16.msra.mxu0 0
      %2519 = vmatprep.subr.bf16.mxu0 0
      %2520 = vmatpush1.bf16.msra.mxu0 0
      %2521 = vmatprep.subr.bf16.mxu0 0
      %2522 = vmatpush1.bf16.msra.mxu0 0
      %2523 = vmatprep.subr.bf16.mxu0 0
      %2524 = vmatpush1.bf16.msra.mxu0 0
      %2525 = vmatprep.subr.bf16.mxu0 0
      %2526 = vmatpush1.bf16.msra.mxu0 0
      %2527 = vmatprep.subr.bf16.mxu0 0
      %2528 = vmatpush1.bf16.msra.mxu0 0
      %2529 = vmatprep.subr.bf16.mxu0 0
      %2530 = vmatpush1.bf16.msra.mxu0 0
      %2531 = vmatprep.subr.bf16.mxu0 0
      %2532 = vmatpush1.bf16.msra.mxu0 0
      %2533 = vmatprep.subr.bf16.mxu0 0
      %2534 = vmatpush1.bf16.msra.mxu0 0
      %2535 = vmatprep.subr.bf16.mxu0 0
      %2536 = vmatpush1.bf16.msra.mxu0 0
      %2537 = vmatprep.subr.bf16.mxu0 0
      %2538 = vmatpush1.bf16.msra.mxu0 0
      %2539 = vmatprep.subr.bf16.mxu0 0
      %2540 = vmatpush1.bf16.msra.mxu0 0
      %2541 = vmatprep.subr.bf16.mxu0 0
      %2542 = vmatpush1.bf16.msra.mxu0 0
      %2543 = vmatprep.subr.bf16.mxu0 0
      %2544 = vmatpush1.bf16.msra.mxu0 0
      %2545 = vmatprep.mubr.bf16.mxu0 0
      %2546 = vmatmul.mubr.bf16.gmra.mrb[0].mxu0 %v703
      %v2547 = vpop.f32.mrb[0].mxu0
      %v2548 = vadd.f32 0.0, %v2547
      %v2549 = vpop.f32.mrb[0].mxu0
      %v2550 = vpop.f32.mrb[0].mxu0
      %v2551 = vadd.f32 0.0, %v2550
      %v2552 = vpop.f32.mrb[0].mxu0
      %2553 = vmatprep.mubr.bf16.mxu0 0
      %2554 = vmatmul.mubr.bf16.gmra.mrb[0].mxu0 %v706
      %v2555 = vpop.f32.mrb[0].mxu0
      %v2556 = vadd.f32 0.0, %v2555
      %v2557 = vpop.f32.mrb[0].mxu0
      %v2558 = vpop.f32.mrb[0].mxu0
      %v2559 = vadd.f32 0.0, %v2558
      %v2560 = vpop.f32.mrb[0].mxu0
      %2561 = vmatprep.mubr.bf16.mxu0 0
      %2562 = vmatmul.mubr.bf16.gmra.mrb[0].mxu0 %v709
      %v2563 = vpop.f32.mrb[0].mxu0
      %v2564 = vadd.f32 0.0, %v2563
      %v2565 = vpop.f32.mrb[0].mxu0
      %v2566 = vpop.f32.mrb[0].mxu0
      %v2567 = vadd.f32 0.0, %v2566
      %v2568 = vpop.f32.mrb[0].mxu0
      %2569 = vmatprep.mubr.bf16.mxu0 0
      %2570 = vmatmul.mubr.bf16.gmra.mrb[0].mxu0 %v712
      %v2571 = vpop.f32.mrb[0].mxu0
      %v2572 = vadd.f32 0.0, %v2571
      %v2573 = vpop.f32.mrb[0].mxu0
      %v2574 = vpop.f32.mrb[0].mxu0
      %v2575 = vadd.f32 0.0, %v2574
      %v2576 = vpop.f32.mrb[0].mxu0
      %2577 = vmatprep.mubr.bf16.mxu0 0
      %2578 = vmatmul.mubr.bf16.gmra.mrb[0].mxu0 %v715
      %v2579 = vpop.f32.mrb[0].mxu0
      %v2580 = vadd.f32 0.0, %v2579
      %v2581 = vpop.f32.mrb[0].mxu0
      %v2582 = vpop.f32.mrb[0].mxu0
      %v2583 = vadd.f32 0.0, %v2582
      %v2584 = vpop.f32.mrb[0].mxu0
      %2585 = vmatprep.mubr.bf16.mxu0 0
      %2586 = vmatmul.mubr.bf16.gmra.mrb[0].mxu0 %v718
      %v2587 = vpop.f32.mrb[0].mxu0
      %v2588 = vadd.f32 0.0, %v2587
      %v2589 = vpop.f32.mrb[0].mxu0
      %v2590 = vpop.f32.mrb[0].mxu0
      %v2591 = vadd.f32 0.0, %v2590
      %v2592 = vpop.f32.mrb[0].mxu0
      %2593 = vmatprep.mubr.bf16.mxu0 0
      %2594 = vmatmul.mubr.bf16.gmra.mrb[0].mxu0 %v721
      %v2595 = vpop.f32.mrb[0].mxu0
      %v2596 = vadd.f32 0.0, %v2595
      %v2597 = vpop.f32.mrb[0].mxu0
      %v2598 = vpop.f32.mrb[0].mxu0
      %v2599 = vadd.f32 0.0, %v2598
      %v2600 = vpop.f32.mrb[0].mxu0
      %2601 = vmatprep.mubr.bf16.mxu0 0
      %2602 = vmatmul.mubr.bf16.gmra.mrb[0].mxu0 %v724
      %v2603 = vpop.f32.mrb[0].mxu0
      %v2604 = vadd.f32 0.0, %v2603
      %v2605 = vpop.f32.mrb[0].mxu0
      %v2606 = vpop.f32.mrb[0].mxu0
      %v2607 = vadd.f32 0.0, %v2606
      %v2608 = vpop.f32.mrb[0].mxu0
      %2609 = vmatprep.mubr.bf16.mxu0 0
      %2610 = vmatmul.mubr.bf16.gmra.mrb[0].mxu0 %v727
      %v2611 = vpop.f32.mrb[0].mxu0
      %v2612 = vadd.f32 0.0, %v2611
      %v2613 = vpop.f32.mrb[0].mxu0
      %v2614 = vpop.f32.mrb[0].mxu0
      %v2615 = vadd.f32 0.0, %v2614
      %v2616 = vpop.f32.mrb[0].mxu0
      %2617 = vmatprep.mubr.bf16.mxu0 0
      %2618 = vmatmul.mubr.bf16.gmra.mrb[0].mxu0 %v730
      %v2619 = vpop.f32.mrb[0].mxu0
      %v2620 = vadd.f32 0.0, %v2619
      %v2621 = vpop.f32.mrb[0].mxu0
      %v2622 = vpop.f32.mrb[0].mxu0
      %v2623 = vadd.f32 0.0, %v2622
      %v2624 = vpop.f32.mrb[0].mxu0
      %2625 = vmatprep.mubr.bf16.mxu0 0
      %2626 = vmatmul.mubr.bf16.gmra.mrb[0].mxu0 %v733
      %v2627 = vpop.f32.mrb[0].mxu0
      %v2628 = vadd.f32 0.0, %v2627
      %v2629 = vpop.f32.mrb[0].mxu0
      %v2630 = vpop.f32.mrb[0].mxu0
      %v2631 = vadd.f32 0.0, %v2630
      %v2632 = vpop.f32.mrb[0].mxu0
      %2633 = vmatprep.mubr.bf16.mxu0 0
      %2634 = vmatmul.mubr.bf16.gmra.mrb[0].mxu0 %v736
      %v2635 = vpop.f32.mrb[0].mxu0
      %v2636 = vadd.f32 0.0, %v2635
      %v2637 = vpop.f32.mrb[0].mxu0
      %v2638 = vpop.f32.mrb[0].mxu0
      %v2639 = vadd.f32 0.0, %v2638
      %v2640 = vpop.f32.mrb[0].mxu0
      %2641 = vmatprep.mubr.bf16.mxu0 0
      %2642 = vmatmul.mubr.bf16.gmra.mrb[0].mxu0 %v739
      %v2643 = vpop.f32.mrb[0].mxu0
      %v2644 = vadd.f32 0.0, %v2643
      %v2645 = vpop.f32.mrb[0].mxu0
      %v2646 = vpop.f32.mrb[0].mxu0
      %v2647 = vadd.f32 0.0, %v2646
      %v2648 = vpop.f32.mrb[0].mxu0
      %2649 = vmatprep.mubr.bf16.mxu0 0
      %2650 = vmatmul.mubr.bf16.gmra.mrb[0].mxu0 %v742
      %v2651 = vpop.f32.mrb[0].mxu0
      %v2652 = vadd.f32 0.0, %v2651
      %v2653 = vpop.f32.mrb[0].mxu0
      %v2654 = vpop.f32.mrb[0].mxu0
      %v2655 = vadd.f32 0.0, %v2654
      %v2656 = vpop.f32.mrb[0].mxu0
      %2657 = vmatprep.mubr.bf16.mxu0 0
      %2658 = vmatmul.mubr.bf16.gmra.mrb[0].mxu0 %v1862
      %v2659 = vpop.f32.mrb[0].mxu0
      %v2660 = vadd.f32 0.0, %v2659
      %v2661 = vpop.f32.mrb[0].mxu0
      %v2662 = vpop.f32.mrb[0].mxu0
      %v2663 = vadd.f32 0.0, %v2662
      %v2664 = vpop.f32.mrb[0].mxu0
      %2665 = vmatprep.mubr.bf16.mxu0 0
      %2666 = vmatmul.mubr.bf16.gmra.mrb[0].mxu0 %v2508
      %v2667 = vpop.f32.mrb[0].mxu0
      %v2668 = vadd.f32 0.0, %v2667
      %v2669 = vpop.f32.mrb[0].mxu0
      %v2670 = vpop.f32.mrb[0].mxu0
      %v2671 = vadd.f32 0.0, %v2670
      %v2672 = vpop.f32.mrb[0].mxu0
      %2673 = vdwg.mxu0
      %v2674 = vadd.f32 %v2446, %v2548
      %v2675 = vadd.f32 %v2447, %v2551
      %v2676 = vadd.f32 %v2448, %v2556
      %v2677 = vadd.f32 %v2449, %v2559
      %v2678 = vadd.f32 %v2450, %v2564
      %v2679 = vadd.f32 %v2451, %v2567
      %v2680 = vadd.f32 %v2452, %v2572
      %v2681 = vadd.f32 %v2453, %v2575
      %v2682 = vadd.f32 %v2454, %v2580
      %v2683 = vadd.f32 %v2455, %v2583
      %v2684 = vadd.f32 %v2456, %v2588
      %v2685 = vadd.f32 %v2457, %v2591
      %v2686 = vadd.f32 %v2458, %v2596
      %v2687 = vadd.f32 %v2459, %v2599
      %v2688 = vadd.f32 %v2460, %v2604
      %v2689 = vadd.f32 %v2461, %v2607
      %v2690 = vadd.f32 %v2462, %v2612
      %v2691 = vadd.f32 %v2463, %v2615
      %v2692 = vadd.f32 %v2464, %v2620
      %v2693 = vadd.f32 %v2465, %v2623
      %v2694 = vadd.f32 %v2466, %v2628
      %v2695 = vadd.f32 %v2467, %v2631
      %v2696 = vadd.f32 %v2468, %v2636
      %v2697 = vadd.f32 %v2469, %v2639
      %v2698 = vadd.f32 %v2470, %v2644
      %v2699 = vadd.f32 %v2471, %v2647
      %v2700 = vadd.f32 %v2472, %v2652
      %v2701 = vadd.f32 %v2473, %v2655
      %v2702 = vadd.f32 %v2474, %v2660
      %v2703 = vadd.f32 %v2475, %v2663
      %v2704 = vadd.f32 %v2476, %v2668
      %v2705 = vadd.f32 %v2477, %v2671
      %v2707 = vrot.slane %v254, 5
      %v2708 = vrot.slane %v2707, 4
      %v2709 = vrot.slane %v255, 5
      %v2710 = vsel %vm1219, %v2708, %v2709
      %v2711 = vrot.slane %v2709, 4
      %v2712 = vrot.slane %v256, 5
      %v2713 = vsel %vm1219, %v2711, %v2712
      %s2714 = scalar_lea.vmem %s1, 16
      %v2715 = vld [vmem:[%s2714] sm:$0x3]
      %v2716 = vunpack.c.l.b16 %v2710
      %v2717 = vunpack.c.l.b16 %v2713
      %v2718 = vpack.c.b16 %v2717, %v2716
      %v2720 = vsel %vm695, %v2718, 0
      %v2723 = vsel %vm744, %v2715, 0
      %2725 = vmatprep.subr.bf16.mxu0 0
      %2726 = vmatpush1.bf16.msra.mxu0 %v2723
      %2727 = vmatprep.subr.bf16.mxu0 0
      %2728 = vmatpush1.bf16.msra.mxu0 0
      %2729 = vmatprep.subr.bf16.mxu0 0
      %2730 = vmatpush1.bf16.msra.mxu0 0
      %2731 = vmatprep.subr.bf16.mxu0 0
      %2732 = vmatpush1.bf16.msra.mxu0 0
      %2733 = vmatprep.subr.bf16.mxu0 0
      %2734 = vmatpush1.bf16.msra.mxu0 0
      %2735 = vmatprep.subr.bf16.mxu0 0
      %2736 = vmatpush1.bf16.msra.mxu0 0
      %2737 = vmatprep.subr.bf16.mxu0 0
      %2738 = vmatpush1.bf16.msra.mxu0 0
      %2739 = vmatprep.subr.bf16.mxu0 0
      %2740 = vmatpush1.bf16.msra.mxu0 0
      %2741 = vmatprep.subr.bf16.mxu0 0
      %2742 = vmatpush1.bf16.msra.mxu0 0
      %2743 = vmatprep.subr.bf16.mxu0 0
      %2744 = vmatpush1.bf16.msra.mxu0 0
      %2745 = vmatprep.subr.bf16.mxu0 0
      %2746 = vmatpush1.bf16.msra.mxu0 0
      %2747 = vmatprep.subr.bf16.mxu0 0
      %2748 = vmatpush1.bf16.msra.mxu0 0
      %2749 = vmatprep.subr.bf16.mxu0 0
      %2750 = vmatpush1.bf16.msra.mxu0 0
      %2751 = vmatprep.subr.bf16.mxu0 0
      %2752 = vmatpush1.bf16.msra.mxu0 0
      %2753 = vmatprep.subr.bf16.mxu0 0
      %2754 = vmatpush1.bf16.msra.mxu0 0
      %2755 = vmatprep.subr.bf16.mxu0 0
      %2756 = vmatpush1.bf16.msra.mxu0 0
      %2757 = vmatprep.mubr.bf16.mxu0 0
      %2758 = vmatmul.mubr.bf16.gmra.mrb[0].mxu0 %v1389
      %v2759 = vpop.f32.mrb[0].mxu0
      %v2760 = vadd.f32 0.0, %v2759
      %v2761 = vpop.f32.mrb[0].mxu0
      %v2762 = vpop.f32.mrb[0].mxu0
      %v2763 = vadd.f32 0.0, %v2762
      %v2764 = vpop.f32.mrb[0].mxu0
      %2765 = vmatprep.mubr.bf16.mxu0 0
      %2766 = vmatmul.mubr.bf16.gmra.mrb[0].mxu0 %v1392
      %v2767 = vpop.f32.mrb[0].mxu0
      %v2768 = vadd.f32 0.0, %v2767
      %v2769 = vpop.f32.mrb[0].mxu0
      %v2770 = vpop.f32.mrb[0].mxu0
      %v2771 = vadd.f32 0.0, %v2770
      %v2772 = vpop.f32.mrb[0].mxu0
      %2773 = vmatprep.mubr.bf16.mxu0 0
      %2774 = vmatmul.mubr.bf16.gmra.mrb[0].mxu0 %v1395
      %v2775 = vpop.f32.mrb[0].mxu0
      %v2776 = vadd.f32 0.0, %v2775
      %v2777 = vpop.f32.mrb[0].mxu0
      %v2778 = vpop.f32.mrb[0].mxu0
      %v2779 = vadd.f32 0.0, %v2778
      %v2780 = vpop.f32.mrb[0].mxu0
      %2781 = vmatprep.mubr.bf16.mxu0 0
      %2782 = vmatmul.mubr.bf16.gmra.mrb[0].mxu0 %v1398
      %v2783 = vpop.f32.mrb[0].mxu0
      %v2784 = vadd.f32 0.0, %v2783
      %v2785 = vpop.f32.mrb[0].mxu0
      %v2786 = vpop.f32.mrb[0].mxu0
      %v2787 = vadd.f32 0.0, %v2786
      %v2788 = vpop.f32.mrb[0].mxu0
      %2789 = vmatprep.mubr.bf16.mxu0 0
      %2790 = vmatmul.mubr.bf16.gmra.mrb[0].mxu0 %v1401
      %v2791 = vpop.f32.mrb[0].mxu0
      %v2792 = vadd.f32 0.0, %v2791
      %v2793 = vpop.f32.mrb[0].mxu0
      %v2794 = vpop.f32.mrb[0].mxu0
      %v2795 = vadd.f32 0.0, %v2794
      %v2796 = vpop.f32.mrb[0].mxu0
      %2797 = vmatprep.mubr.bf16.mxu0 0
      %2798 = vmatmul.mubr.bf16.gmra.mrb[0].mxu0 %v1404
      %v2799 = vpop.f32.mrb[0].mxu0
      %v2800 = vadd.f32 0.0, %v2799
      %v2801 = vpop.f32.mrb[0].mxu0
      %v2802 = vpop.f32.mrb[0].mxu0
      %v2803 = vadd.f32 0.0, %v2802
      %v2804 = vpop.f32.mrb[0].mxu0
      %2805 = vmatprep.mubr.bf16.mxu0 0
      %2806 = vmatmul.mubr.bf16.gmra.mrb[0].mxu0 %v1407
      %v2807 = vpop.f32.mrb[0].mxu0
      %v2808 = vadd.f32 0.0, %v2807
      %v2809 = vpop.f32.mrb[0].mxu0
      %v2810 = vpop.f32.mrb[0].mxu0
      %v2811 = vadd.f32 0.0, %v2810
      %v2812 = vpop.f32.mrb[0].mxu0
      %2813 = vmatprep.mubr.bf16.mxu0 0
      %2814 = vmatmul.mubr.bf16.gmra.mrb[0].mxu0 %v1410
      %v2815 = vpop.f32.mrb[0].mxu0
      %v2816 = vadd.f32 0.0, %v2815
      %v2817 = vpop.f32.mrb[0].mxu0
      %v2818 = vpop.f32.mrb[0].mxu0
      %v2819 = vadd.f32 0.0, %v2818
      %v2820 = vpop.f32.mrb[0].mxu0
      %2821 = vmatprep.mubr.bf16.mxu0 0
      %2822 = vmatmul.mubr.bf16.gmra.mrb[0].mxu0 %v1413
      %v2823 = vpop.f32.mrb[0].mxu0
      %v2824 = vadd.f32 0.0, %v2823
      %v2825 = vpop.f32.mrb[0].mxu0
      %v2826 = vpop.f32.mrb[0].mxu0
      %v2827 = vadd.f32 0.0, %v2826
      %v2828 = vpop.f32.mrb[0].mxu0
      %2829 = vmatprep.mubr.bf16.mxu0 0
      %2830 = vmatmul.mubr.bf16.gmra.mrb[0].mxu0 %v1416
      %v2831 = vpop.f32.mrb[0].mxu0
      %v2832 = vadd.f32 0.0, %v2831
      %v2833 = vpop.f32.mrb[0].mxu0
      %v2834 = vpop.f32.mrb[0].mxu0
      %v2835 = vadd.f32 0.0, %v2834
      %v2836 = vpop.f32.mrb[0].mxu0
      %2837 = vmatprep.mubr.bf16.mxu0 0
      %2838 = vmatmul.mubr.bf16.gmra.mrb[0].mxu0 %v1419
      %v2839 = vpop.f32.mrb[0].mxu0
      %v2840 = vadd.f32 0.0, %v2839
      %v2841 = vpop.f32.mrb[0].mxu0
      %v2842 = vpop.f32.mrb[0].mxu0
      %v2843 = vadd.f32 0.0, %v2842
      %v2844 = vpop.f32.mrb[0].mxu0
      %2845 = vmatprep.mubr.bf16.mxu0 0
      %2846 = vmatmul.mubr.bf16.gmra.mrb[0].mxu0 %v1422
      %v2847 = vpop.f32.mrb[0].mxu0
      %v2848 = vadd.f32 0.0, %v2847
      %v2849 = vpop.f32.mrb[0].mxu0
      %v2850 = vpop.f32.mrb[0].mxu0
      %v2851 = vadd.f32 0.0, %v2850
      %v2852 = vpop.f32.mrb[0].mxu0
      %2853 = vmatprep.mubr.bf16.mxu0 0
      %2854 = vmatmul.mubr.bf16.gmra.mrb[0].mxu0 %v1425
      %v2855 = vpop.f32.mrb[0].mxu0
      %v2856 = vadd.f32 0.0, %v2855
      %v2857 = vpop.f32.mrb[0].mxu0
      %v2858 = vpop.f32.mrb[0].mxu0
      %v2859 = vadd.f32 0.0, %v2858
      %v2860 = vpop.f32.mrb[0].mxu0
      %2861 = vmatprep.mubr.bf16.mxu0 0
      %2862 = vmatmul.mubr.bf16.gmra.mrb[0].mxu0 %v1428
      %v2863 = vpop.f32.mrb[0].mxu0
      %v2864 = vadd.f32 0.0, %v2863
      %v2865 = vpop.f32.mrb[0].mxu0
      %v2866 = vpop.f32.mrb[0].mxu0
      %v2867 = vadd.f32 0.0, %v2866
      %v2868 = vpop.f32.mrb[0].mxu0
      %2869 = vmatprep.mubr.bf16.mxu0 0
      %2870 = vmatmul.mubr.bf16.gmra.mrb[0].mxu0 %v2074
      %v2871 = vpop.f32.mrb[0].mxu0
      %v2872 = vadd.f32 0.0, %v2871
      %v2873 = vpop.f32.mrb[0].mxu0
      %v2874 = vpop.f32.mrb[0].mxu0
      %v2875 = vadd.f32 0.0, %v2874
      %v2876 = vpop.f32.mrb[0].mxu0
      %2877 = vmatprep.mubr.bf16.mxu0 0
      %2878 = vmatmul.mubr.bf16.gmra.mrb[0].mxu0 %v2720
      %v2879 = vpop.f32.mrb[0].mxu0
      %v2880 = vadd.f32 0.0, %v2879
      %v2881 = vpop.f32.mrb[0].mxu0
      %v2882 = vpop.f32.mrb[0].mxu0
      %v2883 = vadd.f32 0.0, %v2882
      %v2884 = vpop.f32.mrb[0].mxu0
      %2885 = vdwg.mxu0
      %v2886 = vadd.f32 %v2674, %v2760
      %v2887 = vadd.f32 %v2675, %v2763
      %v2888 = vadd.f32 %v2676, %v2768
      %v2889 = vadd.f32 %v2677, %v2771
      %v2890 = vadd.f32 %v2678, %v2776
      %v2891 = vadd.f32 %v2679, %v2779
      %v2892 = vadd.f32 %v2680, %v2784
      %v2893 = vadd.f32 %v2681, %v2787
      %v2894 = vadd.f32 %v2682, %v2792
      %v2895 = vadd.f32 %v2683, %v2795
      %v2896 = vadd.f32 %v2684, %v2800
      %v2897 = vadd.f32 %v2685, %v2803
      %v2898 = vadd.f32 %v2686, %v2808
      %v2899 = vadd.f32 %v2687, %v2811
      %v2900 = vadd.f32 %v2688, %v2816
      %v2901 = vadd.f32 %v2689, %v2819
      %v2902 = vadd.f32 %v2690, %v2824
      %v2903 = vadd.f32 %v2691, %v2827
      %v2904 = vadd.f32 %v2692, %v2832
      %v2905 = vadd.f32 %v2693, %v2835
      %v2906 = vadd.f32 %v2694, %v2840
      %v2907 = vadd.f32 %v2695, %v2843
      %v2908 = vadd.f32 %v2696, %v2848
      %v2909 = vadd.f32 %v2697, %v2851
      %v2910 = vadd.f32 %v2698, %v2856
      %v2911 = vadd.f32 %v2699, %v2859
      %v2912 = vadd.f32 %v2700, %v2864
      %v2913 = vadd.f32 %v2701, %v2867
      %v2914 = vadd.f32 %v2702, %v2872
      %v2915 = vadd.f32 %v2703, %v2875
      %v2916 = vadd.f32 %v2704, %v2880
      %v2917 = vadd.f32 %v2705, %v2883
      %v2918 = vld [vmem:[%s191] sm:$0x1]
      %vm2919 = vcmask 64512
      %v2920 = vsel %vm2919, %v2886, 0.0
      %v2921 = vsel %vm2919, %v2887, 0.0
      %v2922 = vadd.f32 %v2920, %v2921
      %v2923 = vsel %vm2919, %v2888, 0.0
      %v2924 = vadd.f32 %v2922, %v2923
      %v2925 = vsel %vm2919, %v2889, 0.0
      %v2926 = vadd.f32 %v2924, %v2925
      %v2927 = vsel %vm2919, %v2890, 0.0
      %v2928 = vadd.f32 %v2926, %v2927
      %v2929 = vsel %vm2919, %v2891, 0.0
      %v2930 = vadd.f32 %v2928, %v2929
      %v2931 = vsel %vm2919, %v2892, 0.0
      %v2932 = vadd.f32 %v2930, %v2931
      %v2933 = vsel %vm2919, %v2893, 0.0
      %v2934 = vadd.f32 %v2932, %v2933
      %v2935 = vsel %vm2919, %v2894, 0.0
      %v2936 = vadd.f32 %v2934, %v2935
      %v2937 = vsel %vm2919, %v2895, 0.0
      %v2938 = vadd.f32 %v2936, %v2937
      %v2939 = vsel %vm2919, %v2896, 0.0
      %v2940 = vadd.f32 %v2938, %v2939
      %v2941 = vsel %vm2919, %v2897, 0.0
      %v2942 = vadd.f32 %v2940, %v2941
      %v2943 = vsel %vm2919, %v2898, 0.0
      %v2944 = vadd.f32 %v2942, %v2943
      %v2945 = vsel %vm2919, %v2899, 0.0
      %v2946 = vadd.f32 %v2944, %v2945
      %v2947 = vsel %vm2919, %v2900, 0.0
      %v2948 = vadd.f32 %v2946, %v2947
      %v2949 = vsel %vm2919, %v2901, 0.0
      %v2950 = vadd.f32 %v2948, %v2949
      %v2951 = vsel %vm2919, %v2902, 0.0
      %v2952 = vadd.f32 %v2950, %v2951
      %v2953 = vsel %vm2919, %v2903, 0.0
      %v2954 = vadd.f32 %v2952, %v2953
      %v2955 = vsel %vm2919, %v2904, 0.0
      %v2956 = vadd.f32 %v2954, %v2955
      %v2957 = vsel %vm2919, %v2905, 0.0
      %v2958 = vadd.f32 %v2956, %v2957
      %v2959 = vsel %vm2919, %v2906, 0.0
      %v2960 = vadd.f32 %v2958, %v2959
      %v2961 = vsel %vm2919, %v2907, 0.0
      %v2962 = vadd.f32 %v2960, %v2961
      %v2963 = vsel %vm2919, %v2908, 0.0
      %v2964 = vadd.f32 %v2962, %v2963
      %v2965 = vsel %vm2919, %v2909, 0.0
      %v2966 = vadd.f32 %v2964, %v2965
      %v2967 = vsel %vm2919, %v2910, 0.0
      %v2968 = vadd.f32 %v2966, %v2967
      %v2969 = vsel %vm2919, %v2911, 0.0
      %v2970 = vadd.f32 %v2968, %v2969
      %v2971 = vsel %vm2919, %v2912, 0.0
      %v2972 = vadd.f32 %v2970, %v2971
      %v2973 = vsel %vm2919, %v2913, 0.0
      %v2974 = vadd.f32 %v2972, %v2973
      %v2975 = vsel %vm2919, %v2914, 0.0
      %v2976 = vadd.f32 %v2974, %v2975
      %v2977 = vsel %vm2919, %v2915, 0.0
      %v2978 = vadd.f32 %v2976, %v2977
      %v2979 = vsel %vm2919, %v2916, 0.0
      %v2980 = vadd.f32 %v2978, %v2979
      %v2981 = vsel %vm2919, %v2917, 0.0
      %v2982 = vadd.f32 %v2980, %v2981
      %v2983 = vrot.slane %v2982, 4
      %v2984 = vadd.f32 %v2982, %v2983
      %v2985 = vrot.slane %v2984, 2
      %v2986 = vadd.f32 %v2984, %v2985
      %v2987 = vrot.slane %v2986, 1
      %v2988 = vadd.f32 %v2986, %v2987
      %v2989 = vadd.f32 %v2918, %v2988
      %vm2990 = vcmask 57344
      %2991 = vst.msk [vmem:[%s191] sm:$0x1] %vm2990, %v2989
      %v2992 = vld [vmem:[%s194] sm:$0x1]
      %v2993 = vmul.f32 %v2886, %v2886
      %v2994 = vmul.f32 %v2887, %v2887
      %v2995 = vmul.f32 %v2888, %v2888
      %v2996 = vmul.f32 %v2889, %v2889
      %v2997 = vmul.f32 %v2890, %v2890
      %v2998 = vmul.f32 %v2891, %v2891
      %v2999 = vmul.f32 %v2892, %v2892
      %v3000 = vmul.f32 %v2893, %v2893
      %v3001 = vmul.f32 %v2894, %v2894
      %v3002 = vmul.f32 %v2895, %v2895
      %v3003 = vmul.f32 %v2896, %v2896
      %v3004 = vmul.f32 %v2897, %v2897
      %v3005 = vmul.f32 %v2898, %v2898
      %v3006 = vmul.f32 %v2899, %v2899
      %v3007 = vmul.f32 %v2900, %v2900
      %v3008 = vmul.f32 %v2901, %v2901
      %v3009 = vmul.f32 %v2902, %v2902
      %v3010 = vmul.f32 %v2903, %v2903
      %v3011 = vmul.f32 %v2904, %v2904
      %v3012 = vmul.f32 %v2905, %v2905
      %v3013 = vmul.f32 %v2906, %v2906
      %v3014 = vmul.f32 %v2907, %v2907
      %v3015 = vmul.f32 %v2908, %v2908
      %v3016 = vmul.f32 %v2909, %v2909
      %v3017 = vmul.f32 %v2910, %v2910
      %v3018 = vmul.f32 %v2911, %v2911
      %v3019 = vmul.f32 %v2912, %v2912
      %v3020 = vmul.f32 %v2913, %v2913
      %v3021 = vmul.f32 %v2914, %v2914
      %v3022 = vmul.f32 %v2915, %v2915
      %v3023 = vmul.f32 %v2916, %v2916
      %v3024 = vmul.f32 %v2917, %v2917
      %v3025 = vsel %vm2919, %v2993, 0.0
      %v3026 = vsel %vm2919, %v2994, 0.0
      %v3027 = vadd.f32 %v3025, %v3026
      %v3028 = vsel %vm2919, %v2995, 0.0
      %v3029 = vadd.f32 %v3027, %v3028
      %v3030 = vsel %vm2919, %v2996, 0.0
      %v3031 = vadd.f32 %v3029, %v3030
      %v3032 = vsel %vm2919, %v2997, 0.0
      %v3033 = vadd.f32 %v3031, %v3032
      %v3034 = vsel %vm2919, %v2998, 0.0
      %v3035 = vadd.f32 %v3033, %v3034
      %v3036 = vsel %vm2919, %v2999, 0.0
      %v3037 = vadd.f32 %v3035, %v3036
      %v3038 = vsel %vm2919, %v3000, 0.0
      %v3039 = vadd.f32 %v3037, %v3038
      %v3040 = vsel %vm2919, %v3001, 0.0
      %v3041 = vadd.f32 %v3039, %v3040
      %v3042 = vsel %vm2919, %v3002, 0.0
      %v3043 = vadd.f32 %v3041, %v3042
      %v3044 = vsel %vm2919, %v3003, 0.0
      %v3045 = vadd.f32 %v3043, %v3044
      %v3046 = vsel %vm2919, %v3004, 0.0
      %v3047 = vadd.f32 %v3045, %v3046
      %v3048 = vsel %vm2919, %v3005, 0.0
      %v3049 = vadd.f32 %v3047, %v3048
      %v3050 = vsel %vm2919, %v3006, 0.0
      %v3051 = vadd.f32 %v3049, %v3050
      %v3052 = vsel %vm2919, %v3007, 0.0
      %v3053 = vadd.f32 %v3051, %v3052
      %v3054 = vsel %vm2919, %v3008, 0.0
      %v3055 = vadd.f32 %v3053, %v3054
      %v3056 = vsel %vm2919, %v3009, 0.0
      %v3057 = vadd.f32 %v3055, %v3056
      %v3058 = vsel %vm2919, %v3010, 0.0
      %v3059 = vadd.f32 %v3057, %v3058
      %v3060 = vsel %vm2919, %v3011, 0.0
      %v3061 = vadd.f32 %v3059, %v3060
      %v3062 = vsel %vm2919, %v3012, 0.0
      %v3063 = vadd.f32 %v3061, %v3062
      %v3064 = vsel %vm2919, %v3013, 0.0
      %v3065 = vadd.f32 %v3063, %v3064
      %v3066 = vsel %vm2919, %v3014, 0.0
      %v3067 = vadd.f32 %v3065, %v3066
      %v3068 = vsel %vm2919, %v3015, 0.0
      %v3069 = vadd.f32 %v3067, %v3068
      %v3070 = vsel %vm2919, %v3016, 0.0
      %v3071 = vadd.f32 %v3069, %v3070
      %v3072 = vsel %vm2919, %v3017, 0.0
      %v3073 = vadd.f32 %v3071, %v3072
      %v3074 = vsel %vm2919, %v3018, 0.0
      %v3075 = vadd.f32 %v3073, %v3074
      %v3076 = vsel %vm2919, %v3019, 0.0
      %v3077 = vadd.f32 %v3075, %v3076
      %v3078 = vsel %vm2919, %v3020, 0.0
      %v3079 = vadd.f32 %v3077, %v3078
      %v3080 = vsel %vm2919, %v3021, 0.0
      %v3081 = vadd.f32 %v3079, %v3080
      %v3082 = vsel %vm2919, %v3022, 0.0
      %v3083 = vadd.f32 %v3081, %v3082
      %v3084 = vsel %vm2919, %v3023, 0.0
      %v3085 = vadd.f32 %v3083, %v3084
      %v3086 = vsel %vm2919, %v3024, 0.0
      %v3087 = vadd.f32 %v3085, %v3086
      %v3088 = vrot.slane %v3087, 4
      %v3089 = vadd.f32 %v3087, %v3088
      %v3090 = vrot.slane %v3089, 2
      %v3091 = vadd.f32 %v3089, %v3090
      %v3092 = vrot.slane %v3091, 1
      %v3093 = vadd.f32 %v3091, %v3092
      %v3094 = vadd.f32 %v2992, %v3093
      %3095 = vst.msk [vmem:[%s194] sm:$0x1] %vm2990, %v3094
      %p3096 = scmp.lt.s32.totalorder %s19, 1
      %s3097 = scalar_select %p3096, %s19, 1
      %s3098 = scalar_lea.vmem %s2, %s3097
      %p3099 = scmp.lt.s32.totalorder %s19, 1
      %s3100 = scalar_select %p3099, %s19, 1
      %s3101 = scalar_lea.vmem %s3, %s3100
      // Predicated region
      $region33: #{cnn_block_forward.2} parent=27 // pred_check
        %p3102 = pneg %p94
      $region34: #{cnn_block_forward.2} parent=27 // pred_check_branch
        %3104 = sbr.rel (%p3102) target = $region36
      $region35: #{cnn_block_forward.2} parent=27 // pred_region
        _
      $region36: #{cnn_block_forward.2} parent=27 // pred_fallthru
        _
      // Predicated region
      $region37: #{cnn_block_forward.2} parent=27 // pred_check
        %p3105 = pneg %p120
      $region38: #{cnn_block_forward.2} parent=27 // pred_check_branch
        %3107 = sbr.rel (%p3105) target = $region40
      $region39: #{cnn_block_forward.2} parent=27 // pred_region
        _
      $region40: #{cnn_block_forward.2} parent=27 // pred_fallthru
        _
    $region28: #{cnn_block_forward.2} parent=5 // pred_fallthru
      _
    %p3108 = scmp.le.s32.totalorder 2, %s10
    // Predicated region
    $region41: #{cnn_block_forward.2} parent=5 // pred_check
      %p3109 = pneg %p3108
    $region42: #{cnn_block_forward.2} parent=5 // pred_check_branch
      %3111 = sbr.rel (%p3109) target = $region44
    $region43: #{cnn_block_forward.2} parent=5 // pred_region
      %s3112 = ssub.s32 %s10, 2
      // Predicated region
      $region45: #{cnn_block_forward.2} parent=43 // pred_check
        %p3113 = pneg %p100
      $region46: #{cnn_block_forward.2} parent=43 // pred_check_branch
        %3115 = sbr.rel (%p3113) target = $region48
      $region47: #{cnn_block_forward.2} parent=43 // pred_region
        %p3116 = scmp.lt.s32.totalorder %s21, 1
        %s3117 = scalar_select %p3116, %s21, 1
        %s3118 = scalar_lea.vmem %s2, %s3117
      $region48: #{cnn_block_forward.2} parent=43 // pred_fallthru
        _
      // Predicated region
      $region49: #{cnn_block_forward.2} parent=43 // pred_check
        %p3119 = pneg %p126
      $region50: #{cnn_block_forward.2} parent=43 // pred_check_branch
        %3121 = sbr.rel (%p3119) target = $region52
      $region51: #{cnn_block_forward.2} parent=43 // pred_region
        %p3122 = scmp.lt.s32.totalorder %s21, 1
        %s3123 = scalar_select %p3122, %s21, 1
        %s3124 = scalar_lea.vmem %s3, %s3123
      $region52: #{cnn_block_forward.2} parent=43 // pred_fallthru
        _
    $region44: #{cnn_block_forward.2} parent=5 // pred_fallthru
      _
  $region6: #{cnn_block_forward.2} parent=0 // loop_footer
    %s14 = sadd.s32 1, %s10
  $region7: #{cnn_block_forward.2} parent=0 // loop_footer_branch
    %9 = sbr.rel target = $region3
  $region8: #{cnn_block_forward.2} parent=0 // loop_exit
    _

// kernel: cnn_block_forward.3
$region0: #{cnn_block_forward.3}
  #allocation0 [shape = 'u32[]', space=smem, size = 0x4, offset = 0x4, fixed_abs, tag = 'smem constant byte address 0x4 - core index']
  #allocation1 [shape = 'u32[144,128]{1,0:T(1,128)}', space=vmem, size = 0x12000, scoped, tag = 'internal scratch']
  %s0 = inlined_call_operand.vmem [shape: bf16[2,18,18,4], index: 0, kind: input, shape index: {}]
  %s1 = inlined_call_operand.vmem [shape: bf16[9,4,8], index: 1, kind: input, shape index: {}]
  %s2 = inlined_call_operand.vmem [shape: f32[1,1,8], index: 2, kind: input, shape index: {}]
  %s3 = inlined_call_operand.vmem [shape: bf16[2,256,8], index: 3, kind: output, shape index: {}]
  %s4 = sld [smem:[#allocation0]]
  $region45: #{cnn_block_forward.3} parent=0
    _
  %s6 = ssub.s32 1, %s4
  %s7 = scalar_select 0, %s6, %s4
  loop: start=0, step=1, limit=4
  $region2: #{cnn_block_forward.3} parent=0 // loop_pre_header
    _
  $region3: #{cnn_block_forward.3} parent=0 // loop_header
    %s9 = sphi 0, %s13
    %p10 = scmp.ge.s32.totalorder %s9, 4
    %s16 = sphi 0, %s28
    %s17 = sphi 0, %s24
    %s18 = sphi 0, %s16
    %s19 = sphi 0, %s17
    %s20 = sphi 0, %s18
    %s21 = sphi 0, %s19
    %s33 = sphi 0, %s35
    %s36 = sphi 0, %s33
    %s37 = sphi 0, %s36
    %s53 = sphi 0, %s37
    %s57 = sphi 0, %s57
    %s59 = sphi 0, %s57
    %s60 = sphi 0, %s59
    %s74 = sphi 0, %s60
    %s78 = sphi 0, %s78
    %s80 = sphi 0, %s78
    %s81 = sphi 0, %s80
    %s95 = sphi 0, %s81
    %s103 = sphi 0, %s105
    %s106 = sphi 0, %s103
    %s107 = sphi 0, %s106
    %s123 = sphi 0, %s107
  $region4: #{cnn_block_forward.3} parent=0 // loop_header_branch
    %12 = sbr.rel (%p10) target = $region8
  $region5: #{cnn_block_forward.3} parent=0 // loop_body
    %s14 = ssub.s32 %s9, 1
    %s15 = ssub.s32 %s9, 2
    %s22 = sadd.s32 1, %s17
    %p23 = scmp.ge.s32.totalorder %s22, 1
    %s24 = scalar_select %p23, 0, %s22
    %s25 = sadd.s32 1, %s16
    %s26 = scalar_select %p23, %s25, %s16
    %p27 = scmp.ge.s32.totalorder %s26, 2
    %s28 = scalar_select %p27, 0, %s26
    %s29 = sadd.s32 %s16, %s17
    %s30 = sadd.s32 %s28, %s24
    %s31 = ssub.s32 %s29, %s30
    %p32 = scmp.eq.s32.totalorder %s31, 0
    %s34 = sadd.s32 %s33, 1
    %s35 = scalar_select %p32, %s33, %s34
    %p38 = pneg %p32
    %p39 = scmp.eq.s32.totalorder %s9, 1
    %p40 = por %p38, %p39
    %p41 = scmp.ne.s32.totalorder %s33, %s36
    %p42 = scmp.eq.s32.totalorder %s9, 0
    %p43 = por %p41, %p42
    %p44 = scmp.ne.s32.totalorder %s33, %s36
    %p45 = scmp.eq.s32.totalorder %s14, 1
    %p46 = por %p44, %p45
    %p47 = scmp.ne.s32.totalorder %s36, %s37
    %p48 = scmp.eq.s32.totalorder %s14, 0
    %p49 = por %p47, %p48
    %p50 = scmp.ne.s32.totalorder %s36, %s37
    %p51 = scmp.eq.s32.totalorder %s15, 1
    %p52 = por %p50, %p51
    %p54 = scmp.ne.s32.totalorder %s37, %s53
    %p55 = scmp.eq.s32.totalorder %s15, 0
    %p56 = por %p54, %p55
    %s58 = sadd.s32 %s57, 1
    %p61 = scmp.eq.s32.totalorder %s9, 1
    %p62 = scmp.ne.s32.totalorder %s57, %s59
    %p63 = scmp.eq.s32.totalorder %s9, 0
    %p64 = por %p62, %p63
    %p65 = scmp.ne.s32.totalorder %s57, %s59
    %p66 = scmp.eq.s32.totalorder %s14, 1
    %p67 = por %p65, %p66
    %p68 = scmp.ne.s32.totalorder %s59, %s60
    %p69 = scmp.eq.s32.totalorder %s14, 0
    %p70 = por %p68, %p69
    %p71 = scmp.ne.s32.totalorder %s59, %s60
    %p72 = scmp.eq.s32.totalorder %s15, 1
    %p73 = por %p71, %p72
    %p75 = scmp.ne.s32.totalorder %s60, %s74
    %p76 = scmp.eq.s32.totalorder %s15, 0
    %p77 = por %p75, %p76
    %s79 = sadd.s32 %s78, 1
    %p82 = scmp.eq.s32.totalorder %s9, 1
    %p83 = scmp.ne.s32.totalorder %s78, %s80
    %p84 = scmp.eq.s32.totalorder %s9, 0
    %p85 = por %p83, %p84
    %p86 = scmp.ne.s32.totalorder %s78, %s80
    %p87 = scmp.eq.s32.totalorder %s14, 1
    %p88 = por %p86, %p87
    %p89 = scmp.ne.s32.totalorder %s80, %s81
    %p90 = scmp.eq.s32.totalorder %s14, 0
    %p91 = por %p89, %p90
    %p92 = scmp.ne.s32.totalorder %s80, %s81
    %p93 = scmp.eq.s32.totalorder %s15, 1
    %p94 = por %p92, %p93
    %p96 = scmp.ne.s32.totalorder %s81, %s95
    %p97 = scmp.eq.s32.totalorder %s15, 0
    %p98 = por %p96, %p97
    %s99 = sadd.s32 %s16, %s17
    %s100 = sadd.s32 %s28, %s24
    %s101 = ssub.s32 %s99, %s100
    %p102 = scmp.eq.s32.totalorder %s101, 0
    %s104 = sadd.s32 %s103, 1
    %s105 = scalar_select %p102, %s103, %s104
    %p108 = pneg %p102
    %p109 = scmp.eq.s32.totalorder %s9, 1
    %p110 = por %p108, %p109
    %p111 = scmp.ne.s32.totalorder %s103, %s106
    %p112 = scmp.eq.s32.totalorder %s9, 0
    %p113 = por %p111, %p112
    %p114 = scmp.ne.s32.totalorder %s103, %s106
    %p115 = scmp.eq.s32.totalorder %s14, 1
    %p116 = por %p114, %p115
    %p117 = scmp.ne.s32.totalorder %s106, %s107
    %p118 = scmp.eq.s32.totalorder %s14, 0
    %p119 = por %p117, %p118
    %p120 = scmp.ne.s32.totalorder %s106, %s107
    %p121 = scmp.eq.s32.totalorder %s15, 1
    %p122 = por %p120, %p121
    %p124 = scmp.ne.s32.totalorder %s107, %s123
    %p125 = scmp.eq.s32.totalorder %s15, 0
    %p126 = por %p124, %p125
    %p127 = scmp.le.s32.totalorder 1, %s9
    %p128 = scmp.lt.s32.totalorder %s9, 3
    %p129 = pnand %p127, %p128
    %p130 = pneg %p129
    // Predicated region
    $region9: #{cnn_block_forward.3} parent=5 // pred_check
      _
    $region10: #{cnn_block_forward.3} parent=5 // pred_check_branch
      %132 = sbr.rel (%p129) target = $region12
    $region11: #{cnn_block_forward.3} parent=5 // pred_region
      %s133 = ssub.s32 %s9, 1
      // Predicated region
      $region13: #{cnn_block_forward.3} parent=11 // pred_check
        %p134 = pneg %p70
      $region14: #{cnn_block_forward.3} parent=11 // pred_check_branch
        %136 = sbr.rel (%p134) target = $region16
      $region15: #{cnn_block_forward.3} parent=11 // pred_region
        _
      $region16: #{cnn_block_forward.3} parent=11 // pred_fallthru
        _
      // Predicated region
      $region17: #{cnn_block_forward.3} parent=11 // pred_check
        %p137 = pneg %p91
      $region18: #{cnn_block_forward.3} parent=11 // pred_check_branch
        %139 = sbr.rel (%p137) target = $region20
      $region19: #{cnn_block_forward.3} parent=11 // pred_region
        _
      $region20: #{cnn_block_forward.3} parent=11 // pred_fallthru
        _
    $region12: #{cnn_block_forward.3} parent=5 // pred_fallthru
      _
    %p140 = scmp.lt.s32.totalorder %s9, 2
    // Predicated region
    $region21: #{cnn_block_forward.3} parent=5 // pred_check
      %p141 = pneg %p140
    $region22: #{cnn_block_forward.3} parent=5 // pred_check_branch
      %143 = sbr.rel (%p141) target = $region24
    $region23: #{cnn_block_forward.3} parent=5 // pred_region
      // Predicated region
      $region25: #{cnn_block_forward.3} parent=23 // pred_check
        %p144 = pneg %p43
      $region26: #{cnn_block_forward.3} parent=23 // pred_check_branch
        %146 = sbr.rel (%p144) target = $region28
      $region27: #{cnn_block_forward.3} parent=23 // pred_region
        %s147 = sadd.s32 %s16, %s17
        %p148 = scmp.lt.s32.totalorder %s147, 1
        %s149 = scalar_select %p148, %s147, 1
        %s150 = smul.addr %s149, 54
        %s151 = smul.addr %s150, 4
        %s152 = scalar_lea.vmem %s0, %s151
        %s153 = sadd.s32 %s16, %s17
      $region28: #{cnn_block_forward.3} parent=23 // pred_fallthru
        _
    $region24: #{cnn_block_forward.3} parent=5 // pred_fallthru
      _
    %p154 = scmp.le.s32.totalorder 1, %s9
    %p155 = scmp.lt.s32.totalorder %s9, 3
    %p156 = pnand %p154, %p155
    %p157 = pneg %p156
    // Predicated region
    $region29: #{cnn_block_forward.3} parent=5 // pred_check
      _
    $region30: #{cnn_block_forward.3} parent=5 // pred_check_branch
      %159 = sbr.rel (%p156) target = $region32
    $region31: #{cnn_block_forward.3} parent=5 // pred_region
      %s160 = ssub.s32 %s9, 1
      %s161 = sadd.s32 %s18, %s19
      %p162 = scmp.lt.s32.totalorder %s161, 1
      %s163 = scalar_select %p162, %s161, 1
      %s164 = smul.addr %s163, 54
      %s165 = smul.addr %s164, 4
      %s166 = scalar_lea.vmem %s0, %s165
      %p167 = pneg %p49
      %p168 = pneg %p46
      %p169 = pneg %p70
      %p170 = pneg %p67
      %p171 = pneg %p91
      %p172 = pneg %p88
      %p173 = pneg %p119
      %p174 = pneg %p116
      %s175 = sadd.s32 %s18, %s19
      %p176 = scmp.lt.s32.totalorder %s175, 1
      %s177 = scalar_select %p176, %s175, 1
      %s178 = smul.addr %s177, 32
      %s179 = smul.addr %s178, 4
      %s180 = scalar_lea.vmem %s3, %s179
      %s181 = sadd.s32 %s18, %s19
      %p182 = scmp.lt.s32.totalorder %s181, 1
      %s183 = scalar_select %p182, %s181, 1
      %s184 = smul.addr %s183, 54
      %s185 = smul.addr %s184, 4
      %s186 = scalar_lea.vmem %s0, %s185
      %s187 = sadd.s32 %s18, %s19
      %s188 = sadd.s32 %s18, %s19
      %p189 = scmp.lt.s32.totalorder %s188, 1
      %s190 = scalar_select %p189, %s188, 1
      %s191 = smul.addr %s190, 32
      %s192 = smul.addr %s191, 4
      %s193 = scalar_lea.vmem %s3, %s192
      %s194 = sadd.s32 %s18, %s19
      %v196 = vld [vmem:[%s186] sm:$0xf]
      %v197 = vld [vmem:[%s186 + $0x4] sm:$0xf]
      %v198 = vld [vmem:[%s186 + $0x8] sm:$0x1]
      %v199 = vld [vmem:[%s186 + $0xc] sm:$0xf]
      %v200 = vld [vmem:[%s186 + $0x10] sm:$0xf]
      %v201 = vld [vmem:[%s186 + $0x14] sm:$0x1]
      %v202 = vld [vmem:[%s186 + $0x18] sm:$0xf]
      %v203 = vld [vmem:[%s186 + $0x1c] sm:$0xf]
      %v204 = vld [vmem:[%s186 + $0x20] sm:$0x1]
      %v205 = vld [vmem:[%s186 + $0x24] sm:$0xf]
      %v206 = vld [vmem:[%s186 + $0x28] sm:$0xf]
      %v207 = vld [vmem:[%s186 + $0x2c] sm:$0x1]
      %v208 = vld [vmem:[%s186 + $0x30] sm:$0xf]
      %v209 = vld [vmem:[%s186 + $0x34] sm:$0xf]
      %v210 = vld [vmem:[%s186 + $0x38] sm:$0x1]
      %v211 = vld [vmem:[%s186 + $0x3c] sm:$0xf]
      %v212 = vld [vmem:[%s186 + $0x40] sm:$0xf]
      %v213 = vld [vmem:[%s186 + $0x44] sm:$0x1]
      %v214 = vld [vmem:[%s186 + $0x48] sm:$0xf]
      %v215 = vld [vmem:[%s186 + $0x4c] sm:$0xf]
      %v216 = vld [vmem:[%s186 + $0x50] sm:$0x1]
      %v217 = vld [vmem:[%s186 + $0x54] sm:$0xf]
      %v218 = vld [vmem:[%s186 + $0x58] sm:$0xf]
      %v219 = vld [vmem:[%s186 + $0x5c] sm:$0x1]
      %v220 = vld [vmem:[%s186 + $0x60] sm:$0xf]
      %v221 = vld [vmem:[%s186 + $0x64] sm:$0xf]
      %v222 = vld [vmem:[%s186 + $0x68] sm:$0x1]
      %v223 = vld [vmem:[%s186 + $0x6c] sm:$0xf]
      %v224 = vld [vmem:[%s186 + $0x70] sm:$0xf]
      %v225 = vld [vmem:[%s186 + $0x74] sm:$0x1]
      %v226 = vld [vmem:[%s186 + $0x78] sm:$0xf]
      %v227 = vld [vmem:[%s186 + $0x7c] sm:$0xf]
      %v228 = vld [vmem:[%s186 + $0x80] sm:$0x1]
      %v229 = vld [vmem:[%s186 + $0x84] sm:$0xf]
      %v230 = vld [vmem:[%s186 + $0x88] sm:$0xf]
      %v231 = vld [vmem:[%s186 + $0x8c] sm:$0x1]
      %v232 = vld [vmem:[%s186 + $0x90] sm:$0xf]
      %v233 = vld [vmem:[%s186 + $0x94] sm:$0xf]
      %v234 = vld [vmem:[%s186 + $0x98] sm:$0x1]
      %v235 = vld [vmem:[%s186 + $0x9c] sm:$0xf]
      %v236 = vld [vmem:[%s186 + $0xa0] sm:$0xf]
      %v237 = vld [vmem:[%s186 + $0xa4] sm:$0x1]
      %v238 = vld [vmem:[%s186 + $0xa8] sm:$0xf]
      %v239 = vld [vmem:[%s186 + $0xac] sm:$0xf]
      %v240 = vld [vmem:[%s186 + $0xb0] sm:$0x1]
      %v241 = vld [vmem:[%s186 + $0xb4] sm:$0xf]
      %v242 = vld [vmem:[%s186 + $0xb8] sm:$0xf]
      %v243 = vld [vmem:[%s186 + $0xbc] sm:$0x1]
      %v244 = vld [vmem:[%s186 + $0xc0] sm:$0xf]
      %v245 = vld [vmem:[%s186 + $0xc4] sm:$0xf]
      %v246 = vld [vmem:[%s186 + $0xc8] sm:$0x1]
      %v247 = vld [vmem:[%s186 + $0xcc] sm:$0xf]
      %v248 = vld [vmem:[%s186 + $0xd0] sm:$0xf]
      %v249 = vld [vmem:[%s186 + $0xd4] sm:$0x1]
      %v250 = vld [vmem:[%s1] sm:$0x3]
      %vm251 = vsmask.f32 3328
      %vm252 = vsmask.f32 7440
      %vm253 = vmor %vm251, %vm252
      %v255 = vshrl.u32 %v196, 16
      %v257 = vrot.slane %v255, 4
      %v258 = vshll.u32 %v196, 16
      %v260 = vrot.slane %v258, 5
      %v261 = vor.u32 %v257, %v260
      %v262 = vrot.slane %v261, 4
      %v264 = vshll.u32 %v197, 16
      %v266 = vrot.slane %v264, 5
      %v267 = vsel %vm253, %v262, %v266
      %v268 = vshrl.u32 %v197, 16
      %v270 = vrot.slane %v268, 4
      %v271 = vor.u32 %v270, %v266
      %v272 = vrot.slane %v271, 4
      %v274 = vshll.u32 %v198, 16
      %v276 = vrot.slane %v274, 5
      %v277 = vsel %vm253, %v272, %v276
      %v279 = vshrl.u32 %v199, 16
      %v281 = vrot.slane %v279, 4
      %v282 = vshll.u32 %v199, 16
      %v284 = vrot.slane %v282, 5
      %v285 = vor.u32 %v281, %v284
      %v286 = vrot.slane %v285, 4
      %v288 = vshll.u32 %v200, 16
      %v290 = vrot.slane %v288, 5
      %v291 = vsel %vm253, %v286, %v290
      %v292 = vshrl.u32 %v200, 16
      %v294 = vrot.slane %v292, 4
      %v295 = vor.u32 %v294, %v290
      %v296 = vrot.slane %v295, 4
      %v298 = vshll.u32 %v201, 16
      %v300 = vrot.slane %v298, 5
      %v301 = vsel %vm253, %v296, %v300
      %v303 = vshrl.u32 %v202, 16
      %v305 = vrot.slane %v303, 4
      %v306 = vshll.u32 %v202, 16
      %v308 = vrot.slane %v306, 5
      %v309 = vor.u32 %v305, %v308
      %v310 = vrot.slane %v309, 4
      %v312 = vshll.u32 %v203, 16
      %v314 = vrot.slane %v312, 5
      %v315 = vsel %vm253, %v310, %v314
      %v316 = vshrl.u32 %v203, 16
      %v318 = vrot.slane %v316, 4
      %v319 = vor.u32 %v318, %v314
      %v320 = vrot.slane %v319, 4
      %v322 = vshll.u32 %v204, 16
      %v324 = vrot.slane %v322, 5
      %v325 = vsel %vm253, %v320, %v324
      %v327 = vshrl.u32 %v205, 16
      %v329 = vrot.slane %v327, 4
      %v330 = vshll.u32 %v205, 16
      %v332 = vrot.slane %v330, 5
      %v333 = vor.u32 %v329, %v332
      %v334 = vrot.slane %v333, 4
      %v336 = vshll.u32 %v206, 16
      %v338 = vrot.slane %v336, 5
      %v339 = vsel %vm253, %v334, %v338
      %v340 = vshrl.u32 %v206, 16
      %v342 = vrot.slane %v340, 4
      %v343 = vor.u32 %v342, %v338
      %v344 = vrot.slane %v343, 4
      %v346 = vshll.u32 %v207, 16
      %v348 = vrot.slane %v346, 5
      %v349 = vsel %vm253, %v344, %v348
      %v351 = vshrl.u32 %v208, 16
      %v353 = vrot.slane %v351, 4
      %v354 = vshll.u32 %v208, 16
      %v356 = vrot.slane %v354, 5
      %v357 = vor.u32 %v353, %v356
      %v358 = vrot.slane %v357, 4
      %v360 = vshll.u32 %v209, 16
      %v362 = vrot.slane %v360, 5
      %v363 = vsel %vm253, %v358, %v362
      %v364 = vshrl.u32 %v209, 16
      %v366 = vrot.slane %v364, 4
      %v367 = vor.u32 %v366, %v362
      %v368 = vrot.slane %v367, 4
      %v370 = vshll.u32 %v210, 16
      %v372 = vrot.slane %v370, 5
      %v373 = vsel %vm253, %v368, %v372
      %v375 = vshrl.u32 %v211, 16
      %v377 = vrot.slane %v375, 4
      %v378 = vshll.u32 %v211, 16
      %v380 = vrot.slane %v378, 5
      %v381 = vor.u32 %v377, %v380
      %v382 = vrot.slane %v381, 4
      %v384 = vshll.u32 %v212, 16
      %v386 = vrot.slane %v384, 5
      %v387 = vsel %vm253, %v382, %v386
      %v388 = vshrl.u32 %v212, 16
      %v390 = vrot.slane %v388, 4
      %v391 = vor.u32 %v390, %v386
      %v392 = vrot.slane %v391, 4
      %v394 = vshll.u32 %v213, 16
      %v396 = vrot.slane %v394, 5
      %v397 = vsel %vm253, %v392, %v396
      %v399 = vshrl.u32 %v214, 16
      %v401 = vrot.slane %v399, 4
      %v402 = vshll.u32 %v214, 16
      %v404 = vrot.slane %v402, 5
      %v405 = vor.u32 %v401, %v404
      %v406 = vrot.slane %v405, 4
      %v408 = vshll.u32 %v215, 16
      %v410 = vrot.slane %v408, 5
      %v411 = vsel %vm253, %v406, %v410
      %v412 = vshrl.u32 %v215, 16
      %v414 = vrot.slane %v412, 4
      %v415 = vor.u32 %v414, %v410
      %v416 = vrot.slane %v415, 4
      %v418 = vshll.u32 %v216, 16
      %v420 = vrot.slane %v418, 5
      %v421 = vsel %vm253, %v416, %v420
      %v423 = vshrl.u32 %v217, 16
      %v425 = vrot.slane %v423, 4
      %v426 = vshll.u32 %v217, 16
      %v428 = vrot.slane %v426, 5
      %v429 = vor.u32 %v425, %v428
      %v430 = vrot.slane %v429, 4
      %v432 = vshll.u32 %v218, 16
      %v434 = vrot.slane %v432, 5
      %v435 = vsel %vm253, %v430, %v434
      %v436 = vshrl.u32 %v218, 16
      %v438 = vrot.slane %v436, 4
      %v439 = vor.u32 %v438, %v434
      %v440 = vrot.slane %v439, 4
      %v442 = vshll.u32 %v219, 16
      %v444 = vrot.slane %v442, 5
      %v445 = vsel %vm253, %v440, %v444
      %v447 = vshrl.u32 %v220, 16
      %v449 = vrot.slane %v447, 4
      %v450 = vshll.u32 %v220, 16
      %v452 = vrot.slane %v450, 5
      %v453 = vor.u32 %v449, %v452
      %v454 = vrot.slane %v453, 4
      %v456 = vshll.u32 %v221, 16
      %v458 = vrot.slane %v456, 5
      %v459 = vsel %vm253, %v454, %v458
      %v460 = vshrl.u32 %v221, 16
      %v462 = vrot.slane %v460, 4
      %v463 = vor.u32 %v462, %v458
      %v464 = vrot.slane %v463, 4
      %v466 = vshll.u32 %v222, 16
      %v468 = vrot.slane %v466, 5
      %v469 = vsel %vm253, %v464, %v468
      %v471 = vshrl.u32 %v223, 16
      %v473 = vrot.slane %v471, 4
      %v474 = vshll.u32 %v223, 16
      %v476 = vrot.slane %v474, 5
      %v477 = vor.u32 %v473, %v476
      %v478 = vrot.slane %v477, 4
      %v480 = vshll.u32 %v224, 16
      %v482 = vrot.slane %v480, 5
      %v483 = vsel %vm253, %v478, %v482
      %v484 = vshrl.u32 %v224, 16
      %v486 = vrot.slane %v484, 4
      %v487 = vor.u32 %v486, %v482
      %v488 = vrot.slane %v487, 4
      %v490 = vshll.u32 %v225, 16
      %v492 = vrot.slane %v490, 5
      %v493 = vsel %vm253, %v488, %v492
      %v495 = vshrl.u32 %v226, 16
      %v497 = vrot.slane %v495, 4
      %v498 = vshll.u32 %v226, 16
      %v500 = vrot.slane %v498, 5
      %v501 = vor.u32 %v497, %v500
      %v502 = vrot.slane %v501, 4
      %v504 = vshll.u32 %v227, 16
      %v506 = vrot.slane %v504, 5
      %v507 = vsel %vm253, %v502, %v506
      %v508 = vshrl.u32 %v227, 16
      %v510 = vrot.slane %v508, 4
      %v511 = vor.u32 %v510, %v506
      %v512 = vrot.slane %v511, 4
      %v514 = vshll.u32 %v228, 16
      %v516 = vrot.slane %v514, 5
      %v517 = vsel %vm253, %v512, %v516
      %v519 = vshrl.u32 %v229, 16
      %v521 = vrot.slane %v519, 4
      %v522 = vshll.u32 %v229, 16
      %v524 = vrot.slane %v522, 5
      %v525 = vor.u32 %v521, %v524
      %v526 = vrot.slane %v525, 4
      %v528 = vshll.u32 %v230, 16
      %v530 = vrot.slane %v528, 5
      %v531 = vsel %vm253, %v526, %v530
      %v532 = vshrl.u32 %v230, 16
      %v534 = vrot.slane %v532, 4
      %v535 = vor.u32 %v534, %v530
      %v536 = vrot.slane %v535, 4
      %v538 = vshll.u32 %v231, 16
      %v540 = vrot.slane %v538, 5
      %v541 = vsel %vm253, %v536, %v540
      %v543 = vshrl.u32 %v232, 16
      %v545 = vrot.slane %v543, 4
      %v546 = vshll.u32 %v232, 16
      %v548 = vrot.slane %v546, 5
      %v549 = vor.u32 %v545, %v548
      %v550 = vrot.slane %v549, 4
      %v552 = vshll.u32 %v233, 16
      %v554 = vrot.slane %v552, 5
      %v555 = vsel %vm253, %v550, %v554
      %v556 = vshrl.u32 %v233, 16
      %v558 = vrot.slane %v556, 4
      %v559 = vor.u32 %v558, %v554
      %v560 = vrot.slane %v559, 4
      %v562 = vshll.u32 %v234, 16
      %v564 = vrot.slane %v562, 5
      %v565 = vsel %vm253, %v560, %v564
      %v567 = vshrl.u32 %v235, 16
      %v569 = vrot.slane %v567, 4
      %v570 = vshll.u32 %v235, 16
      %v572 = vrot.slane %v570, 5
      %v573 = vor.u32 %v569, %v572
      %v574 = vrot.slane %v573, 4
      %v576 = vshll.u32 %v236, 16
      %v578 = vrot.slane %v576, 5
      %v579 = vsel %vm253, %v574, %v578
      %v580 = vshrl.u32 %v236, 16
      %v582 = vrot.slane %v580, 4
      %v583 = vor.u32 %v582, %v578
      %v584 = vrot.slane %v583, 4
      %v586 = vshll.u32 %v237, 16
      %v588 = vrot.slane %v586, 5
      %v589 = vsel %vm253, %v584, %v588
      %v591 = vshrl.u32 %v238, 16
      %v593 = vrot.slane %v591, 4
      %v594 = vshll.u32 %v238, 16
      %v596 = vrot.slane %v594, 5
      %v597 = vor.u32 %v593, %v596
      %v598 = vrot.slane %v597, 4
      %v600 = vshll.u32 %v239, 16
      %v602 = vrot.slane %v600, 5
      %v603 = vsel %vm253, %v598, %v602
      %v604 = vshrl.u32 %v239, 16
      %v606 = vrot.slane %v604, 4
      %v607 = vor.u32 %v606, %v602
      %v608 = vrot.slane %v607, 4
      %v610 = vshll.u32 %v240, 16
      %v612 = vrot.slane %v610, 5
      %v613 = vsel %vm253, %v608, %v612
      %v615 = vshrl.u32 %v241, 16
      %v617 = vrot.slane %v615, 4
      %v618 = vshll.u32 %v241, 16
      %v620 = vrot.slane %v618, 5
      %v621 = vor.u32 %v617, %v620
      %v622 = vrot.slane %v621, 4
      %v624 = vshll.u32 %v242, 16
      %v626 = vrot.slane %v624, 5
      %v627 = vsel %vm253, %v622, %v626
      %v628 = vshrl.u32 %v242, 16
      %v630 = vrot.slane %v628, 4
      %v631 = vor.u32 %v630, %v626
      %v632 = vrot.slane %v631, 4
      %v634 = vshll.u32 %v243, 16
      %v636 = vrot.slane %v634, 5
      %v637 = vsel %vm253, %v632, %v636
      %s638 = scalar_lea.vmem %s1, 2
      %v639 = vld [vmem:[%s638] sm:$0x3]
      %v640 = vunpack.c.l.b16 %v267
      %v641 = vunpack.c.l.b16 %v277
      %v642 = vunpack.c.l.b16 %v291
      %v643 = vunpack.c.l.b16 %v301
      %v644 = vunpack.c.l.b16 %v315
      %v645 = vunpack.c.l.b16 %v325
      %v646 = vunpack.c.l.b16 %v339
      %v647 = vunpack.c.l.b16 %v349
      %v648 = vunpack.c.l.b16 %v363
      %v649 = vunpack.c.l.b16 %v373
      %v650 = vunpack.c.l.b16 %v387
      %v651 = vunpack.c.l.b16 %v397
      %v652 = vunpack.c.l.b16 %v411
      %v653 = vunpack.c.l.b16 %v421
      %v654 = vunpack.c.l.b16 %v435
      %v655 = vunpack.c.l.b16 %v445
      %v656 = vunpack.c.l.b16 %v459
      %v657 = vunpack.c.l.b16 %v469
      %v658 = vunpack.c.l.b16 %v483
      %v659 = vunpack.c.l.b16 %v493
      %v660 = vunpack.c.l.b16 %v507
      %v661 = vunpack.c.l.b16 %v517
      %v662 = vunpack.c.l.b16 %v531
      %v663 = vunpack.c.l.b16 %v541
      %v664 = vunpack.c.l.b16 %v555
      %v665 = vunpack.c.l.b16 %v565
      %v666 = vunpack.c.l.b16 %v579
      %v667 = vunpack.c.l.b16 %v589
      %v668 = vunpack.c.l.b16 %v603
      %v669 = vunpack.c.l.b16 %v613
      %v670 = vunpack.c.l.b16 %v627
      %v671 = vunpack.c.l.b16 %v637
      %v672 = vpack.c.b16 %v641, %v640
      %v673 = vpack.c.b16 %v643, %v642
      %v674 = vpack.c.b16 %v645, %v644
      %v675 = vpack.c.b16 %v647, %v646
      %v676 = vpack.c.b16 %v649, %v648
      %v677 = vpack.c.b16 %v651, %v650
      %v678 = vpack.c.b16 %v653, %v652
      %v679 = vpack.c.b16 %v655, %v654
      %v680 = vpack.c.b16 %v657, %v656
      %v681 = vpack.c.b16 %v659, %v658
      %v682 = vpack.c.b16 %v661, %v660
      %v683 = vpack.c.b16 %v663, %v662
      %v684 = vpack.c.b16 %v665, %v664
      %v685 = vpack.c.b16 %v667, %v666
      %v686 = vpack.c.b16 %v669, %v668
      %v687 = vpack.c.b16 %v671, %v670
      %vm688 = vcmask 31744
      %v690 = vsel %vm688, %v672, 0
      %v693 = vsel %vm688, %v673, 0
      %v696 = vsel %vm688, %v674, 0
      %v699 = vsel %vm688, %v675, 0
      %v702 = vsel %vm688, %v676, 0
      %v705 = vsel %vm688, %v677, 0
      %v708 = vsel %vm688, %v678, 0
      %v711 = vsel %vm688, %v679, 0
      %v714 = vsel %vm688, %v680, 0
      %v717 = vsel %vm688, %v681, 0
      %v720 = vsel %vm688, %v682, 0
      %v723 = vsel %vm688, %v683, 0
      %v726 = vsel %vm688, %v684, 0
      %v729 = vsel %vm688, %v685, 0
      %v732 = vsel %vm688, %v686, 0
      %v735 = vsel %vm688, %v687, 0
      %vm737 = vcmask 1041408
      %v739 = vsel %vm737, %v639, 0
      %741 = vmatprep.subr.bf16.mxu0 0
      %742 = vmatpush1.bf16.msra.mxu0 %v739
      %743 = vmatprep.subr.bf16.mxu0 0
      %744 = vmatpush1.bf16.msra.mxu0 0
      %745 = vmatprep.subr.bf16.mxu0 0
      %746 = vmatpush1.bf16.msra.mxu0 0
      %747 = vmatprep.subr.bf16.mxu0 0
      %748 = vmatpush1.bf16.msra.mxu0 0
      %749 = vmatprep.subr.bf16.mxu0 0
      %750 = vmatpush1.bf16.msra.mxu0 0
      %751 = vmatprep.subr.bf16.mxu0 0
      %752 = vmatpush1.bf16.msra.mxu0 0
      %753 = vmatprep.subr.bf16.mxu0 0
      %754 = vmatpush1.bf16.msra.mxu0 0
      %755 = vmatprep.subr.bf16.mxu0 0
      %756 = vmatpush1.bf16.msra.mxu0 0
      %757 = vmatprep.subr.bf16.mxu0 0
      %758 = vmatpush1.bf16.msra.mxu0 0
      %759 = vmatprep.subr.bf16.mxu0 0
      %760 = vmatpush1.bf16.msra.mxu0 0
      %761 = vmatprep.subr.bf16.mxu0 0
      %762 = vmatpush1.bf16.msra.mxu0 0
      %763 = vmatprep.subr.bf16.mxu0 0
      %764 = vmatpush1.bf16.msra.mxu0 0
      %765 = vmatprep.subr.bf16.mxu0 0
      %766 = vmatpush1.bf16.msra.mxu0 0
      %767 = vmatprep.subr.bf16.mxu0 0
      %768 = vmatpush1.bf16.msra.mxu0 0
      %769 = vmatprep.subr.bf16.mxu0 0
      %770 = vmatpush1.bf16.msra.mxu0 0
      %771 = vmatprep.subr.bf16.mxu0 0
      %772 = vmatpush1.bf16.msra.mxu0 0
      %773 = vmatprep.mubr.bf16.mxu0 0
      %774 = vmatmul.mubr.bf16.gmra.mrb[0].mxu0 %v690
      %v775 = vpop.f32.mrb[0].mxu0
      %v776 = vadd.f32 0.0, %v775
      %v777 = vpop.f32.mrb[0].mxu0
      %v778 = vpop.f32.mrb[0].mxu0
      %v779 = vadd.f32 0.0, %v778
      %v780 = vpop.f32.mrb[0].mxu0
      %781 = vmatprep.mubr.bf16.mxu0 0
      %782 = vmatmul.mubr.bf16.gmra.mrb[0].mxu0 %v693
      %v783 = vpop.f32.mrb[0].mxu0
      %v784 = vadd.f32 0.0, %v783
      %v785 = vpop.f32.mrb[0].mxu0
      %v786 = vpop.f32.mrb[0].mxu0
      %v787 = vadd.f32 0.0, %v786
      %v788 = vpop.f32.mrb[0].mxu0
      %789 = vmatprep.mubr.bf16.mxu0 0
      %790 = vmatmul.mubr.bf16.gmra.mrb[0].mxu0 %v696
      %v791 = vpop.f32.mrb[0].mxu0
      %v792 = vadd.f32 0.0, %v791
      %v793 = vpop.f32.mrb[0].mxu0
      %v794 = vpop.f32.mrb[0].mxu0
      %v795 = vadd.f32 0.0, %v794
      %v796 = vpop.f32.mrb[0].mxu0
      %797 = vmatprep.mubr.bf16.mxu0 0
      %798 = vmatmul.mubr.bf16.gmra.mrb[0].mxu0 %v699
      %v799 = vpop.f32.mrb[0].mxu0
      %v800 = vadd.f32 0.0, %v799
      %v801 = vpop.f32.mrb[0].mxu0
      %v802 = vpop.f32.mrb[0].mxu0
      %v803 = vadd.f32 0.0, %v802
      %v804 = vpop.f32.mrb[0].mxu0
      %805 = vmatprep.mubr.bf16.mxu0 0
      %806 = vmatmul.mubr.bf16.gmra.mrb[0].mxu0 %v702
      %v807 = vpop.f32.mrb[0].mxu0
      %v808 = vadd.f32 0.0, %v807
      %v809 = vpop.f32.mrb[0].mxu0
      %v810 = vpop.f32.mrb[0].mxu0
      %v811 = vadd.f32 0.0, %v810
      %v812 = vpop.f32.mrb[0].mxu0
      %813 = vmatprep.mubr.bf16.mxu0 0
      %814 = vmatmul.mubr.bf16.gmra.mrb[0].mxu0 %v705
      %v815 = vpop.f32.mrb[0].mxu0
      %v816 = vadd.f32 0.0, %v815
      %v817 = vpop.f32.mrb[0].mxu0
      %v818 = vpop.f32.mrb[0].mxu0
      %v819 = vadd.f32 0.0, %v818
      %v820 = vpop.f32.mrb[0].mxu0
      %821 = vmatprep.mubr.bf16.mxu0 0
      %822 = vmatmul.mubr.bf16.gmra.mrb[0].mxu0 %v708
      %v823 = vpop.f32.mrb[0].mxu0
      %v824 = vadd.f32 0.0, %v823
      %v825 = vpop.f32.mrb[0].mxu0
      %v826 = vpop.f32.mrb[0].mxu0
      %v827 = vadd.f32 0.0, %v826
      %v828 = vpop.f32.mrb[0].mxu0
      %829 = vmatprep.mubr.bf16.mxu0 0
      %830 = vmatmul.mubr.bf16.gmra.mrb[0].mxu0 %v711
      %v831 = vpop.f32.mrb[0].mxu0
      %v832 = vadd.f32 0.0, %v831
      %v833 = vpop.f32.mrb[0].mxu0
      %v834 = vpop.f32.mrb[0].mxu0
      %v835 = vadd.f32 0.0, %v834
      %v836 = vpop.f32.mrb[0].mxu0
      %837 = vmatprep.mubr.bf16.mxu0 0
      %838 = vmatmul.mubr.bf16.gmra.mrb[0].mxu0 %v714
      %v839 = vpop.f32.mrb[0].mxu0
      %v840 = vadd.f32 0.0, %v839
      %v841 = vpop.f32.mrb[0].mxu0
      %v842 = vpop.f32.mrb[0].mxu0
      %v843 = vadd.f32 0.0, %v842
      %v844 = vpop.f32.mrb[0].mxu0
      %845 = vmatprep.mubr.bf16.mxu0 0
      %846 = vmatmul.mubr.bf16.gmra.mrb[0].mxu0 %v717
      %v847 = vpop.f32.mrb[0].mxu0
      %v848 = vadd.f32 0.0, %v847
      %v849 = vpop.f32.mrb[0].mxu0
      %v850 = vpop.f32.mrb[0].mxu0
      %v851 = vadd.f32 0.0, %v850
      %v852 = vpop.f32.mrb[0].mxu0
      %853 = vmatprep.mubr.bf16.mxu0 0
      %854 = vmatmul.mubr.bf16.gmra.mrb[0].mxu0 %v720
      %v855 = vpop.f32.mrb[0].mxu0
      %v856 = vadd.f32 0.0, %v855
      %v857 = vpop.f32.mrb[0].mxu0
      %v858 = vpop.f32.mrb[0].mxu0
      %v859 = vadd.f32 0.0, %v858
      %v860 = vpop.f32.mrb[0].mxu0
      %861 = vmatprep.mubr.bf16.mxu0 0
      %862 = vmatmul.mubr.bf16.gmra.mrb[0].mxu0 %v723
      %v863 = vpop.f32.mrb[0].mxu0
      %v864 = vadd.f32 0.0, %v863
      %v865 = vpop.f32.mrb[0].mxu0
      %v866 = vpop.f32.mrb[0].mxu0
      %v867 = vadd.f32 0.0, %v866
      %v868 = vpop.f32.mrb[0].mxu0
      %869 = vmatprep.mubr.bf16.mxu0 0
      %870 = vmatmul.mubr.bf16.gmra.mrb[0].mxu0 %v726
      %v871 = vpop.f32.mrb[0].mxu0
      %v872 = vadd.f32 0.0, %v871
      %v873 = vpop.f32.mrb[0].mxu0
      %v874 = vpop.f32.mrb[0].mxu0
      %v875 = vadd.f32 0.0, %v874
      %v876 = vpop.f32.mrb[0].mxu0
      %877 = vmatprep.mubr.bf16.mxu0 0
      %878 = vmatmul.mubr.bf16.gmra.mrb[0].mxu0 %v729
      %v879 = vpop.f32.mrb[0].mxu0
      %v880 = vadd.f32 0.0, %v879
      %v881 = vpop.f32.mrb[0].mxu0
      %v882 = vpop.f32.mrb[0].mxu0
      %v883 = vadd.f32 0.0, %v882
      %v884 = vpop.f32.mrb[0].mxu0
      %885 = vmatprep.mubr.bf16.mxu0 0
      %886 = vmatmul.mubr.bf16.gmra.mrb[0].mxu0 %v732
      %v887 = vpop.f32.mrb[0].mxu0
      %v888 = vadd.f32 0.0, %v887
      %v889 = vpop.f32.mrb[0].mxu0
      %v890 = vpop.f32.mrb[0].mxu0
      %v891 = vadd.f32 0.0, %v890
      %v892 = vpop.f32.mrb[0].mxu0
      %893 = vmatprep.mubr.bf16.mxu0 0
      %894 = vmatmul.mubr.bf16.gmra.mrb[0].mxu0 %v735
      %v895 = vpop.f32.mrb[0].mxu0
      %v896 = vadd.f32 0.0, %v895
      %v897 = vpop.f32.mrb[0].mxu0
      %v898 = vpop.f32.mrb[0].mxu0
      %v899 = vadd.f32 0.0, %v898
      %v900 = vpop.f32.mrb[0].mxu0
      %901 = vdwg.mxu0
      %v934 = vunpack.c.l.b16 %v196
      %v935 = vunpack.c.l.b16 %v197
      %v936 = vunpack.c.l.b16 %v199
      %v937 = vunpack.c.l.b16 %v200
      %v938 = vunpack.c.l.b16 %v202
      %v939 = vunpack.c.l.b16 %v203
      %v940 = vunpack.c.l.b16 %v205
      %v941 = vunpack.c.l.b16 %v206
      %v942 = vunpack.c.l.b16 %v208
      %v943 = vunpack.c.l.b16 %v209
      %v944 = vunpack.c.l.b16 %v211
      %v945 = vunpack.c.l.b16 %v212
      %v946 = vunpack.c.l.b16 %v214
      %v947 = vunpack.c.l.b16 %v215
      %v948 = vunpack.c.l.b16 %v217
      %v949 = vunpack.c.l.b16 %v218
      %v950 = vunpack.c.l.b16 %v220
      %v951 = vunpack.c.l.b16 %v221
      %v952 = vunpack.c.l.b16 %v223
      %v953 = vunpack.c.l.b16 %v224
      %v954 = vunpack.c.l.b16 %v226
      %v955 = vunpack.c.l.b16 %v227
      %v956 = vunpack.c.l.b16 %v229
      %v957 = vunpack.c.l.b16 %v230
      %v958 = vunpack.c.l.b16 %v232
      %v959 = vunpack.c.l.b16 %v233
      %v960 = vunpack.c.l.b16 %v235
      %v961 = vunpack.c.l.b16 %v236
      %v962 = vunpack.c.l.b16 %v238
      %v963 = vunpack.c.l.b16 %v239
      %v964 = vunpack.c.l.b16 %v241
      %v965 = vunpack.c.l.b16 %v242
      %v966 = vpack.c.b16 %v935, %v934
      %v967 = vpack.c.b16 %v937, %v936
      %v968 = vpack.c.b16 %v939, %v938
      %v969 = vpack.c.b16 %v941, %v940
      %v970 = vpack.c.b16 %v943, %v942
      %v971 = vpack.c.b16 %v945, %v944
      %v972 = vpack.c.b16 %v947, %v946
      %v973 = vpack.c.b16 %v949, %v948
      %v974 = vpack.c.b16 %v951, %v950
      %v975 = vpack.c.b16 %v953, %v952
      %v976 = vpack.c.b16 %v955, %v954
      %v977 = vpack.c.b16 %v957, %v956
      %v978 = vpack.c.b16 %v959, %v958
      %v979 = vpack.c.b16 %v961, %v960
      %v980 = vpack.c.b16 %v963, %v962
      %v981 = vpack.c.b16 %v965, %v964
      %v983 = vsel %vm688, %v966, 0
      %v986 = vsel %vm688, %v967, 0
      %v989 = vsel %vm688, %v968, 0
      %v992 = vsel %vm688, %v969, 0
      %v995 = vsel %vm688, %v970, 0
      %v998 = vsel %vm688, %v971, 0
      %v1001 = vsel %vm688, %v972, 0
      %v1004 = vsel %vm688, %v973, 0
      %v1007 = vsel %vm688, %v974, 0
      %v1010 = vsel %vm688, %v975, 0
      %v1013 = vsel %vm688, %v976, 0
      %v1016 = vsel %vm688, %v977, 0
      %v1019 = vsel %vm688, %v978, 0
      %v1022 = vsel %vm688, %v979, 0
      %v1025 = vsel %vm688, %v980, 0
      %v1028 = vsel %vm688, %v981, 0
      %v1031 = vsel %vm737, %v250, 0
      %1033 = vmatprep.subr.bf16.mxu0 0
      %1034 = vmatpush1.bf16.msra.mxu0 %v1031
      %1035 = vmatprep.subr.bf16.mxu0 0
      %1036 = vmatpush1.bf16.msra.mxu0 0
      %1037 = vmatprep.subr.bf16.mxu0 0
      %1038 = vmatpush1.bf16.msra.mxu0 0
      %1039 = vmatprep.subr.bf16.mxu0 0
      %1040 = vmatpush1.bf16.msra.mxu0 0
      %1041 = vmatprep.subr.bf16.mxu0 0
      %1042 = vmatpush1.bf16.msra.mxu0 0
      %1043 = vmatprep.subr.bf16.mxu0 0
      %1044 = vmatpush1.bf16.msra.mxu0 0
      %1045 = vmatprep.subr.bf16.mxu0 0
      %1046 = vmatpush1.bf16.msra.mxu0 0
      %1047 = vmatprep.subr.bf16.mxu0 0
      %1048 = vmatpush1.bf16.msra.mxu0 0
      %1049 = vmatprep.subr.bf16.mxu0 0
      %1050 = vmatpush1.bf16.msra.mxu0 0
      %1051 = vmatprep.subr.bf16.mxu0 0
      %1052 = vmatpush1.bf16.msra.mxu0 0
      %1053 = vmatprep.subr.bf16.mxu0 0
      %1054 = vmatpush1.bf16.msra.mxu0 0
      %1055 = vmatprep.subr.bf16.mxu0 0
      %1056 = vmatpush1.bf16.msra.mxu0 0
      %1057 = vmatprep.subr.bf16.mxu0 0
      %1058 = vmatpush1.bf16.msra.mxu0 0
      %1059 = vmatprep.subr.bf16.mxu0 0
      %1060 = vmatpush1.bf16.msra.mxu0 0
      %1061 = vmatprep.subr.bf16.mxu0 0
      %1062 = vmatpush1.bf16.msra.mxu0 0
      %1063 = vmatprep.subr.bf16.mxu0 0
      %1064 = vmatpush1.bf16.msra.mxu0 0
      %1065 = vmatprep.mubr.bf16.mxu0 0
      %1066 = vmatmul.mubr.bf16.gmra.mrb[0].mxu0 %v983
      %v1067 = vpop.f32.mrb[0].mxu0
      %v1068 = vadd.f32 %v776, %v1067
      %v1069 = vpop.f32.mrb[0].mxu0
      %v1070 = vpop.f32.mrb[0].mxu0
      %v1071 = vadd.f32 %v779, %v1070
      %v1072 = vpop.f32.mrb[0].mxu0
      %1073 = vmatprep.mubr.bf16.mxu0 0
      %1074 = vmatmul.mubr.bf16.gmra.mrb[0].mxu0 %v986
      %v1075 = vpop.f32.mrb[0].mxu0
      %v1076 = vadd.f32 %v784, %v1075
      %v1077 = vpop.f32.mrb[0].mxu0
      %v1078 = vpop.f32.mrb[0].mxu0
      %v1079 = vadd.f32 %v787, %v1078
      %v1080 = vpop.f32.mrb[0].mxu0
      %1081 = vmatprep.mubr.bf16.mxu0 0
      %1082 = vmatmul.mubr.bf16.gmra.mrb[0].mxu0 %v989
      %v1083 = vpop.f32.mrb[0].mxu0
      %v1084 = vadd.f32 %v792, %v1083
      %v1085 = vpop.f32.mrb[0].mxu0
      %v1086 = vpop.f32.mrb[0].mxu0
      %v1087 = vadd.f32 %v795, %v1086
      %v1088 = vpop.f32.mrb[0].mxu0
      %1089 = vmatprep.mubr.bf16.mxu0 0
      %1090 = vmatmul.mubr.bf16.gmra.mrb[0].mxu0 %v992
      %v1091 = vpop.f32.mrb[0].mxu0
      %v1092 = vadd.f32 %v800, %v1091
      %v1093 = vpop.f32.mrb[0].mxu0
      %v1094 = vpop.f32.mrb[0].mxu0
      %v1095 = vadd.f32 %v803, %v1094
      %v1096 = vpop.f32.mrb[0].mxu0
      %1097 = vmatprep.mubr.bf16.mxu0 0
      %1098 = vmatmul.mubr.bf16.gmra.mrb[0].mxu0 %v995
      %v1099 = vpop.f32.mrb[0].mxu0
      %v1100 = vadd.f32 %v808, %v1099
      %v1101 = vpop.f32.mrb[0].mxu0
      %v1102 = vpop.f32.mrb[0].mxu0
      %v1103 = vadd.f32 %v811, %v1102
      %v1104 = vpop.f32.mrb[0].mxu0
      %1105 = vmatprep.mubr.bf16.mxu0 0
      %1106 = vmatmul.mubr.bf16.gmra.mrb[0].mxu0 %v998
      %v1107 = vpop.f32.mrb[0].mxu0
      %v1108 = vadd.f32 %v816, %v1107
      %v1109 = vpop.f32.mrb[0].mxu0
      %v1110 = vpop.f32.mrb[0].mxu0
      %v1111 = vadd.f32 %v819, %v1110
      %v1112 = vpop.f32.mrb[0].mxu0
      %1113 = vmatprep.mubr.bf16.mxu0 0
      %1114 = vmatmul.mubr.bf16.gmra.mrb[0].mxu0 %v1001
      %v1115 = vpop.f32.mrb[0].mxu0
      %v1116 = vadd.f32 %v824, %v1115
      %v1117 = vpop.f32.mrb[0].mxu0
      %v1118 = vpop.f32.mrb[0].mxu0
      %v1119 = vadd.f32 %v827, %v1118
      %v1120 = vpop.f32.mrb[0].mxu0
      %1121 = vmatprep.mubr.bf16.mxu0 0
      %1122 = vmatmul.mubr.bf16.gmra.mrb[0].mxu0 %v1004
      %v1123 = vpop.f32.mrb[0].mxu0
      %v1124 = vadd.f32 %v832, %v1123
      %v1125 = vpop.f32.mrb[0].mxu0
      %v1126 = vpop.f32.mrb[0].mxu0
      %v1127 = vadd.f32 %v835, %v1126
      %v1128 = vpop.f32.mrb[0].mxu0
      %1129 = vmatprep.mubr.bf16.mxu0 0
      %1130 = vmatmul.mubr.bf16.gmra.mrb[0].mxu0 %v1007
      %v1131 = vpop.f32.mrb[0].mxu0
      %v1132 = vadd.f32 %v840, %v1131
      %v1133 = vpop.f32.mrb[0].mxu0
      %v1134 = vpop.f32.mrb[0].mxu0
      %v1135 = vadd.f32 %v843, %v1134
      %v1136 = vpop.f32.mrb[0].mxu0
      %1137 = vmatprep.mubr.bf16.mxu0 0
      %1138 = vmatmul.mubr.bf16.gmra.mrb[0].mxu0 %v1010
      %v1139 = vpop.f32.mrb[0].mxu0
      %v1140 = vadd.f32 %v848, %v1139
      %v1141 = vpop.f32.mrb[0].mxu0
      %v1142 = vpop.f32.mrb[0].mxu0
      %v1143 = vadd.f32 %v851, %v1142
      %v1144 = vpop.f32.mrb[0].mxu0
      %1145 = vmatprep.mubr.bf16.mxu0 0
      %1146 = vmatmul.mubr.bf16.gmra.mrb[0].mxu0 %v1013
      %v1147 = vpop.f32.mrb[0].mxu0
      %v1148 = vadd.f32 %v856, %v1147
      %v1149 = vpop.f32.mrb[0].mxu0
      %v1150 = vpop.f32.mrb[0].mxu0
      %v1151 = vadd.f32 %v859, %v1150
      %v1152 = vpop.f32.mrb[0].mxu0
      %1153 = vmatprep.mubr.bf16.mxu0 0
      %1154 = vmatmul.mubr.bf16.gmra.mrb[0].mxu0 %v1016
      %v1155 = vpop.f32.mrb[0].mxu0
      %v1156 = vadd.f32 %v864, %v1155
      %v1157 = vpop.f32.mrb[0].mxu0
      %v1158 = vpop.f32.mrb[0].mxu0
      %v1159 = vadd.f32 %v867, %v1158
      %v1160 = vpop.f32.mrb[0].mxu0
      %1161 = vmatprep.mubr.bf16.mxu0 0
      %1162 = vmatmul.mubr.bf16.gmra.mrb[0].mxu0 %v1019
      %v1163 = vpop.f32.mrb[0].mxu0
      %v1164 = vadd.f32 %v872, %v1163
      %v1165 = vpop.f32.mrb[0].mxu0
      %v1166 = vpop.f32.mrb[0].mxu0
      %v1167 = vadd.f32 %v875, %v1166
      %v1168 = vpop.f32.mrb[0].mxu0
      %1169 = vmatprep.mubr.bf16.mxu0 0
      %1170 = vmatmul.mubr.bf16.gmra.mrb[0].mxu0 %v1022
      %v1171 = vpop.f32.mrb[0].mxu0
      %v1172 = vadd.f32 %v880, %v1171
      %v1173 = vpop.f32.mrb[0].mxu0
      %v1174 = vpop.f32.mrb[0].mxu0
      %v1175 = vadd.f32 %v883, %v1174
      %v1176 = vpop.f32.mrb[0].mxu0
      %1177 = vmatprep.mubr.bf16.mxu0 0
      %1178 = vmatmul.mubr.bf16.gmra.mrb[0].mxu0 %v1025
      %v1179 = vpop.f32.mrb[0].mxu0
      %v1180 = vadd.f32 %v888, %v1179
      %v1181 = vpop.f32.mrb[0].mxu0
      %v1182 = vpop.f32.mrb[0].mxu0
      %v1183 = vadd.f32 %v891, %v1182
      %v1184 = vpop.f32.mrb[0].mxu0
      %1185 = vmatprep.mubr.bf16.mxu0 0
      %1186 = vmatmul.mubr.bf16.gmra.mrb[0].mxu0 %v1028
      %v1187 = vpop.f32.mrb[0].mxu0
      %v1188 = vadd.f32 %v896, %v1187
      %v1189 = vpop.f32.mrb[0].mxu0
      %v1190 = vpop.f32.mrb[0].mxu0
      %v1191 = vadd.f32 %v899, %v1190
      %v1192 = vpop.f32.mrb[0].mxu0
      %1193 = vdwg.mxu0
      %vm1210 = vcmask 1042432
      %vm1211 = vcmask 1046532
      %vm1212 = vmor %vm1210, %vm1211
      %v1213 = vrot.slane %v196, 5
      %v1214 = vrot.slane %v1213, 4
      %v1215 = vrot.slane %v197, 5
      %v1216 = vsel %vm1212, %v1214, %v1215
      %v1217 = vrot.slane %v1215, 4
      %v1218 = vrot.slane %v198, 5
      %v1219 = vsel %vm1212, %v1217, %v1218
      %v1220 = vrot.slane %v199, 5
      %v1221 = vrot.slane %v1220, 4
      %v1222 = vrot.slane %v200, 5
      %v1223 = vsel %vm1212, %v1221, %v1222
      %v1224 = vrot.slane %v1222, 4
      %v1225 = vrot.slane %v201, 5
      %v1226 = vsel %vm1212, %v1224, %v1225
      %v1227 = vrot.slane %v202, 5
      %v1228 = vrot.slane %v1227, 4
      %v1229 = vrot.slane %v203, 5
      %v1230 = vsel %vm1212, %v1228, %v1229
      %v1231 = vrot.slane %v1229, 4
      %v1232 = vrot.slane %v204, 5
      %v1233 = vsel %vm1212, %v1231, %v1232
      %v1234 = vrot.slane %v205, 5
      %v1235 = vrot.slane %v1234, 4
      %v1236 = vrot.slane %v206, 5
      %v1237 = vsel %vm1212, %v1235, %v1236
      %v1238 = vrot.slane %v1236, 4
      %v1239 = vrot.slane %v207, 5
      %v1240 = vsel %vm1212, %v1238, %v1239
      %v1241 = vrot.slane %v208, 5
      %v1242 = vrot.slane %v1241, 4
      %v1243 = vrot.slane %v209, 5
      %v1244 = vsel %vm1212, %v1242, %v1243
      %v1245 = vrot.slane %v1243, 4
      %v1246 = vrot.slane %v210, 5
      %v1247 = vsel %vm1212, %v1245, %v1246
      %v1248 = vrot.slane %v211, 5
      %v1249 = vrot.slane %v1248, 4
      %v1250 = vrot.slane %v212, 5
      %v1251 = vsel %vm1212, %v1249, %v1250
      %v1252 = vrot.slane %v1250, 4
      %v1253 = vrot.slane %v213, 5
      %v1254 = vsel %vm1212, %v1252, %v1253
      %v1255 = vrot.slane %v214, 5
      %v1256 = vrot.slane %v1255, 4
      %v1257 = vrot.slane %v215, 5
      %v1258 = vsel %vm1212, %v1256, %v1257
      %v1259 = vrot.slane %v1257, 4
      %v1260 = vrot.slane %v216, 5
      %v1261 = vsel %vm1212, %v1259, %v1260
      %v1262 = vrot.slane %v217, 5
      %v1263 = vrot.slane %v1262, 4
      %v1264 = vrot.slane %v218, 5
      %v1265 = vsel %vm1212, %v1263, %v1264
      %v1266 = vrot.slane %v1264, 4
      %v1267 = vrot.slane %v219, 5
      %v1268 = vsel %vm1212, %v1266, %v1267
      %v1269 = vrot.slane %v220, 5
      %v1270 = vrot.slane %v1269, 4
      %v1271 = vrot.slane %v221, 5
      %v1272 = vsel %vm1212, %v1270, %v1271
      %v1273 = vrot.slane %v1271, 4
      %v1274 = vrot.slane %v222, 5
      %v1275 = vsel %vm1212, %v1273, %v1274
      %v1276 = vrot.slane %v223, 5
      %v1277 = vrot.slane %v1276, 4
      %v1278 = vrot.slane %v224, 5
      %v1279 = vsel %vm1212, %v1277, %v1278
      %v1280 = vrot.slane %v1278, 4
      %v1281 = vrot.slane %v225, 5
      %v1282 = vsel %vm1212, %v1280, %v1281
      %v1283 = vrot.slane %v226, 5
      %v1284 = vrot.slane %v1283, 4
      %v1285 = vrot.slane %v227, 5
      %v1286 = vsel %vm1212, %v1284, %v1285
      %v1287 = vrot.slane %v1285, 4
      %v1288 = vrot.slane %v228, 5
      %v1289 = vsel %vm1212, %v1287, %v1288
      %v1290 = vrot.slane %v229, 5
      %v1291 = vrot.slane %v1290, 4
      %v1292 = vrot.slane %v230, 5
      %v1293 = vsel %vm1212, %v1291, %v1292
      %v1294 = vrot.slane %v1292, 4
      %v1295 = vrot.slane %v231, 5
      %v1296 = vsel %vm1212, %v1294, %v1295
      %v1297 = vrot.slane %v232, 5
      %v1298 = vrot.slane %v1297, 4
      %v1299 = vrot.slane %v233, 5
      %v1300 = vsel %vm1212, %v1298, %v1299
      %v1301 = vrot.slane %v1299, 4
      %v1302 = vrot.slane %v234, 5
      %v1303 = vsel %vm1212, %v1301, %v1302
      %v1304 = vrot.slane %v235, 5
      %v1305 = vrot.slane %v1304, 4
      %v1306 = vrot.slane %v236, 5
      %v1307 = vsel %vm1212, %v1305, %v1306
      %v1308 = vrot.slane %v1306, 4
      %v1309 = vrot.slane %v237, 5
      %v1310 = vsel %vm1212, %v1308, %v1309
      %v1311 = vrot.slane %v238, 5
      %v1312 = vrot.slane %v1311, 4
      %v1313 = vrot.slane %v239, 5
      %v1314 = vsel %vm1212, %v1312, %v1313
      %v1315 = vrot.slane %v1313, 4
      %v1316 = vrot.slane %v240, 5
      %v1317 = vsel %vm1212, %v1315, %v1316
      %v1318 = vrot.slane %v241, 5
      %v1319 = vrot.slane %v1318, 4
      %v1320 = vrot.slane %v242, 5
      %v1321 = vsel %vm1212, %v1319, %v1320
      %v1322 = vrot.slane %v1320, 4
      %v1323 = vrot.slane %v243, 5
      %v1324 = vsel %vm1212, %v1322, %v1323
      %s1325 = scalar_lea.vmem %s1, 4
      %v1326 = vld [vmem:[%s1325] sm:$0x3]
      %v1327 = vunpack.c.l.b16 %v1216
      %v1328 = vunpack.c.l.b16 %v1219
      %v1329 = vunpack.c.l.b16 %v1223
      %v1330 = vunpack.c.l.b16 %v1226
      %v1331 = vunpack.c.l.b16 %v1230
      %v1332 = vunpack.c.l.b16 %v1233
      %v1333 = vunpack.c.l.b16 %v1237
      %v1334 = vunpack.c.l.b16 %v1240
      %v1335 = vunpack.c.l.b16 %v1244
      %v1336 = vunpack.c.l.b16 %v1247
      %v1337 = vunpack.c.l.b16 %v1251
      %v1338 = vunpack.c.l.b16 %v1254
      %v1339 = vunpack.c.l.b16 %v1258
      %v1340 = vunpack.c.l.b16 %v1261
      %v1341 = vunpack.c.l.b16 %v1265
      %v1342 = vunpack.c.l.b16 %v1268
      %v1343 = vunpack.c.l.b16 %v1272
      %v1344 = vunpack.c.l.b16 %v1275
      %v1345 = vunpack.c.l.b16 %v1279
      %v1346 = vunpack.c.l.b16 %v1282
      %v1347 = vunpack.c.l.b16 %v1286
      %v1348 = vunpack.c.l.b16 %v1289
      %v1349 = vunpack.c.l.b16 %v1293
      %v1350 = vunpack.c.l.b16 %v1296
      %v1351 = vunpack.c.l.b16 %v1300
      %v1352 = vunpack.c.l.b16 %v1303
      %v1353 = vunpack.c.l.b16 %v1307
      %v1354 = vunpack.c.l.b16 %v1310
      %v1355 = vunpack.c.l.b16 %v1314
      %v1356 = vunpack.c.l.b16 %v1317
      %v1357 = vunpack.c.l.b16 %v1321
      %v1358 = vunpack.c.l.b16 %v1324
      %v1359 = vpack.c.b16 %v1328, %v1327
      %v1360 = vpack.c.b16 %v1330, %v1329
      %v1361 = vpack.c.b16 %v1332, %v1331
      %v1362 = vpack.c.b16 %v1334, %v1333
      %v1363 = vpack.c.b16 %v1336, %v1335
      %v1364 = vpack.c.b16 %v1338, %v1337
      %v1365 = vpack.c.b16 %v1340, %v1339
      %v1366 = vpack.c.b16 %v1342, %v1341
      %v1367 = vpack.c.b16 %v1344, %v1343
      %v1368 = vpack.c.b16 %v1346, %v1345
      %v1369 = vpack.c.b16 %v1348, %v1347
      %v1370 = vpack.c.b16 %v1350, %v1349
      %v1371 = vpack.c.b16 %v1352, %v1351
      %v1372 = vpack.c.b16 %v1354, %v1353
      %v1373 = vpack.c.b16 %v1356, %v1355
      %v1374 = vpack.c.b16 %v1358, %v1357
      %v1376 = vsel %vm688, %v1359, 0
      %v1379 = vsel %vm688, %v1360, 0
      %v1382 = vsel %vm688, %v1361, 0
      %v1385 = vsel %vm688, %v1362, 0
      %v1388 = vsel %vm688, %v1363, 0
      %v1391 = vsel %vm688, %v1364, 0
      %v1394 = vsel %vm688, %v1365, 0
      %v1397 = vsel %vm688, %v1366, 0
      %v1400 = vsel %vm688, %v1367, 0
      %v1403 = vsel %vm688, %v1368, 0
      %v1406 = vsel %vm688, %v1369, 0
      %v1409 = vsel %vm688, %v1370, 0
      %v1412 = vsel %vm688, %v1371, 0
      %v1415 = vsel %vm688, %v1372, 0
      %v1418 = vsel %vm688, %v1373, 0
      %v1421 = vsel %vm688, %v1374, 0
      %v1424 = vsel %vm737, %v1326, 0
      %1426 = vmatprep.subr.bf16.mxu0 0
      %1427 = vmatpush1.bf16.msra.mxu0 %v1424
      %1428 = vmatprep.subr.bf16.mxu0 0
      %1429 = vmatpush1.bf16.msra.mxu0 0
      %1430 = vmatprep.subr.bf16.mxu0 0
      %1431 = vmatpush1.bf16.msra.mxu0 0
      %1432 = vmatprep.subr.bf16.mxu0 0
      %1433 = vmatpush1.bf16.msra.mxu0 0
      %1434 = vmatprep.subr.bf16.mxu0 0
      %1435 = vmatpush1.bf16.msra.mxu0 0
      %1436 = vmatprep.subr.bf16.mxu0 0
      %1437 = vmatpush1.bf16.msra.mxu0 0
      %1438 = vmatprep.subr.bf16.mxu0 0
      %1439 = vmatpush1.bf16.msra.mxu0 0
      %1440 = vmatprep.subr.bf16.mxu0 0
      %1441 = vmatpush1.bf16.msra.mxu0 0
      %1442 = vmatprep.subr.bf16.mxu0 0
      %1443 = vmatpush1.bf16.msra.mxu0 0
      %1444 = vmatprep.subr.bf16.mxu0 0
      %1445 = vmatpush1.bf16.msra.mxu0 0
      %1446 = vmatprep.subr.bf16.mxu0 0
      %1447 = vmatpush1.bf16.msra.mxu0 0
      %1448 = vmatprep.subr.bf16.mxu0 0
      %1449 = vmatpush1.bf16.msra.mxu0 0
      %1450 = vmatprep.subr.bf16.mxu0 0
      %1451 = vmatpush1.bf16.msra.mxu0 0
      %1452 = vmatprep.subr.bf16.mxu0 0
      %1453 = vmatpush1.bf16.msra.mxu0 0
      %1454 = vmatprep.subr.bf16.mxu0 0
      %1455 = vmatpush1.bf16.msra.mxu0 0
      %1456 = vmatprep.subr.bf16.mxu0 0
      %1457 = vmatpush1.bf16.msra.mxu0 0
      %1458 = vmatprep.mubr.bf16.mxu0 0
      %1459 = vmatmul.mubr.bf16.gmra.mrb[0].mxu0 %v1376
      %v1460 = vpop.f32.mrb[0].mxu0
      %v1461 = vadd.f32 0.0, %v1460
      %v1462 = vpop.f32.mrb[0].mxu0
      %v1463 = vpop.f32.mrb[0].mxu0
      %v1464 = vadd.f32 0.0, %v1463
      %v1465 = vpop.f32.mrb[0].mxu0
      %1466 = vmatprep.mubr.bf16.mxu0 0
      %1467 = vmatmul.mubr.bf16.gmra.mrb[0].mxu0 %v1379
      %v1468 = vpop.f32.mrb[0].mxu0
      %v1469 = vadd.f32 0.0, %v1468
      %v1470 = vpop.f32.mrb[0].mxu0
      %v1471 = vpop.f32.mrb[0].mxu0
      %v1472 = vadd.f32 0.0, %v1471
      %v1473 = vpop.f32.mrb[0].mxu0
      %1474 = vmatprep.mubr.bf16.mxu0 0
      %1475 = vmatmul.mubr.bf16.gmra.mrb[0].mxu0 %v1382
      %v1476 = vpop.f32.mrb[0].mxu0
      %v1477 = vadd.f32 0.0, %v1476
      %v1478 = vpop.f32.mrb[0].mxu0
      %v1479 = vpop.f32.mrb[0].mxu0
      %v1480 = vadd.f32 0.0, %v1479
      %v1481 = vpop.f32.mrb[0].mxu0
      %1482 = vmatprep.mubr.bf16.mxu0 0
      %1483 = vmatmul.mubr.bf16.gmra.mrb[0].mxu0 %v1385
      %v1484 = vpop.f32.mrb[0].mxu0
      %v1485 = vadd.f32 0.0, %v1484
      %v1486 = vpop.f32.mrb[0].mxu0
      %v1487 = vpop.f32.mrb[0].mxu0
      %v1488 = vadd.f32 0.0, %v1487
      %v1489 = vpop.f32.mrb[0].mxu0
      %1490 = vmatprep.mubr.bf16.mxu0 0
      %1491 = vmatmul.mubr.bf16.gmra.mrb[0].mxu0 %v1388
      %v1492 = vpop.f32.mrb[0].mxu0
      %v1493 = vadd.f32 0.0, %v1492
      %v1494 = vpop.f32.mrb[0].mxu0
      %v1495 = vpop.f32.mrb[0].mxu0
      %v1496 = vadd.f32 0.0, %v1495
      %v1497 = vpop.f32.mrb[0].mxu0
      %1498 = vmatprep.mubr.bf16.mxu0 0
      %1499 = vmatmul.mubr.bf16.gmra.mrb[0].mxu0 %v1391
      %v1500 = vpop.f32.mrb[0].mxu0
      %v1501 = vadd.f32 0.0, %v1500
      %v1502 = vpop.f32.mrb[0].mxu0
      %v1503 = vpop.f32.mrb[0].mxu0
      %v1504 = vadd.f32 0.0, %v1503
      %v1505 = vpop.f32.mrb[0].mxu0
      %1506 = vmatprep.mubr.bf16.mxu0 0
      %1507 = vmatmul.mubr.bf16.gmra.mrb[0].mxu0 %v1394
      %v1508 = vpop.f32.mrb[0].mxu0
      %v1509 = vadd.f32 0.0, %v1508
      %v1510 = vpop.f32.mrb[0].mxu0
      %v1511 = vpop.f32.mrb[0].mxu0
      %v1512 = vadd.f32 0.0, %v1511
      %v1513 = vpop.f32.mrb[0].mxu0
      %1514 = vmatprep.mubr.bf16.mxu0 0
      %1515 = vmatmul.mubr.bf16.gmra.mrb[0].mxu0 %v1397
      %v1516 = vpop.f32.mrb[0].mxu0
      %v1517 = vadd.f32 0.0, %v1516
      %v1518 = vpop.f32.mrb[0].mxu0
      %v1519 = vpop.f32.mrb[0].mxu0
      %v1520 = vadd.f32 0.0, %v1519
      %v1521 = vpop.f32.mrb[0].mxu0
      %1522 = vmatprep.mubr.bf16.mxu0 0
      %1523 = vmatmul.mubr.bf16.gmra.mrb[0].mxu0 %v1400
      %v1524 = vpop.f32.mrb[0].mxu0
      %v1525 = vadd.f32 0.0, %v1524
      %v1526 = vpop.f32.mrb[0].mxu0
      %v1527 = vpop.f32.mrb[0].mxu0
      %v1528 = vadd.f32 0.0, %v1527
      %v1529 = vpop.f32.mrb[0].mxu0
      %1530 = vmatprep.mubr.bf16.mxu0 0
      %1531 = vmatmul.mubr.bf16.gmra.mrb[0].mxu0 %v1403
      %v1532 = vpop.f32.mrb[0].mxu0
      %v1533 = vadd.f32 0.0, %v1532
      %v1534 = vpop.f32.mrb[0].mxu0
      %v1535 = vpop.f32.mrb[0].mxu0
      %v1536 = vadd.f32 0.0, %v1535
      %v1537 = vpop.f32.mrb[0].mxu0
      %1538 = vmatprep.mubr.bf16.mxu0 0
      %1539 = vmatmul.mubr.bf16.gmra.mrb[0].mxu0 %v1406
      %v1540 = vpop.f32.mrb[0].mxu0
      %v1541 = vadd.f32 0.0, %v1540
      %v1542 = vpop.f32.mrb[0].mxu0
      %v1543 = vpop.f32.mrb[0].mxu0
      %v1544 = vadd.f32 0.0, %v1543
      %v1545 = vpop.f32.mrb[0].mxu0
      %1546 = vmatprep.mubr.bf16.mxu0 0
      %1547 = vmatmul.mubr.bf16.gmra.mrb[0].mxu0 %v1409
      %v1548 = vpop.f32.mrb[0].mxu0
      %v1549 = vadd.f32 0.0, %v1548
      %v1550 = vpop.f32.mrb[0].mxu0
      %v1551 = vpop.f32.mrb[0].mxu0
      %v1552 = vadd.f32 0.0, %v1551
      %v1553 = vpop.f32.mrb[0].mxu0
      %1554 = vmatprep.mubr.bf16.mxu0 0
      %1555 = vmatmul.mubr.bf16.gmra.mrb[0].mxu0 %v1412
      %v1556 = vpop.f32.mrb[0].mxu0
      %v1557 = vadd.f32 0.0, %v1556
      %v1558 = vpop.f32.mrb[0].mxu0
      %v1559 = vpop.f32.mrb[0].mxu0
      %v1560 = vadd.f32 0.0, %v1559
      %v1561 = vpop.f32.mrb[0].mxu0
      %1562 = vmatprep.mubr.bf16.mxu0 0
      %1563 = vmatmul.mubr.bf16.gmra.mrb[0].mxu0 %v1415
      %v1564 = vpop.f32.mrb[0].mxu0
      %v1565 = vadd.f32 0.0, %v1564
      %v1566 = vpop.f32.mrb[0].mxu0
      %v1567 = vpop.f32.mrb[0].mxu0
      %v1568 = vadd.f32 0.0, %v1567
      %v1569 = vpop.f32.mrb[0].mxu0
      %1570 = vmatprep.mubr.bf16.mxu0 0
      %1571 = vmatmul.mubr.bf16.gmra.mrb[0].mxu0 %v1418
      %v1572 = vpop.f32.mrb[0].mxu0
      %v1573 = vadd.f32 0.0, %v1572
      %v1574 = vpop.f32.mrb[0].mxu0
      %v1575 = vpop.f32.mrb[0].mxu0
      %v1576 = vadd.f32 0.0, %v1575
      %v1577 = vpop.f32.mrb[0].mxu0
      %1578 = vmatprep.mubr.bf16.mxu0 0
      %1579 = vmatmul.mubr.bf16.gmra.mrb[0].mxu0 %v1421
      %v1580 = vpop.f32.mrb[0].mxu0
      %v1581 = vadd.f32 0.0, %v1580
      %v1582 = vpop.f32.mrb[0].mxu0
      %v1583 = vpop.f32.mrb[0].mxu0
      %v1584 = vadd.f32 0.0, %v1583
      %v1585 = vpop.f32.mrb[0].mxu0
      %1586 = vdwg.mxu0
      %v1587 = vadd.f32 %v1068, %v1461
      %v1588 = vadd.f32 %v1071, %v1464
      %v1589 = vadd.f32 %v1076, %v1469
      %v1590 = vadd.f32 %v1079, %v1472
      %v1591 = vadd.f32 %v1084, %v1477
      %v1592 = vadd.f32 %v1087, %v1480
      %v1593 = vadd.f32 %v1092, %v1485
      %v1594 = vadd.f32 %v1095, %v1488
      %v1595 = vadd.f32 %v1100, %v1493
      %v1596 = vadd.f32 %v1103, %v1496
      %v1597 = vadd.f32 %v1108, %v1501
      %v1598 = vadd.f32 %v1111, %v1504
      %v1599 = vadd.f32 %v1116, %v1509
      %v1600 = vadd.f32 %v1119, %v1512
      %v1601 = vadd.f32 %v1124, %v1517
      %v1602 = vadd.f32 %v1127, %v1520
      %v1603 = vadd.f32 %v1132, %v1525
      %v1604 = vadd.f32 %v1135, %v1528
      %v1605 = vadd.f32 %v1140, %v1533
      %v1606 = vadd.f32 %v1143, %v1536
      %v1607 = vadd.f32 %v1148, %v1541
      %v1608 = vadd.f32 %v1151, %v1544
      %v1609 = vadd.f32 %v1156, %v1549
      %v1610 = vadd.f32 %v1159, %v1552
      %v1611 = vadd.f32 %v1164, %v1557
      %v1612 = vadd.f32 %v1167, %v1560
      %v1613 = vadd.f32 %v1172, %v1565
      %v1614 = vadd.f32 %v1175, %v1568
      %v1615 = vadd.f32 %v1180, %v1573
      %v1616 = vadd.f32 %v1183, %v1576
      %v1617 = vadd.f32 %v1188, %v1581
      %v1618 = vadd.f32 %v1191, %v1584
      %s1619 = scalar_lea.vmem %s1, 6
      %v1620 = vld [vmem:[%s1619] sm:$0x3]
      %v1623 = vunpack.c.l.b16 %v244
      %v1624 = vunpack.c.l.b16 %v245
      %v1625 = vpack.c.b16 %v1624, %v1623
      %v1627 = vsel %vm688, %v1625, 0
      %v1630 = vsel %vm737, %v1620, 0
      %1632 = vmatprep.subr.bf16.mxu0 0
      %1633 = vmatpush1.bf16.msra.mxu0 %v1630
      %1634 = vmatprep.subr.bf16.mxu0 0
      %1635 = vmatpush1.bf16.msra.mxu0 0
      %1636 = vmatprep.subr.bf16.mxu0 0
      %1637 = vmatpush1.bf16.msra.mxu0 0
      %1638 = vmatprep.subr.bf16.mxu0 0
      %1639 = vmatpush1.bf16.msra.mxu0 0
      %1640 = vmatprep.subr.bf16.mxu0 0
      %1641 = vmatpush1.bf16.msra.mxu0 0
      %1642 = vmatprep.subr.bf16.mxu0 0
      %1643 = vmatpush1.bf16.msra.mxu0 0
      %1644 = vmatprep.subr.bf16.mxu0 0
      %1645 = vmatpush1.bf16.msra.mxu0 0
      %1646 = vmatprep.subr.bf16.mxu0 0
      %1647 = vmatpush1.bf16.msra.mxu0 0
      %1648 = vmatprep.subr.bf16.mxu0 0
      %1649 = vmatpush1.bf16.msra.mxu0 0
      %1650 = vmatprep.subr.bf16.mxu0 0
      %1651 = vmatpush1.bf16.msra.mxu0 0
      %1652 = vmatprep.subr.bf16.mxu0 0
      %1653 = vmatpush1.bf16.msra.mxu0 0
      %1654 = vmatprep.subr.bf16.mxu0 0
      %1655 = vmatpush1.bf16.msra.mxu0 0
      %1656 = vmatprep.subr.bf16.mxu0 0
      %1657 = vmatpush1.bf16.msra.mxu0 0
      %1658 = vmatprep.subr.bf16.mxu0 0
      %1659 = vmatpush1.bf16.msra.mxu0 0
      %1660 = vmatprep.subr.bf16.mxu0 0
      %1661 = vmatpush1.bf16.msra.mxu0 0
      %1662 = vmatprep.subr.bf16.mxu0 0
      %1663 = vmatpush1.bf16.msra.mxu0 0
      %1664 = vmatprep.mubr.bf16.mxu0 0
      %1665 = vmatmul.mubr.bf16.gmra.mrb[0].mxu0 %v986
      %v1666 = vpop.f32.mrb[0].mxu0
      %v1667 = vadd.f32 0.0, %v1666
      %v1668 = vpop.f32.mrb[0].mxu0
      %v1669 = vpop.f32.mrb[0].mxu0
      %v1670 = vadd.f32 0.0, %v1669
      %v1671 = vpop.f32.mrb[0].mxu0
      %1672 = vmatprep.mubr.bf16.mxu0 0
      %1673 = vmatmul.mubr.bf16.gmra.mrb[0].mxu0 %v989
      %v1674 = vpop.f32.mrb[0].mxu0
      %v1675 = vadd.f32 0.0, %v1674
      %v1676 = vpop.f32.mrb[0].mxu0
      %v1677 = vpop.f32.mrb[0].mxu0
      %v1678 = vadd.f32 0.0, %v1677
      %v1679 = vpop.f32.mrb[0].mxu0
      %1680 = vmatprep.mubr.bf16.mxu0 0
      %1681 = vmatmul.mubr.bf16.gmra.mrb[0].mxu0 %v992
      %v1682 = vpop.f32.mrb[0].mxu0
      %v1683 = vadd.f32 0.0, %v1682
      %v1684 = vpop.f32.mrb[0].mxu0
      %v1685 = vpop.f32.mrb[0].mxu0
      %v1686 = vadd.f32 0.0, %v1685
      %v1687 = vpop.f32.mrb[0].mxu0
      %1688 = vmatprep.mubr.bf16.mxu0 0
      %1689 = vmatmul.mubr.bf16.gmra.mrb[0].mxu0 %v995
      %v1690 = vpop.f32.mrb[0].mxu0
      %v1691 = vadd.f32 0.0, %v1690
      %v1692 = vpop.f32.mrb[0].mxu0
      %v1693 = vpop.f32.mrb[0].mxu0
      %v1694 = vadd.f32 0.0, %v1693
      %v1695 = vpop.f32.mrb[0].mxu0
      %1696 = vmatprep.mubr.bf16.mxu0 0
      %1697 = vmatmul.mubr.bf16.gmra.mrb[0].mxu0 %v998
      %v1698 = vpop.f32.mrb[0].mxu0
      %v1699 = vadd.f32 0.0, %v1698
      %v1700 = vpop.f32.mrb[0].mxu0
      %v1701 = vpop.f32.mrb[0].mxu0
      %v1702 = vadd.f32 0.0, %v1701
      %v1703 = vpop.f32.mrb[0].mxu0
      %1704 = vmatprep.mubr.bf16.mxu0 0
      %1705 = vmatmul.mubr.bf16.gmra.mrb[0].mxu0 %v1001
      %v1706 = vpop.f32.mrb[0].mxu0
      %v1707 = vadd.f32 0.0, %v1706
      %v1708 = vpop.f32.mrb[0].mxu0
      %v1709 = vpop.f32.mrb[0].mxu0
      %v1710 = vadd.f32 0.0, %v1709
      %v1711 = vpop.f32.mrb[0].mxu0
      %1712 = vmatprep.mubr.bf16.mxu0 0
      %1713 = vmatmul.mubr.bf16.gmra.mrb[0].mxu0 %v1004
      %v1714 = vpop.f32.mrb[0].mxu0
      %v1715 = vadd.f32 0.0, %v1714
      %v1716 = vpop.f32.mrb[0].mxu0
      %v1717 = vpop.f32.mrb[0].mxu0
      %v1718 = vadd.f32 0.0, %v1717
      %v1719 = vpop.f32.mrb[0].mxu0
      %1720 = vmatprep.mubr.bf16.mxu0 0
      %1721 = vmatmul.mubr.bf16.gmra.mrb[0].mxu0 %v1007
      %v1722 = vpop.f32.mrb[0].mxu0
      %v1723 = vadd.f32 0.0, %v1722
      %v1724 = vpop.f32.mrb[0].mxu0
      %v1725 = vpop.f32.mrb[0].mxu0
      %v1726 = vadd.f32 0.0, %v1725
      %v1727 = vpop.f32.mrb[0].mxu0
      %1728 = vmatprep.mubr.bf16.mxu0 0
      %1729 = vmatmul.mubr.bf16.gmra.mrb[0].mxu0 %v1010
      %v1730 = vpop.f32.mrb[0].mxu0
      %v1731 = vadd.f32 0.0, %v1730
      %v1732 = vpop.f32.mrb[0].mxu0
      %v1733 = vpop.f32.mrb[0].mxu0
      %v1734 = vadd.f32 0.0, %v1733
      %v1735 = vpop.f32.mrb[0].mxu0
      %1736 = vmatprep.mubr.bf16.mxu0 0
      %1737 = vmatmul.mubr.bf16.gmra.mrb[0].mxu0 %v1013
      %v1738 = vpop.f32.mrb[0].mxu0
      %v1739 = vadd.f32 0.0, %v1738
      %v1740 = vpop.f32.mrb[0].mxu0
      %v1741 = vpop.f32.mrb[0].mxu0
      %v1742 = vadd.f32 0.0, %v1741
      %v1743 = vpop.f32.mrb[0].mxu0
      %1744 = vmatprep.mubr.bf16.mxu0 0
      %1745 = vmatmul.mubr.bf16.gmra.mrb[0].mxu0 %v1016
      %v1746 = vpop.f32.mrb[0].mxu0
      %v1747 = vadd.f32 0.0, %v1746
      %v1748 = vpop.f32.mrb[0].mxu0
      %v1749 = vpop.f32.mrb[0].mxu0
      %v1750 = vadd.f32 0.0, %v1749
      %v1751 = vpop.f32.mrb[0].mxu0
      %1752 = vmatprep.mubr.bf16.mxu0 0
      %1753 = vmatmul.mubr.bf16.gmra.mrb[0].mxu0 %v1019
      %v1754 = vpop.f32.mrb[0].mxu0
      %v1755 = vadd.f32 0.0, %v1754
      %v1756 = vpop.f32.mrb[0].mxu0
      %v1757 = vpop.f32.mrb[0].mxu0
      %v1758 = vadd.f32 0.0, %v1757
      %v1759 = vpop.f32.mrb[0].mxu0
      %1760 = vmatprep.mubr.bf16.mxu0 0
      %1761 = vmatmul.mubr.bf16.gmra.mrb[0].mxu0 %v1022
      %v1762 = vpop.f32.mrb[0].mxu0
      %v1763 = vadd.f32 0.0, %v1762
      %v1764 = vpop.f32.mrb[0].mxu0
      %v1765 = vpop.f32.mrb[0].mxu0
      %v1766 = vadd.f32 0.0, %v1765
      %v1767 = vpop.f32.mrb[0].mxu0
      %1768 = vmatprep.mubr.bf16.mxu0 0
      %1769 = vmatmul.mubr.bf16.gmra.mrb[0].mxu0 %v1025
      %v1770 = vpop.f32.mrb[0].mxu0
      %v1771 = vadd.f32 0.0, %v1770
      %v1772 = vpop.f32.mrb[0].mxu0
      %v1773 = vpop.f32.mrb[0].mxu0
      %v1774 = vadd.f32 0.0, %v1773
      %v1775 = vpop.f32.mrb[0].mxu0
      %1776 = vmatprep.mubr.bf16.mxu0 0
      %1777 = vmatmul.mubr.bf16.gmra.mrb[0].mxu0 %v1028
      %v1778 = vpop.f32.mrb[0].mxu0
      %v1779 = vadd.f32 0.0, %v1778
      %v1780 = vpop.f32.mrb[0].mxu0
      %v1781 = vpop.f32.mrb[0].mxu0
      %v1782 = vadd.f32 0.0, %v1781
      %v1783 = vpop.f32.mrb[0].mxu0
      %1784 = vmatprep.mubr.bf16.mxu0 0
      %1785 = vmatmul.mubr.bf16.gmra.mrb[0].mxu0 %v1627
      %v1786 = vpop.f32.mrb[0].mxu0
      %v1787 = vadd.f32 0.0, %v1786
      %v1788 = vpop.f32.mrb[0].mxu0
      %v1789 = vpop.f32.mrb[0].mxu0
      %v1790 = vadd.f32 0.0, %v1789
      %v1791 = vpop.f32.mrb[0].mxu0
      %1792 = vdwg.mxu0
      %v1793 = vadd.f32 %v1587, %v1667
      %v1794 = vadd.f32 %v1588, %v1670
      %v1795 = vadd.f32 %v1589, %v1675
      %v1796 = vadd.f32 %v1590, %v1678
      %v1797 = vadd.f32 %v1591, %v1683
      %v1798 = vadd.f32 %v1592, %v1686
      %v1799 = vadd.f32 %v1593, %v1691
      %v1800 = vadd.f32 %v1594, %v1694
      %v1801 = vadd.f32 %v1595, %v1699
      %v1802 = vadd.f32 %v1596, %v1702
      %v1803 = vadd.f32 %v1597, %v1707
      %v1804 = vadd.f32 %v1598, %v1710
      %v1805 = vadd.f32 %v1599, %v1715
      %v1806 = vadd.f32 %v1600, %v1718
      %v1807 = vadd.f32 %v1601, %v1723
      %v1808 = vadd.f32 %v1602, %v1726
      %v1809 = vadd.f32 %v1603, %v1731
      %v1810 = vadd.f32 %v1604, %v1734
      %v1811 = vadd.f32 %v1605, %v1739
      %v1812 = vadd.f32 %v1606, %v1742
      %v1813 = vadd.f32 %v1607, %v1747
      %v1814 = vadd.f32 %v1608, %v1750
      %v1815 = vadd.f32 %v1609, %v1755
      %v1816 = vadd.f32 %v1610, %v1758
      %v1817 = vadd.f32 %v1611, %v1763
      %v1818 = vadd.f32 %v1612, %v1766
      %v1819 = vadd.f32 %v1613, %v1771
      %v1820 = vadd.f32 %v1614, %v1774
      %v1821 = vadd.f32 %v1615, %v1779
      %v1822 = vadd.f32 %v1616, %v1782
      %v1823 = vadd.f32 %v1617, %v1787
      %v1824 = vadd.f32 %v1618, %v1790
      %v1826 = vshrl.u32 %v244, 16
      %v1828 = vrot.slane %v1826, 4
      %v1829 = vshll.u32 %v244, 16
      %v1831 = vrot.slane %v1829, 5
      %v1832 = vor.u32 %v1828, %v1831
      %v1833 = vrot.slane %v1832, 4
      %v1835 = vshll.u32 %v245, 16
      %v1837 = vrot.slane %v1835, 5
      %v1838 = vsel %vm253, %v1833, %v1837
      %v1839 = vshrl.u32 %v245, 16
      %v1841 = vrot.slane %v1839, 4
      %v1842 = vor.u32 %v1841, %v1837
      %v1843 = vrot.slane %v1842, 4
      %v1845 = vshll.u32 %v246, 16
      %v1847 = vrot.slane %v1845, 5
      %v1848 = vsel %vm253, %v1843, %v1847
      %s1849 = scalar_lea.vmem %s1, 8
      %v1850 = vld [vmem:[%s1849] sm:$0x3]
      %v1851 = vunpack.c.l.b16 %v1838
      %v1852 = vunpack.c.l.b16 %v1848
      %v1853 = vpack.c.b16 %v1852, %v1851
      %v1855 = vsel %vm688, %v1853, 0
      %v1858 = vsel %vm737, %v1850, 0
      %1860 = vmatprep.subr.bf16.mxu0 0
      %1861 = vmatpush1.bf16.msra.mxu0 %v1858
      %1862 = vmatprep.subr.bf16.mxu0 0
      %1863 = vmatpush1.bf16.msra.mxu0 0
      %1864 = vmatprep.subr.bf16.mxu0 0
      %1865 = vmatpush1.bf16.msra.mxu0 0
      %1866 = vmatprep.subr.bf16.mxu0 0
      %1867 = vmatpush1.bf16.msra.mxu0 0
      %1868 = vmatprep.subr.bf16.mxu0 0
      %1869 = vmatpush1.bf16.msra.mxu0 0
      %1870 = vmatprep.subr.bf16.mxu0 0
      %1871 = vmatpush1.bf16.msra.mxu0 0
      %1872 = vmatprep.subr.bf16.mxu0 0
      %1873 = vmatpush1.bf16.msra.mxu0 0
      %1874 = vmatprep.subr.bf16.mxu0 0
      %1875 = vmatpush1.bf16.msra.mxu0 0
      %1876 = vmatprep.subr.bf16.mxu0 0
      %1877 = vmatpush1.bf16.msra.mxu0 0
      %1878 = vmatprep.subr.bf16.mxu0 0
      %1879 = vmatpush1.bf16.msra.mxu0 0
      %1880 = vmatprep.subr.bf16.mxu0 0
      %1881 = vmatpush1.bf16.msra.mxu0 0
      %1882 = vmatprep.subr.bf16.mxu0 0
      %1883 = vmatpush1.bf16.msra.mxu0 0
      %1884 = vmatprep.subr.bf16.mxu0 0
      %1885 = vmatpush1.bf16.msra.mxu0 0
      %1886 = vmatprep.subr.bf16.mxu0 0
      %1887 = vmatpush1.bf16.msra.mxu0 0
      %1888 = vmatprep.subr.bf16.mxu0 0
      %1889 = vmatpush1.bf16.msra.mxu0 0
      %1890 = vmatprep.subr.bf16.mxu0 0
      %1891 = vmatpush1.bf16.msra.mxu0 0
      %1892 = vmatprep.mubr.bf16.mxu0 0
      %1893 = vmatmul.mubr.bf16.gmra.mrb[0].mxu0 %v693
      %v1894 = vpop.f32.mrb[0].mxu0
      %v1895 = vadd.f32 0.0, %v1894
      %v1896 = vpop.f32.mrb[0].mxu0
      %v1897 = vpop.f32.mrb[0].mxu0
      %v1898 = vadd.f32 0.0, %v1897
      %v1899 = vpop.f32.mrb[0].mxu0
      %1900 = vmatprep.mubr.bf16.mxu0 0
      %1901 = vmatmul.mubr.bf16.gmra.mrb[0].mxu0 %v696
      %v1902 = vpop.f32.mrb[0].mxu0
      %v1903 = vadd.f32 0.0, %v1902
      %v1904 = vpop.f32.mrb[0].mxu0
      %v1905 = vpop.f32.mrb[0].mxu0
      %v1906 = vadd.f32 0.0, %v1905
      %v1907 = vpop.f32.mrb[0].mxu0
      %1908 = vmatprep.mubr.bf16.mxu0 0
      %1909 = vmatmul.mubr.bf16.gmra.mrb[0].mxu0 %v699
      %v1910 = vpop.f32.mrb[0].mxu0
      %v1911 = vadd.f32 0.0, %v1910
      %v1912 = vpop.f32.mrb[0].mxu0
      %v1913 = vpop.f32.mrb[0].mxu0
      %v1914 = vadd.f32 0.0, %v1913
      %v1915 = vpop.f32.mrb[0].mxu0
      %1916 = vmatprep.mubr.bf16.mxu0 0
      %1917 = vmatmul.mubr.bf16.gmra.mrb[0].mxu0 %v702
      %v1918 = vpop.f32.mrb[0].mxu0
      %v1919 = vadd.f32 0.0, %v1918
      %v1920 = vpop.f32.mrb[0].mxu0
      %v1921 = vpop.f32.mrb[0].mxu0
      %v1922 = vadd.f32 0.0, %v1921
      %v1923 = vpop.f32.mrb[0].mxu0
      %1924 = vmatprep.mubr.bf16.mxu0 0
      %1925 = vmatmul.mubr.bf16.gmra.mrb[0].mxu0 %v705
      %v1926 = vpop.f32.mrb[0].mxu0
      %v1927 = vadd.f32 0.0, %v1926
      %v1928 = vpop.f32.mrb[0].mxu0
      %v1929 = vpop.f32.mrb[0].mxu0
      %v1930 = vadd.f32 0.0, %v1929
      %v1931 = vpop.f32.mrb[0].mxu0
      %1932 = vmatprep.mubr.bf16.mxu0 0
      %1933 = vmatmul.mubr.bf16.gmra.mrb[0].mxu0 %v708
      %v1934 = vpop.f32.mrb[0].mxu0
      %v1935 = vadd.f32 0.0, %v1934
      %v1936 = vpop.f32.mrb[0].mxu0
      %v1937 = vpop.f32.mrb[0].mxu0
      %v1938 = vadd.f32 0.0, %v1937
      %v1939 = vpop.f32.mrb[0].mxu0
      %1940 = vmatprep.mubr.bf16.mxu0 0
      %1941 = vmatmul.mubr.bf16.gmra.mrb[0].mxu0 %v711
      %v1942 = vpop.f32.mrb[0].mxu0
      %v1943 = vadd.f32 0.0, %v1942
      %v1944 = vpop.f32.mrb[0].mxu0
      %v1945 = vpop.f32.mrb[0].mxu0
      %v1946 = vadd.f32 0.0, %v1945
      %v1947 = vpop.f32.mrb[0].mxu0
      %1948 = vmatprep.mubr.bf16.mxu0 0
      %1949 = vmatmul.mubr.bf16.gmra.mrb[0].mxu0 %v714
      %v1950 = vpop.f32.mrb[0].mxu0
      %v1951 = vadd.f32 0.0, %v1950
      %v1952 = vpop.f32.mrb[0].mxu0
      %v1953 = vpop.f32.mrb[0].mxu0
      %v1954 = vadd.f32 0.0, %v1953
      %v1955 = vpop.f32.mrb[0].mxu0
      %1956 = vmatprep.mubr.bf16.mxu0 0
      %1957 = vmatmul.mubr.bf16.gmra.mrb[0].mxu0 %v717
      %v1958 = vpop.f32.mrb[0].mxu0
      %v1959 = vadd.f32 0.0, %v1958
      %v1960 = vpop.f32.mrb[0].mxu0
      %v1961 = vpop.f32.mrb[0].mxu0
      %v1962 = vadd.f32 0.0, %v1961
      %v1963 = vpop.f32.mrb[0].mxu0
      %1964 = vmatprep.mubr.bf16.mxu0 0
      %1965 = vmatmul.mubr.bf16.gmra.mrb[0].mxu0 %v720
      %v1966 = vpop.f32.mrb[0].mxu0
      %v1967 = vadd.f32 0.0, %v1966
      %v1968 = vpop.f32.mrb[0].mxu0
      %v1969 = vpop.f32.mrb[0].mxu0
      %v1970 = vadd.f32 0.0, %v1969
      %v1971 = vpop.f32.mrb[0].mxu0
      %1972 = vmatprep.mubr.bf16.mxu0 0
      %1973 = vmatmul.mubr.bf16.gmra.mrb[0].mxu0 %v723
      %v1974 = vpop.f32.mrb[0].mxu0
      %v1975 = vadd.f32 0.0, %v1974
      %v1976 = vpop.f32.mrb[0].mxu0
      %v1977 = vpop.f32.mrb[0].mxu0
      %v1978 = vadd.f32 0.0, %v1977
      %v1979 = vpop.f32.mrb[0].mxu0
      %1980 = vmatprep.mubr.bf16.mxu0 0
      %1981 = vmatmul.mubr.bf16.gmra.mrb[0].mxu0 %v726
      %v1982 = vpop.f32.mrb[0].mxu0
      %v1983 = vadd.f32 0.0, %v1982
      %v1984 = vpop.f32.mrb[0].mxu0
      %v1985 = vpop.f32.mrb[0].mxu0
      %v1986 = vadd.f32 0.0, %v1985
      %v1987 = vpop.f32.mrb[0].mxu0
      %1988 = vmatprep.mubr.bf16.mxu0 0
      %1989 = vmatmul.mubr.bf16.gmra.mrb[0].mxu0 %v729
      %v1990 = vpop.f32.mrb[0].mxu0
      %v1991 = vadd.f32 0.0, %v1990
      %v1992 = vpop.f32.mrb[0].mxu0
      %v1993 = vpop.f32.mrb[0].mxu0
      %v1994 = vadd.f32 0.0, %v1993
      %v1995 = vpop.f32.mrb[0].mxu0
      %1996 = vmatprep.mubr.bf16.mxu0 0
      %1997 = vmatmul.mubr.bf16.gmra.mrb[0].mxu0 %v732
      %v1998 = vpop.f32.mrb[0].mxu0
      %v1999 = vadd.f32 0.0, %v1998
      %v2000 = vpop.f32.mrb[0].mxu0
      %v2001 = vpop.f32.mrb[0].mxu0
      %v2002 = vadd.f32 0.0, %v2001
      %v2003 = vpop.f32.mrb[0].mxu0
      %2004 = vmatprep.mubr.bf16.mxu0 0
      %2005 = vmatmul.mubr.bf16.gmra.mrb[0].mxu0 %v735
      %v2006 = vpop.f32.mrb[0].mxu0
      %v2007 = vadd.f32 0.0, %v2006
      %v2008 = vpop.f32.mrb[0].mxu0
      %v2009 = vpop.f32.mrb[0].mxu0
      %v2010 = vadd.f32 0.0, %v2009
      %v2011 = vpop.f32.mrb[0].mxu0
      %2012 = vmatprep.mubr.bf16.mxu0 0
      %2013 = vmatmul.mubr.bf16.gmra.mrb[0].mxu0 %v1855
      %v2014 = vpop.f32.mrb[0].mxu0
      %v2015 = vadd.f32 0.0, %v2014
      %v2016 = vpop.f32.mrb[0].mxu0
      %v2017 = vpop.f32.mrb[0].mxu0
      %v2018 = vadd.f32 0.0, %v2017
      %v2019 = vpop.f32.mrb[0].mxu0
      %2020 = vdwg.mxu0
      %v2021 = vadd.f32 %v1793, %v1895
      %v2022 = vadd.f32 %v1794, %v1898
      %v2023 = vadd.f32 %v1795, %v1903
      %v2024 = vadd.f32 %v1796, %v1906
      %v2025 = vadd.f32 %v1797, %v1911
      %v2026 = vadd.f32 %v1798, %v1914
      %v2027 = vadd.f32 %v1799, %v1919
      %v2028 = vadd.f32 %v1800, %v1922
      %v2029 = vadd.f32 %v1801, %v1927
      %v2030 = vadd.f32 %v1802, %v1930
      %v2031 = vadd.f32 %v1803, %v1935
      %v2032 = vadd.f32 %v1804, %v1938
      %v2033 = vadd.f32 %v1805, %v1943
      %v2034 = vadd.f32 %v1806, %v1946
      %v2035 = vadd.f32 %v1807, %v1951
      %v2036 = vadd.f32 %v1808, %v1954
      %v2037 = vadd.f32 %v1809, %v1959
      %v2038 = vadd.f32 %v1810, %v1962
      %v2039 = vadd.f32 %v1811, %v1967
      %v2040 = vadd.f32 %v1812, %v1970
      %v2041 = vadd.f32 %v1813, %v1975
      %v2042 = vadd.f32 %v1814, %v1978
      %v2043 = vadd.f32 %v1815, %v1983
      %v2044 = vadd.f32 %v1816, %v1986
      %v2045 = vadd.f32 %v1817, %v1991
      %v2046 = vadd.f32 %v1818, %v1994
      %v2047 = vadd.f32 %v1819, %v1999
      %v2048 = vadd.f32 %v1820, %v2002
      %v2049 = vadd.f32 %v1821, %v2007
      %v2050 = vadd.f32 %v1822, %v2010
      %v2051 = vadd.f32 %v1823, %v2015
      %v2052 = vadd.f32 %v1824, %v2018
      %v2054 = vrot.slane %v244, 5
      %v2055 = vrot.slane %v2054, 4
      %v2056 = vrot.slane %v245, 5
      %v2057 = vsel %vm1212, %v2055, %v2056
      %v2058 = vrot.slane %v2056, 4
      %v2059 = vrot.slane %v246, 5
      %v2060 = vsel %vm1212, %v2058, %v2059
      %s2061 = scalar_lea.vmem %s1, 10
      %v2062 = vld [vmem:[%s2061] sm:$0x3]
      %v2063 = vunpack.c.l.b16 %v2057
      %v2064 = vunpack.c.l.b16 %v2060
      %v2065 = vpack.c.b16 %v2064, %v2063
      %v2067 = vsel %vm688, %v2065, 0
      %v2070 = vsel %vm737, %v2062, 0
      %2072 = vmatprep.subr.bf16.mxu0 0
      %2073 = vmatpush1.bf16.msra.mxu0 %v2070
      %2074 = vmatprep.subr.bf16.mxu0 0
      %2075 = vmatpush1.bf16.msra.mxu0 0
      %2076 = vmatprep.subr.bf16.mxu0 0
      %2077 = vmatpush1.bf16.msra.mxu0 0
      %2078 = vmatprep.subr.bf16.mxu0 0
      %2079 = vmatpush1.bf16.msra.mxu0 0
      %2080 = vmatprep.subr.bf16.mxu0 0
      %2081 = vmatpush1.bf16.msra.mxu0 0
      %2082 = vmatprep.subr.bf16.mxu0 0
      %2083 = vmatpush1.bf16.msra.mxu0 0
      %2084 = vmatprep.subr.bf16.mxu0 0
      %2085 = vmatpush1.bf16.msra.mxu0 0
      %2086 = vmatprep.subr.bf16.mxu0 0
      %2087 = vmatpush1.bf16.msra.mxu0 0
      %2088 = vmatprep.subr.bf16.mxu0 0
      %2089 = vmatpush1.bf16.msra.mxu0 0
      %2090 = vmatprep.subr.bf16.mxu0 0
      %2091 = vmatpush1.bf16.msra.mxu0 0
      %2092 = vmatprep.subr.bf16.mxu0 0
      %2093 = vmatpush1.bf16.msra.mxu0 0
      %2094 = vmatprep.subr.bf16.mxu0 0
      %2095 = vmatpush1.bf16.msra.mxu0 0
      %2096 = vmatprep.subr.bf16.mxu0 0
      %2097 = vmatpush1.bf16.msra.mxu0 0
      %2098 = vmatprep.subr.bf16.mxu0 0
      %2099 = vmatpush1.bf16.msra.mxu0 0
      %2100 = vmatprep.subr.bf16.mxu0 0
      %2101 = vmatpush1.bf16.msra.mxu0 0
      %2102 = vmatprep.subr.bf16.mxu0 0
      %2103 = vmatpush1.bf16.msra.mxu0 0
      %2104 = vmatprep.mubr.bf16.mxu0 0
      %2105 = vmatmul.mubr.bf16.gmra.mrb[0].mxu0 %v1379
      %v2106 = vpop.f32.mrb[0].mxu0
      %v2107 = vadd.f32 0.0, %v2106
      %v2108 = vpop.f32.mrb[0].mxu0
      %v2109 = vpop.f32.mrb[0].mxu0
      %v2110 = vadd.f32 0.0, %v2109
      %v2111 = vpop.f32.mrb[0].mxu0
      %2112 = vmatprep.mubr.bf16.mxu0 0
      %2113 = vmatmul.mubr.bf16.gmra.mrb[0].mxu0 %v1382
      %v2114 = vpop.f32.mrb[0].mxu0
      %v2115 = vadd.f32 0.0, %v2114
      %v2116 = vpop.f32.mrb[0].mxu0
      %v2117 = vpop.f32.mrb[0].mxu0
      %v2118 = vadd.f32 0.0, %v2117
      %v2119 = vpop.f32.mrb[0].mxu0
      %2120 = vmatprep.mubr.bf16.mxu0 0
      %2121 = vmatmul.mubr.bf16.gmra.mrb[0].mxu0 %v1385
      %v2122 = vpop.f32.mrb[0].mxu0
      %v2123 = vadd.f32 0.0, %v2122
      %v2124 = vpop.f32.mrb[0].mxu0
      %v2125 = vpop.f32.mrb[0].mxu0
      %v2126 = vadd.f32 0.0, %v2125
      %v2127 = vpop.f32.mrb[0].mxu0
      %2128 = vmatprep.mubr.bf16.mxu0 0
      %2129 = vmatmul.mubr.bf16.gmra.mrb[0].mxu0 %v1388
      %v2130 = vpop.f32.mrb[0].mxu0
      %v2131 = vadd.f32 0.0, %v2130
      %v2132 = vpop.f32.mrb[0].mxu0
      %v2133 = vpop.f32.mrb[0].mxu0
      %v2134 = vadd.f32 0.0, %v2133
      %v2135 = vpop.f32.mrb[0].mxu0
      %2136 = vmatprep.mubr.bf16.mxu0 0
      %2137 = vmatmul.mubr.bf16.gmra.mrb[0].mxu0 %v1391
      %v2138 = vpop.f32.mrb[0].mxu0
      %v2139 = vadd.f32 0.0, %v2138
      %v2140 = vpop.f32.mrb[0].mxu0
      %v2141 = vpop.f32.mrb[0].mxu0
      %v2142 = vadd.f32 0.0, %v2141
      %v2143 = vpop.f32.mrb[0].mxu0
      %2144 = vmatprep.mubr.bf16.mxu0 0
      %2145 = vmatmul.mubr.bf16.gmra.mrb[0].mxu0 %v1394
      %v2146 = vpop.f32.mrb[0].mxu0
      %v2147 = vadd.f32 0.0, %v2146
      %v2148 = vpop.f32.mrb[0].mxu0
      %v2149 = vpop.f32.mrb[0].mxu0
      %v2150 = vadd.f32 0.0, %v2149
      %v2151 = vpop.f32.mrb[0].mxu0
      %2152 = vmatprep.mubr.bf16.mxu0 0
      %2153 = vmatmul.mubr.bf16.gmra.mrb[0].mxu0 %v1397
      %v2154 = vpop.f32.mrb[0].mxu0
      %v2155 = vadd.f32 0.0, %v2154
      %v2156 = vpop.f32.mrb[0].mxu0
      %v2157 = vpop.f32.mrb[0].mxu0
      %v2158 = vadd.f32 0.0, %v2157
      %v2159 = vpop.f32.mrb[0].mxu0
      %2160 = vmatprep.mubr.bf16.mxu0 0
      %2161 = vmatmul.mubr.bf16.gmra.mrb[0].mxu0 %v1400
      %v2162 = vpop.f32.mrb[0].mxu0
      %v2163 = vadd.f32 0.0, %v2162
      %v2164 = vpop.f32.mrb[0].mxu0
      %v2165 = vpop.f32.mrb[0].mxu0
      %v2166 = vadd.f32 0.0, %v2165
      %v2167 = vpop.f32.mrb[0].mxu0
      %2168 = vmatprep.mubr.bf16.mxu0 0
      %2169 = vmatmul.mubr.bf16.gmra.mrb[0].mxu0 %v1403
      %v2170 = vpop.f32.mrb[0].mxu0
      %v2171 = vadd.f32 0.0, %v2170
      %v2172 = vpop.f32.mrb[0].mxu0
      %v2173 = vpop.f32.mrb[0].mxu0
      %v2174 = vadd.f32 0.0, %v2173
      %v2175 = vpop.f32.mrb[0].mxu0
      %2176 = vmatprep.mubr.bf16.mxu0 0
      %2177 = vmatmul.mubr.bf16.gmra.mrb[0].mxu0 %v1406
      %v2178 = vpop.f32.mrb[0].mxu0
      %v2179 = vadd.f32 0.0, %v2178
      %v2180 = vpop.f32.mrb[0].mxu0
      %v2181 = vpop.f32.mrb[0].mxu0
      %v2182 = vadd.f32 0.0, %v2181
      %v2183 = vpop.f32.mrb[0].mxu0
      %2184 = vmatprep.mubr.bf16.mxu0 0
      %2185 = vmatmul.mubr.bf16.gmra.mrb[0].mxu0 %v1409
      %v2186 = vpop.f32.mrb[0].mxu0
      %v2187 = vadd.f32 0.0, %v2186
      %v2188 = vpop.f32.mrb[0].mxu0
      %v2189 = vpop.f32.mrb[0].mxu0
      %v2190 = vadd.f32 0.0, %v2189
      %v2191 = vpop.f32.mrb[0].mxu0
      %2192 = vmatprep.mubr.bf16.mxu0 0
      %2193 = vmatmul.mubr.bf16.gmra.mrb[0].mxu0 %v1412
      %v2194 = vpop.f32.mrb[0].mxu0
      %v2195 = vadd.f32 0.0, %v2194
      %v2196 = vpop.f32.mrb[0].mxu0
      %v2197 = vpop.f32.mrb[0].mxu0
      %v2198 = vadd.f32 0.0, %v2197
      %v2199 = vpop.f32.mrb[0].mxu0
      %2200 = vmatprep.mubr.bf16.mxu0 0
      %2201 = vmatmul.mubr.bf16.gmra.mrb[0].mxu0 %v1415
      %v2202 = vpop.f32.mrb[0].mxu0
      %v2203 = vadd.f32 0.0, %v2202
      %v2204 = vpop.f32.mrb[0].mxu0
      %v2205 = vpop.f32.mrb[0].mxu0
      %v2206 = vadd.f32 0.0, %v2205
      %v2207 = vpop.f32.mrb[0].mxu0
      %2208 = vmatprep.mubr.bf16.mxu0 0
      %2209 = vmatmul.mubr.bf16.gmra.mrb[0].mxu0 %v1418
      %v2210 = vpop.f32.mrb[0].mxu0
      %v2211 = vadd.f32 0.0, %v2210
      %v2212 = vpop.f32.mrb[0].mxu0
      %v2213 = vpop.f32.mrb[0].mxu0
      %v2214 = vadd.f32 0.0, %v2213
      %v2215 = vpop.f32.mrb[0].mxu0
      %2216 = vmatprep.mubr.bf16.mxu0 0
      %2217 = vmatmul.mubr.bf16.gmra.mrb[0].mxu0 %v1421
      %v2218 = vpop.f32.mrb[0].mxu0
      %v2219 = vadd.f32 0.0, %v2218
      %v2220 = vpop.f32.mrb[0].mxu0
      %v2221 = vpop.f32.mrb[0].mxu0
      %v2222 = vadd.f32 0.0, %v2221
      %v2223 = vpop.f32.mrb[0].mxu0
      %2224 = vmatprep.mubr.bf16.mxu0 0
      %2225 = vmatmul.mubr.bf16.gmra.mrb[0].mxu0 %v2067
      %v2226 = vpop.f32.mrb[0].mxu0
      %v2227 = vadd.f32 0.0, %v2226
      %v2228 = vpop.f32.mrb[0].mxu0
      %v2229 = vpop.f32.mrb[0].mxu0
      %v2230 = vadd.f32 0.0, %v2229
      %v2231 = vpop.f32.mrb[0].mxu0
      %2232 = vdwg.mxu0
      %v2233 = vadd.f32 %v2021, %v2107
      %v2234 = vadd.f32 %v2022, %v2110
      %v2235 = vadd.f32 %v2023, %v2115
      %v2236 = vadd.f32 %v2024, %v2118
      %v2237 = vadd.f32 %v2025, %v2123
      %v2238 = vadd.f32 %v2026, %v2126
      %v2239 = vadd.f32 %v2027, %v2131
      %v2240 = vadd.f32 %v2028, %v2134
      %v2241 = vadd.f32 %v2029, %v2139
      %v2242 = vadd.f32 %v2030, %v2142
      %v2243 = vadd.f32 %v2031, %v2147
      %v2244 = vadd.f32 %v2032, %v2150
      %v2245 = vadd.f32 %v2033, %v2155
      %v2246 = vadd.f32 %v2034, %v2158
      %v2247 = vadd.f32 %v2035, %v2163
      %v2248 = vadd.f32 %v2036, %v2166
      %v2249 = vadd.f32 %v2037, %v2171
      %v2250 = vadd.f32 %v2038, %v2174
      %v2251 = vadd.f32 %v2039, %v2179
      %v2252 = vadd.f32 %v2040, %v2182
      %v2253 = vadd.f32 %v2041, %v2187
      %v2254 = vadd.f32 %v2042, %v2190
      %v2255 = vadd.f32 %v2043, %v2195
      %v2256 = vadd.f32 %v2044, %v2198
      %v2257 = vadd.f32 %v2045, %v2203
      %v2258 = vadd.f32 %v2046, %v2206
      %v2259 = vadd.f32 %v2047, %v2211
      %v2260 = vadd.f32 %v2048, %v2214
      %v2261 = vadd.f32 %v2049, %v2219
      %v2262 = vadd.f32 %v2050, %v2222
      %v2263 = vadd.f32 %v2051, %v2227
      %v2264 = vadd.f32 %v2052, %v2230
      %s2265 = scalar_lea.vmem %s1, 12
      %v2266 = vld [vmem:[%s2265] sm:$0x3]
      %v2269 = vunpack.c.l.b16 %v247
      %v2270 = vunpack.c.l.b16 %v248
      %v2271 = vpack.c.b16 %v2270, %v2269
      %v2273 = vsel %vm688, %v2271, 0
      %v2276 = vsel %vm737, %v2266, 0
      %2278 = vmatprep.subr.bf16.mxu0 0
      %2279 = vmatpush1.bf16.msra.mxu0 %v2276
      %2280 = vmatprep.subr.bf16.mxu0 0
      %2281 = vmatpush1.bf16.msra.mxu0 0
      %2282 = vmatprep.subr.bf16.mxu0 0
      %2283 = vmatpush1.bf16.msra.mxu0 0
      %2284 = vmatprep.subr.bf16.mxu0 0
      %2285 = vmatpush1.bf16.msra.mxu0 0
      %2286 = vmatprep.subr.bf16.mxu0 0
      %2287 = vmatpush1.bf16.msra.mxu0 0
      %2288 = vmatprep.subr.bf16.mxu0 0
      %2289 = vmatpush1.bf16.msra.mxu0 0
      %2290 = vmatprep.subr.bf16.mxu0 0
      %2291 = vmatpush1.bf16.msra.mxu0 0
      %2292 = vmatprep.subr.bf16.mxu0 0
      %2293 = vmatpush1.bf16.msra.mxu0 0
      %2294 = vmatprep.subr.bf16.mxu0 0
      %2295 = vmatpush1.bf16.msra.mxu0 0
      %2296 = vmatprep.subr.bf16.mxu0 0
      %2297 = vmatpush1.bf16.msra.mxu0 0
      %2298 = vmatprep.subr.bf16.mxu0 0
      %2299 = vmatpush1.bf16.msra.mxu0 0
      %2300 = vmatprep.subr.bf16.mxu0 0
      %2301 = vmatpush1.bf16.msra.mxu0 0
      %2302 = vmatprep.subr.bf16.mxu0 0
      %2303 = vmatpush1.bf16.msra.mxu0 0
      %2304 = vmatprep.subr.bf16.mxu0 0
      %2305 = vmatpush1.bf16.msra.mxu0 0
      %2306 = vmatprep.subr.bf16.mxu0 0
      %2307 = vmatpush1.bf16.msra.mxu0 0
      %2308 = vmatprep.subr.bf16.mxu0 0
      %2309 = vmatpush1.bf16.msra.mxu0 0
      %2310 = vmatprep.mubr.bf16.mxu0 0
      %2311 = vmatmul.mubr.bf16.gmra.mrb[0].mxu0 %v989
      %v2312 = vpop.f32.mrb[0].mxu0
      %v2313 = vadd.f32 0.0, %v2312
      %v2314 = vpop.f32.mrb[0].mxu0
      %v2315 = vpop.f32.mrb[0].mxu0
      %v2316 = vadd.f32 0.0, %v2315
      %v2317 = vpop.f32.mrb[0].mxu0
      %2318 = vmatprep.mubr.bf16.mxu0 0
      %2319 = vmatmul.mubr.bf16.gmra.mrb[0].mxu0 %v992
      %v2320 = vpop.f32.mrb[0].mxu0
      %v2321 = vadd.f32 0.0, %v2320
      %v2322 = vpop.f32.mrb[0].mxu0
      %v2323 = vpop.f32.mrb[0].mxu0
      %v2324 = vadd.f32 0.0, %v2323
      %v2325 = vpop.f32.mrb[0].mxu0
      %2326 = vmatprep.mubr.bf16.mxu0 0
      %2327 = vmatmul.mubr.bf16.gmra.mrb[0].mxu0 %v995
      %v2328 = vpop.f32.mrb[0].mxu0
      %v2329 = vadd.f32 0.0, %v2328
      %v2330 = vpop.f32.mrb[0].mxu0
      %v2331 = vpop.f32.mrb[0].mxu0
      %v2332 = vadd.f32 0.0, %v2331
      %v2333 = vpop.f32.mrb[0].mxu0
      %2334 = vmatprep.mubr.bf16.mxu0 0
      %2335 = vmatmul.mubr.bf16.gmra.mrb[0].mxu0 %v998
      %v2336 = vpop.f32.mrb[0].mxu0
      %v2337 = vadd.f32 0.0, %v2336
      %v2338 = vpop.f32.mrb[0].mxu0
      %v2339 = vpop.f32.mrb[0].mxu0
      %v2340 = vadd.f32 0.0, %v2339
      %v2341 = vpop.f32.mrb[0].mxu0
      %2342 = vmatprep.mubr.bf16.mxu0 0
      %2343 = vmatmul.mubr.bf16.gmra.mrb[0].mxu0 %v1001
      %v2344 = vpop.f32.mrb[0].mxu0
      %v2345 = vadd.f32 0.0, %v2344
      %v2346 = vpop.f32.mrb[0].mxu0
      %v2347 = vpop.f32.mrb[0].mxu0
      %v2348 = vadd.f32 0.0, %v2347
      %v2349 = vpop.f32.mrb[0].mxu0
      %2350 = vmatprep.mubr.bf16.mxu0 0
      %2351 = vmatmul.mubr.bf16.gmra.mrb[0].mxu0 %v1004
      %v2352 = vpop.f32.mrb[0].mxu0
      %v2353 = vadd.f32 0.0, %v2352
      %v2354 = vpop.f32.mrb[0].mxu0
      %v2355 = vpop.f32.mrb[0].mxu0
      %v2356 = vadd.f32 0.0, %v2355
      %v2357 = vpop.f32.mrb[0].mxu0
      %2358 = vmatprep.mubr.bf16.mxu0 0
      %2359 = vmatmul.mubr.bf16.gmra.mrb[0].mxu0 %v1007
      %v2360 = vpop.f32.mrb[0].mxu0
      %v2361 = vadd.f32 0.0, %v2360
      %v2362 = vpop.f32.mrb[0].mxu0
      %v2363 = vpop.f32.mrb[0].mxu0
      %v2364 = vadd.f32 0.0, %v2363
      %v2365 = vpop.f32.mrb[0].mxu0
      %2366 = vmatprep.mubr.bf16.mxu0 0
      %2367 = vmatmul.mubr.bf16.gmra.mrb[0].mxu0 %v1010
      %v2368 = vpop.f32.mrb[0].mxu0
      %v2369 = vadd.f32 0.0, %v2368
      %v2370 = vpop.f32.mrb[0].mxu0
      %v2371 = vpop.f32.mrb[0].mxu0
      %v2372 = vadd.f32 0.0, %v2371
      %v2373 = vpop.f32.mrb[0].mxu0
      %2374 = vmatprep.mubr.bf16.mxu0 0
      %2375 = vmatmul.mubr.bf16.gmra.mrb[0].mxu0 %v1013
      %v2376 = vpop.f32.mrb[0].mxu0
      %v2377 = vadd.f32 0.0, %v2376
      %v2378 = vpop.f32.mrb[0].mxu0
      %v2379 = vpop.f32.mrb[0].mxu0
      %v2380 = vadd.f32 0.0, %v2379
      %v2381 = vpop.f32.mrb[0].mxu0
      %2382 = vmatprep.mubr.bf16.mxu0 0
      %2383 = vmatmul.mubr.bf16.gmra.mrb[0].mxu0 %v1016
      %v2384 = vpop.f32.mrb[0].mxu0
      %v2385 = vadd.f32 0.0, %v2384
      %v2386 = vpop.f32.mrb[0].mxu0
      %v2387 = vpop.f32.mrb[0].mxu0
      %v2388 = vadd.f32 0.0, %v2387
      %v2389 = vpop.f32.mrb[0].mxu0
      %2390 = vmatprep.mubr.bf16.mxu0 0
      %2391 = vmatmul.mubr.bf16.gmra.mrb[0].mxu0 %v1019
      %v2392 = vpop.f32.mrb[0].mxu0
      %v2393 = vadd.f32 0.0, %v2392
      %v2394 = vpop.f32.mrb[0].mxu0
      %v2395 = vpop.f32.mrb[0].mxu0
      %v2396 = vadd.f32 0.0, %v2395
      %v2397 = vpop.f32.mrb[0].mxu0
      %2398 = vmatprep.mubr.bf16.mxu0 0
      %2399 = vmatmul.mubr.bf16.gmra.mrb[0].mxu0 %v1022
      %v2400 = vpop.f32.mrb[0].mxu0
      %v2401 = vadd.f32 0.0, %v2400
      %v2402 = vpop.f32.mrb[0].mxu0
      %v2403 = vpop.f32.mrb[0].mxu0
      %v2404 = vadd.f32 0.0, %v2403
      %v2405 = vpop.f32.mrb[0].mxu0
      %2406 = vmatprep.mubr.bf16.mxu0 0
      %2407 = vmatmul.mubr.bf16.gmra.mrb[0].mxu0 %v1025
      %v2408 = vpop.f32.mrb[0].mxu0
      %v2409 = vadd.f32 0.0, %v2408
      %v2410 = vpop.f32.mrb[0].mxu0
      %v2411 = vpop.f32.mrb[0].mxu0
      %v2412 = vadd.f32 0.0, %v2411
      %v2413 = vpop.f32.mrb[0].mxu0
      %2414 = vmatprep.mubr.bf16.mxu0 0
      %2415 = vmatmul.mubr.bf16.gmra.mrb[0].mxu0 %v1028
      %v2416 = vpop.f32.mrb[0].mxu0
      %v2417 = vadd.f32 0.0, %v2416
      %v2418 = vpop.f32.mrb[0].mxu0
      %v2419 = vpop.f32.mrb[0].mxu0
      %v2420 = vadd.f32 0.0, %v2419
      %v2421 = vpop.f32.mrb[0].mxu0
      %2422 = vmatprep.mubr.bf16.mxu0 0
      %2423 = vmatmul.mubr.bf16.gmra.mrb[0].mxu0 %v1627
      %v2424 = vpop.f32.mrb[0].mxu0
      %v2425 = vadd.f32 0.0, %v2424
      %v2426 = vpop.f32.mrb[0].mxu0
      %v2427 = vpop.f32.mrb[0].mxu0
      %v2428 = vadd.f32 0.0, %v2427
      %v2429 = vpop.f32.mrb[0].mxu0
      %2430 = vmatprep.mubr.bf16.mxu0 0
      %2431 = vmatmul.mubr.bf16.gmra.mrb[0].mxu0 %v2273
      %v2432 = vpop.f32.mrb[0].mxu0
      %v2433 = vadd.f32 0.0, %v2432
      %v2434 = vpop.f32.mrb[0].mxu0
      %v2435 = vpop.f32.mrb[0].mxu0
      %v2436 = vadd.f32 0.0, %v2435
      %v2437 = vpop.f32.mrb[0].mxu0
      %2438 = vdwg.mxu0
      %v2439 = vadd.f32 %v2233, %v2313
      %v2440 = vadd.f32 %v2234, %v2316
      %v2441 = vadd.f32 %v2235, %v2321
      %v2442 = vadd.f32 %v2236, %v2324
      %v2443 = vadd.f32 %v2237, %v2329
      %v2444 = vadd.f32 %v2238, %v2332
      %v2445 = vadd.f32 %v2239, %v2337
      %v2446 = vadd.f32 %v2240, %v2340
      %v2447 = vadd.f32 %v2241, %v2345
      %v2448 = vadd.f32 %v2242, %v2348
      %v2449 = vadd.f32 %v2243, %v2353
      %v2450 = vadd.f32 %v2244, %v2356
      %v2451 = vadd.f32 %v2245, %v2361
      %v2452 = vadd.f32 %v2246, %v2364
      %v2453 = vadd.f32 %v2247, %v2369
      %v2454 = vadd.f32 %v2248, %v2372
      %v2455 = vadd.f32 %v2249, %v2377
      %v2456 = vadd.f32 %v2250, %v2380
      %v2457 = vadd.f32 %v2251, %v2385
      %v2458 = vadd.f32 %v2252, %v2388
      %v2459 = vadd.f32 %v2253, %v2393
      %v2460 = vadd.f32 %v2254, %v2396
      %v2461 = vadd.f32 %v2255, %v2401
      %v2462 = vadd.f32 %v2256, %v2404
      %v2463 = vadd.f32 %v2257, %v2409
      %v2464 = vadd.f32 %v2258, %v2412
      %v2465 = vadd.f32 %v2259, %v2417
      %v2466 = vadd.f32 %v2260, %v2420
      %v2467 = vadd.f32 %v2261, %v2425
      %v2468 = vadd.f32 %v2262, %v2428
      %v2469 = vadd.f32 %v2263, %v2433
      %v2470 = vadd.f32 %v2264, %v2436
      %v2472 = vshrl.u32 %v247, 16
      %v2474 = vrot.slane %v2472, 4
      %v2475 = vshll.u32 %v247, 16
      %v2477 = vrot.slane %v2475, 5
      %v2478 = vor.u32 %v2474, %v2477
      %v2479 = vrot.slane %v2478, 4
      %v2481 = vshll.u32 %v248, 16
      %v2483 = vrot.slane %v2481, 5
      %v2484 = vsel %vm253, %v2479, %v2483
      %v2485 = vshrl.u32 %v248, 16
      %v2487 = vrot.slane %v2485, 4
      %v2488 = vor.u32 %v2487, %v2483
      %v2489 = vrot.slane %v2488, 4
      %v2491 = vshll.u32 %v249, 16
      %v2493 = vrot.slane %v2491, 5
      %v2494 = vsel %vm253, %v2489, %v2493
      %s2495 = scalar_lea.vmem %s1, 14
      %v2496 = vld [vmem:[%s2495] sm:$0x3]
      %v2497 = vunpack.c.l.b16 %v2484
      %v2498 = vunpack.c.l.b16 %v2494
      %v2499 = vpack.c.b16 %v2498, %v2497
      %v2501 = vsel %vm688, %v2499, 0
      %v2504 = vsel %vm737, %v2496, 0
      %2506 = vmatprep.subr.bf16.mxu0 0
      %2507 = vmatpush1.bf16.msra.mxu0 %v2504
      %2508 = vmatprep.subr.bf16.mxu0 0
      %2509 = vmatpush1.bf16.msra.mxu0 0
      %2510 = vmatprep.subr.bf16.mxu0 0
      %2511 = vmatpush1.bf16.msra.mxu0 0
      %2512 = vmatprep.subr.bf16.mxu0 0
      %2513 = vmatpush1.bf16.msra.mxu0 0
      %2514 = vmatprep.subr.bf16.mxu0 0
      %2515 = vmatpush1.bf16.msra.mxu0 0
      %2516 = vmatprep.subr.bf16.mxu0 0
      %2517 = vmatpush1.bf16.msra.mxu0 0
      %2518 = vmatprep.subr.bf16.mxu0 0
      %2519 = vmatpush1.bf16.msra.mxu0 0
      %2520 = vmatprep.subr.bf16.mxu0 0
      %2521 = vmatpush1.bf16.msra.mxu0 0
      %2522 = vmatprep.subr.bf16.mxu0 0
      %2523 = vmatpush1.bf16.msra.mxu0 0
      %2524 = vmatprep.subr.bf16.mxu0 0
      %2525 = vmatpush1.bf16.msra.mxu0 0
      %2526 = vmatprep.subr.bf16.mxu0 0
      %2527 = vmatpush1.bf16.msra.mxu0 0
      %2528 = vmatprep.subr.bf16.mxu0 0
      %2529 = vmatpush1.bf16.msra.mxu0 0
      %2530 = vmatprep.subr.bf16.mxu0 0
      %2531 = vmatpush1.bf16.msra.mxu0 0
      %2532 = vmatprep.subr.bf16.mxu0 0
      %2533 = vmatpush1.bf16.msra.mxu0 0
      %2534 = vmatprep.subr.bf16.mxu0 0
      %2535 = vmatpush1.bf16.msra.mxu0 0
      %2536 = vmatprep.subr.bf16.mxu0 0
      %2537 = vmatpush1.bf16.msra.mxu0 0
      %2538 = vmatprep.mubr.bf16.mxu0 0
      %2539 = vmatmul.mubr.bf16.gmra.mrb[0].mxu0 %v696
      %v2540 = vpop.f32.mrb[0].mxu0
      %v2541 = vadd.f32 0.0, %v2540
      %v2542 = vpop.f32.mrb[0].mxu0
      %v2543 = vpop.f32.mrb[0].mxu0
      %v2544 = vadd.f32 0.0, %v2543
      %v2545 = vpop.f32.mrb[0].mxu0
      %2546 = vmatprep.mubr.bf16.mxu0 0
      %2547 = vmatmul.mubr.bf16.gmra.mrb[0].mxu0 %v699
      %v2548 = vpop.f32.mrb[0].mxu0
      %v2549 = vadd.f32 0.0, %v2548
      %v2550 = vpop.f32.mrb[0].mxu0
      %v2551 = vpop.f32.mrb[0].mxu0
      %v2552 = vadd.f32 0.0, %v2551
      %v2553 = vpop.f32.mrb[0].mxu0
      %2554 = vmatprep.mubr.bf16.mxu0 0
      %2555 = vmatmul.mubr.bf16.gmra.mrb[0].mxu0 %v702
      %v2556 = vpop.f32.mrb[0].mxu0
      %v2557 = vadd.f32 0.0, %v2556
      %v2558 = vpop.f32.mrb[0].mxu0
      %v2559 = vpop.f32.mrb[0].mxu0
      %v2560 = vadd.f32 0.0, %v2559
      %v2561 = vpop.f32.mrb[0].mxu0
      %2562 = vmatprep.mubr.bf16.mxu0 0
      %2563 = vmatmul.mubr.bf16.gmra.mrb[0].mxu0 %v705
      %v2564 = vpop.f32.mrb[0].mxu0
      %v2565 = vadd.f32 0.0, %v2564
      %v2566 = vpop.f32.mrb[0].mxu0
      %v2567 = vpop.f32.mrb[0].mxu0
      %v2568 = vadd.f32 0.0, %v2567
      %v2569 = vpop.f32.mrb[0].mxu0
      %2570 = vmatprep.mubr.bf16.mxu0 0
      %2571 = vmatmul.mubr.bf16.gmra.mrb[0].mxu0 %v708
      %v2572 = vpop.f32.mrb[0].mxu0
      %v2573 = vadd.f32 0.0, %v2572
      %v2574 = vpop.f32.mrb[0].mxu0
      %v2575 = vpop.f32.mrb[0].mxu0
      %v2576 = vadd.f32 0.0, %v2575
      %v2577 = vpop.f32.mrb[0].mxu0
      %2578 = vmatprep.mubr.bf16.mxu0 0
      %2579 = vmatmul.mubr.bf16.gmra.mrb[0].mxu0 %v711
      %v2580 = vpop.f32.mrb[0].mxu0
      %v2581 = vadd.f32 0.0, %v2580
      %v2582 = vpop.f32.mrb[0].mxu0
      %v2583 = vpop.f32.mrb[0].mxu0
      %v2584 = vadd.f32 0.0, %v2583
      %v2585 = vpop.f32.mrb[0].mxu0
      %2586 = vmatprep.mubr.bf16.mxu0 0
      %2587 = vmatmul.mubr.bf16.gmra.mrb[0].mxu0 %v714
      %v2588 = vpop.f32.mrb[0].mxu0
      %v2589 = vadd.f32 0.0, %v2588
      %v2590 = vpop.f32.mrb[0].mxu0
      %v2591 = vpop.f32.mrb[0].mxu0
      %v2592 = vadd.f32 0.0, %v2591
      %v2593 = vpop.f32.mrb[0].mxu0
      %2594 = vmatprep.mubr.bf16.mxu0 0
      %2595 = vmatmul.mubr.bf16.gmra.mrb[0].mxu0 %v717
      %v2596 = vpop.f32.mrb[0].mxu0
      %v2597 = vadd.f32 0.0, %v2596
      %v2598 = vpop.f32.mrb[0].mxu0
      %v2599 = vpop.f32.mrb[0].mxu0
      %v2600 = vadd.f32 0.0, %v2599
      %v2601 = vpop.f32.mrb[0].mxu0
      %2602 = vmatprep.mubr.bf16.mxu0 0
      %2603 = vmatmul.mubr.bf16.gmra.mrb[0].mxu0 %v720
      %v2604 = vpop.f32.mrb[0].mxu0
      %v2605 = vadd.f32 0.0, %v2604
      %v2606 = vpop.f32.mrb[0].mxu0
      %v2607 = vpop.f32.mrb[0].mxu0
      %v2608 = vadd.f32 0.0, %v2607
      %v2609 = vpop.f32.mrb[0].mxu0
      %2610 = vmatprep.mubr.bf16.mxu0 0
      %2611 = vmatmul.mubr.bf16.gmra.mrb[0].mxu0 %v723
      %v2612 = vpop.f32.mrb[0].mxu0
      %v2613 = vadd.f32 0.0, %v2612
      %v2614 = vpop.f32.mrb[0].mxu0
      %v2615 = vpop.f32.mrb[0].mxu0
      %v2616 = vadd.f32 0.0, %v2615
      %v2617 = vpop.f32.mrb[0].mxu0
      %2618 = vmatprep.mubr.bf16.mxu0 0
      %2619 = vmatmul.mubr.bf16.gmra.mrb[0].mxu0 %v726
      %v2620 = vpop.f32.mrb[0].mxu0
      %v2621 = vadd.f32 0.0, %v2620
      %v2622 = vpop.f32.mrb[0].mxu0
      %v2623 = vpop.f32.mrb[0].mxu0
      %v2624 = vadd.f32 0.0, %v2623
      %v2625 = vpop.f32.mrb[0].mxu0
      %2626 = vmatprep.mubr.bf16.mxu0 0
      %2627 = vmatmul.mubr.bf16.gmra.mrb[0].mxu0 %v729
      %v2628 = vpop.f32.mrb[0].mxu0
      %v2629 = vadd.f32 0.0, %v2628
      %v2630 = vpop.f32.mrb[0].mxu0
      %v2631 = vpop.f32.mrb[0].mxu0
      %v2632 = vadd.f32 0.0, %v2631
      %v2633 = vpop.f32.mrb[0].mxu0
      %2634 = vmatprep.mubr.bf16.mxu0 0
      %2635 = vmatmul.mubr.bf16.gmra.mrb[0].mxu0 %v732
      %v2636 = vpop.f32.mrb[0].mxu0
      %v2637 = vadd.f32 0.0, %v2636
      %v2638 = vpop.f32.mrb[0].mxu0
      %v2639 = vpop.f32.mrb[0].mxu0
      %v2640 = vadd.f32 0.0, %v2639
      %v2641 = vpop.f32.mrb[0].mxu0
      %2642 = vmatprep.mubr.bf16.mxu0 0
      %2643 = vmatmul.mubr.bf16.gmra.mrb[0].mxu0 %v735
      %v2644 = vpop.f32.mrb[0].mxu0
      %v2645 = vadd.f32 0.0, %v2644
      %v2646 = vpop.f32.mrb[0].mxu0
      %v2647 = vpop.f32.mrb[0].mxu0
      %v2648 = vadd.f32 0.0, %v2647
      %v2649 = vpop.f32.mrb[0].mxu0
      %2650 = vmatprep.mubr.bf16.mxu0 0
      %2651 = vmatmul.mubr.bf16.gmra.mrb[0].mxu0 %v1855
      %v2652 = vpop.f32.mrb[0].mxu0
      %v2653 = vadd.f32 0.0, %v2652
      %v2654 = vpop.f32.mrb[0].mxu0
      %v2655 = vpop.f32.mrb[0].mxu0
      %v2656 = vadd.f32 0.0, %v2655
      %v2657 = vpop.f32.mrb[0].mxu0
      %2658 = vmatprep.mubr.bf16.mxu0 0
      %2659 = vmatmul.mubr.bf16.gmra.mrb[0].mxu0 %v2501
      %v2660 = vpop.f32.mrb[0].mxu0
      %v2661 = vadd.f32 0.0, %v2660
      %v2662 = vpop.f32.mrb[0].mxu0
      %v2663 = vpop.f32.mrb[0].mxu0
      %v2664 = vadd.f32 0.0, %v2663
      %v2665 = vpop.f32.mrb[0].mxu0
      %2666 = vdwg.mxu0
      %v2667 = vadd.f32 %v2439, %v2541
      %v2668 = vadd.f32 %v2440, %v2544
      %v2669 = vadd.f32 %v2441, %v2549
      %v2670 = vadd.f32 %v2442, %v2552
      %v2671 = vadd.f32 %v2443, %v2557
      %v2672 = vadd.f32 %v2444, %v2560
      %v2673 = vadd.f32 %v2445, %v2565
      %v2674 = vadd.f32 %v2446, %v2568
      %v2675 = vadd.f32 %v2447, %v2573
      %v2676 = vadd.f32 %v2448, %v2576
      %v2677 = vadd.f32 %v2449, %v2581
      %v2678 = vadd.f32 %v2450, %v2584
      %v2679 = vadd.f32 %v2451, %v2589
      %v2680 = vadd.f32 %v2452, %v2592
      %v2681 = vadd.f32 %v2453, %v2597
      %v2682 = vadd.f32 %v2454, %v2600
      %v2683 = vadd.f32 %v2455, %v2605
      %v2684 = vadd.f32 %v2456, %v2608
      %v2685 = vadd.f32 %v2457, %v2613
      %v2686 = vadd.f32 %v2458, %v2616
      %v2687 = vadd.f32 %v2459, %v2621
      %v2688 = vadd.f32 %v2460, %v2624
      %v2689 = vadd.f32 %v2461, %v2629
      %v2690 = vadd.f32 %v2462, %v2632
      %v2691 = vadd.f32 %v2463, %v2637
      %v2692 = vadd.f32 %v2464, %v2640
      %v2693 = vadd.f32 %v2465, %v2645
      %v2694 = vadd.f32 %v2466, %v2648
      %v2695 = vadd.f32 %v2467, %v2653
      %v2696 = vadd.f32 %v2468, %v2656
      %v2697 = vadd.f32 %v2469, %v2661
      %v2698 = vadd.f32 %v2470, %v2664
      %v2700 = vrot.slane %v247, 5
      %v2701 = vrot.slane %v2700, 4
      %v2702 = vrot.slane %v248, 5
      %v2703 = vsel %vm1212, %v2701, %v2702
      %v2704 = vrot.slane %v2702, 4
      %v2705 = vrot.slane %v249, 5
      %v2706 = vsel %vm1212, %v2704, %v2705
      %s2707 = scalar_lea.vmem %s1, 16
      %v2708 = vld [vmem:[%s2707] sm:$0x3]
      %v2709 = vunpack.c.l.b16 %v2703
      %v2710 = vunpack.c.l.b16 %v2706
      %v2711 = vpack.c.b16 %v2710, %v2709
      %v2713 = vsel %vm688, %v2711, 0
      %v2716 = vsel %vm737, %v2708, 0
      %2718 = vmatprep.subr.bf16.mxu0 0
      %2719 = vmatpush1.bf16.msra.mxu0 %v2716
      %2720 = vmatprep.subr.bf16.mxu0 0
      %2721 = vmatpush1.bf16.msra.mxu0 0
      %2722 = vmatprep.subr.bf16.mxu0 0
      %2723 = vmatpush1.bf16.msra.mxu0 0
      %2724 = vmatprep.subr.bf16.mxu0 0
      %2725 = vmatpush1.bf16.msra.mxu0 0
      %2726 = vmatprep.subr.bf16.mxu0 0
      %2727 = vmatpush1.bf16.msra.mxu0 0
      %2728 = vmatprep.subr.bf16.mxu0 0
      %2729 = vmatpush1.bf16.msra.mxu0 0
      %2730 = vmatprep.subr.bf16.mxu0 0
      %2731 = vmatpush1.bf16.msra.mxu0 0
      %2732 = vmatprep.subr.bf16.mxu0 0
      %2733 = vmatpush1.bf16.msra.mxu0 0
      %2734 = vmatprep.subr.bf16.mxu0 0
      %2735 = vmatpush1.bf16.msra.mxu0 0
      %2736 = vmatprep.subr.bf16.mxu0 0
      %2737 = vmatpush1.bf16.msra.mxu0 0
      %2738 = vmatprep.subr.bf16.mxu0 0
      %2739 = vmatpush1.bf16.msra.mxu0 0
      %2740 = vmatprep.subr.bf16.mxu0 0
      %2741 = vmatpush1.bf16.msra.mxu0 0
      %2742 = vmatprep.subr.bf16.mxu0 0
      %2743 = vmatpush1.bf16.msra.mxu0 0
      %2744 = vmatprep.subr.bf16.mxu0 0
      %2745 = vmatpush1.bf16.msra.mxu0 0
      %2746 = vmatprep.subr.bf16.mxu0 0
      %2747 = vmatpush1.bf16.msra.mxu0 0
      %2748 = vmatprep.subr.bf16.mxu0 0
      %2749 = vmatpush1.bf16.msra.mxu0 0
      %2750 = vmatprep.mubr.bf16.mxu0 0
      %2751 = vmatmul.mubr.bf16.gmra.mrb[0].mxu0 %v1382
      %v2752 = vpop.f32.mrb[0].mxu0
      %v2753 = vadd.f32 0.0, %v2752
      %v2754 = vpop.f32.mrb[0].mxu0
      %v2755 = vpop.f32.mrb[0].mxu0
      %v2756 = vadd.f32 0.0, %v2755
      %v2757 = vpop.f32.mrb[0].mxu0
      %2758 = vmatprep.mubr.bf16.mxu0 0
      %2759 = vmatmul.mubr.bf16.gmra.mrb[0].mxu0 %v1385
      %v2760 = vpop.f32.mrb[0].mxu0
      %v2761 = vadd.f32 0.0, %v2760
      %v2762 = vpop.f32.mrb[0].mxu0
      %v2763 = vpop.f32.mrb[0].mxu0
      %v2764 = vadd.f32 0.0, %v2763
      %v2765 = vpop.f32.mrb[0].mxu0
      %2766 = vmatprep.mubr.bf16.mxu0 0
      %2767 = vmatmul.mubr.bf16.gmra.mrb[0].mxu0 %v1388
      %v2768 = vpop.f32.mrb[0].mxu0
      %v2769 = vadd.f32 0.0, %v2768
      %v2770 = vpop.f32.mrb[0].mxu0
      %v2771 = vpop.f32.mrb[0].mxu0
      %v2772 = vadd.f32 0.0, %v2771
      %v2773 = vpop.f32.mrb[0].mxu0
      %2774 = vmatprep.mubr.bf16.mxu0 0
      %2775 = vmatmul.mubr.bf16.gmra.mrb[0].mxu0 %v1391
      %v2776 = vpop.f32.mrb[0].mxu0
      %v2777 = vadd.f32 0.0, %v2776
      %v2778 = vpop.f32.mrb[0].mxu0
      %v2779 = vpop.f32.mrb[0].mxu0
      %v2780 = vadd.f32 0.0, %v2779
      %v2781 = vpop.f32.mrb[0].mxu0
      %2782 = vmatprep.mubr.bf16.mxu0 0
      %2783 = vmatmul.mubr.bf16.gmra.mrb[0].mxu0 %v1394
      %v2784 = vpop.f32.mrb[0].mxu0
      %v2785 = vadd.f32 0.0, %v2784
      %v2786 = vpop.f32.mrb[0].mxu0
      %v2787 = vpop.f32.mrb[0].mxu0
      %v2788 = vadd.f32 0.0, %v2787
      %v2789 = vpop.f32.mrb[0].mxu0
      %2790 = vmatprep.mubr.bf16.mxu0 0
      %2791 = vmatmul.mubr.bf16.gmra.mrb[0].mxu0 %v1397
      %v2792 = vpop.f32.mrb[0].mxu0
      %v2793 = vadd.f32 0.0, %v2792
      %v2794 = vpop.f32.mrb[0].mxu0
      %v2795 = vpop.f32.mrb[0].mxu0
      %v2796 = vadd.f32 0.0, %v2795
      %v2797 = vpop.f32.mrb[0].mxu0
      %2798 = vmatprep.mubr.bf16.mxu0 0
      %2799 = vmatmul.mubr.bf16.gmra.mrb[0].mxu0 %v1400
      %v2800 = vpop.f32.mrb[0].mxu0
      %v2801 = vadd.f32 0.0, %v2800
      %v2802 = vpop.f32.mrb[0].mxu0
      %v2803 = vpop.f32.mrb[0].mxu0
      %v2804 = vadd.f32 0.0, %v2803
      %v2805 = vpop.f32.mrb[0].mxu0
      %2806 = vmatprep.mubr.bf16.mxu0 0
      %2807 = vmatmul.mubr.bf16.gmra.mrb[0].mxu0 %v1403
      %v2808 = vpop.f32.mrb[0].mxu0
      %v2809 = vadd.f32 0.0, %v2808
      %v2810 = vpop.f32.mrb[0].mxu0
      %v2811 = vpop.f32.mrb[0].mxu0
      %v2812 = vadd.f32 0.0, %v2811
      %v2813 = vpop.f32.mrb[0].mxu0
      %2814 = vmatprep.mubr.bf16.mxu0 0
      %2815 = vmatmul.mubr.bf16.gmra.mrb[0].mxu0 %v1406
      %v2816 = vpop.f32.mrb[0].mxu0
      %v2817 = vadd.f32 0.0, %v2816
      %v2818 = vpop.f32.mrb[0].mxu0
      %v2819 = vpop.f32.mrb[0].mxu0
      %v2820 = vadd.f32 0.0, %v2819
      %v2821 = vpop.f32.mrb[0].mxu0
      %2822 = vmatprep.mubr.bf16.mxu0 0
      %2823 = vmatmul.mubr.bf16.gmra.mrb[0].mxu0 %v1409
      %v2824 = vpop.f32.mrb[0].mxu0
      %v2825 = vadd.f32 0.0, %v2824
      %v2826 = vpop.f32.mrb[0].mxu0
      %v2827 = vpop.f32.mrb[0].mxu0
      %v2828 = vadd.f32 0.0, %v2827
      %v2829 = vpop.f32.mrb[0].mxu0
      %2830 = vmatprep.mubr.bf16.mxu0 0
      %2831 = vmatmul.mubr.bf16.gmra.mrb[0].mxu0 %v1412
      %v2832 = vpop.f32.mrb[0].mxu0
      %v2833 = vadd.f32 0.0, %v2832
      %v2834 = vpop.f32.mrb[0].mxu0
      %v2835 = vpop.f32.mrb[0].mxu0
      %v2836 = vadd.f32 0.0, %v2835
      %v2837 = vpop.f32.mrb[0].mxu0
      %2838 = vmatprep.mubr.bf16.mxu0 0
      %2839 = vmatmul.mubr.bf16.gmra.mrb[0].mxu0 %v1415
      %v2840 = vpop.f32.mrb[0].mxu0
      %v2841 = vadd.f32 0.0, %v2840
      %v2842 = vpop.f32.mrb[0].mxu0
      %v2843 = vpop.f32.mrb[0].mxu0
      %v2844 = vadd.f32 0.0, %v2843
      %v2845 = vpop.f32.mrb[0].mxu0
      %2846 = vmatprep.mubr.bf16.mxu0 0
      %2847 = vmatmul.mubr.bf16.gmra.mrb[0].mxu0 %v1418
      %v2848 = vpop.f32.mrb[0].mxu0
      %v2849 = vadd.f32 0.0, %v2848
      %v2850 = vpop.f32.mrb[0].mxu0
      %v2851 = vpop.f32.mrb[0].mxu0
      %v2852 = vadd.f32 0.0, %v2851
      %v2853 = vpop.f32.mrb[0].mxu0
      %2854 = vmatprep.mubr.bf16.mxu0 0
      %2855 = vmatmul.mubr.bf16.gmra.mrb[0].mxu0 %v1421
      %v2856 = vpop.f32.mrb[0].mxu0
      %v2857 = vadd.f32 0.0, %v2856
      %v2858 = vpop.f32.mrb[0].mxu0
      %v2859 = vpop.f32.mrb[0].mxu0
      %v2860 = vadd.f32 0.0, %v2859
      %v2861 = vpop.f32.mrb[0].mxu0
      %2862 = vmatprep.mubr.bf16.mxu0 0
      %2863 = vmatmul.mubr.bf16.gmra.mrb[0].mxu0 %v2067
      %v2864 = vpop.f32.mrb[0].mxu0
      %v2865 = vadd.f32 0.0, %v2864
      %v2866 = vpop.f32.mrb[0].mxu0
      %v2867 = vpop.f32.mrb[0].mxu0
      %v2868 = vadd.f32 0.0, %v2867
      %v2869 = vpop.f32.mrb[0].mxu0
      %2870 = vmatprep.mubr.bf16.mxu0 0
      %2871 = vmatmul.mubr.bf16.gmra.mrb[0].mxu0 %v2713
      %v2872 = vpop.f32.mrb[0].mxu0
      %v2873 = vadd.f32 0.0, %v2872
      %v2874 = vpop.f32.mrb[0].mxu0
      %v2875 = vpop.f32.mrb[0].mxu0
      %v2876 = vadd.f32 0.0, %v2875
      %v2877 = vpop.f32.mrb[0].mxu0
      %2878 = vdwg.mxu0
      %v2879 = vadd.f32 %v2667, %v2753
      %v2880 = vadd.f32 %v2668, %v2756
      %v2881 = vadd.f32 %v2669, %v2761
      %v2882 = vadd.f32 %v2670, %v2764
      %v2883 = vadd.f32 %v2671, %v2769
      %v2884 = vadd.f32 %v2672, %v2772
      %v2885 = vadd.f32 %v2673, %v2777
      %v2886 = vadd.f32 %v2674, %v2780
      %v2887 = vadd.f32 %v2675, %v2785
      %v2888 = vadd.f32 %v2676, %v2788
      %v2889 = vadd.f32 %v2677, %v2793
      %v2890 = vadd.f32 %v2678, %v2796
      %v2891 = vadd.f32 %v2679, %v2801
      %v2892 = vadd.f32 %v2680, %v2804
      %v2893 = vadd.f32 %v2681, %v2809
      %v2894 = vadd.f32 %v2682, %v2812
      %v2895 = vadd.f32 %v2683, %v2817
      %v2896 = vadd.f32 %v2684, %v2820
      %v2897 = vadd.f32 %v2685, %v2825
      %v2898 = vadd.f32 %v2686, %v2828
      %v2899 = vadd.f32 %v2687, %v2833
      %v2900 = vadd.f32 %v2688, %v2836
      %v2901 = vadd.f32 %v2689, %v2841
      %v2902 = vadd.f32 %v2690, %v2844
      %v2903 = vadd.f32 %v2691, %v2849
      %v2904 = vadd.f32 %v2692, %v2852
      %v2905 = vadd.f32 %v2693, %v2857
      %v2906 = vadd.f32 %v2694, %v2860
      %v2907 = vadd.f32 %v2695, %v2865
      %v2908 = vadd.f32 %v2696, %v2868
      %v2909 = vadd.f32 %v2697, %v2873
      %v2910 = vadd.f32 %v2698, %v2876
      %v2911 = vld [vmem:[%s2] sm:$0x1]
      %v2913 = vlaneseq
      %v2914 = vshrl.u32 %v2913, 7
      %v2915 = vsub.s32 0, %v2914
      %v2916 = vrot.slane %v2911, %v2915
      %v2918 = vadd.f32 %v2879, %v2916
      %v2919 = vadd.f32 %v2880, %v2916
      %v2920 = vadd.f32 %v2881, %v2916
      %v2921 = vadd.f32 %v2882, %v2916
      %v2922 = vadd.f32 %v2883, %v2916
      %v2923 = vadd.f32 %v2884, %v2916
      %v2924 = vadd.f32 %v2885, %v2916
      %v2925 = vadd.f32 %v2886, %v2916
      %v2926 = vadd.f32 %v2887, %v2916
      %v2927 = vadd.f32 %v2888, %v2916
      %v2928 = vadd.f32 %v2889, %v2916
      %v2929 = vadd.f32 %v2890, %v2916
      %v2930 = vadd.f32 %v2891, %v2916
      %v2931 = vadd.f32 %v2892, %v2916
      %v2932 = vadd.f32 %v2893, %v2916
      %v2933 = vadd.f32 %v2894, %v2916
      %v2934 = vadd.f32 %v2895, %v2916
      %v2935 = vadd.f32 %v2896, %v2916
      %v2936 = vadd.f32 %v2897, %v2916
      %v2937 = vadd.f32 %v2898, %v2916
      %v2938 = vadd.f32 %v2899, %v2916
      %v2939 = vadd.f32 %v2900, %v2916
      %v2940 = vadd.f32 %v2901, %v2916
      %v2941 = vadd.f32 %v2902, %v2916
      %v2942 = vadd.f32 %v2903, %v2916
      %v2943 = vadd.f32 %v2904, %v2916
      %v2944 = vadd.f32 %v2905, %v2916
      %v2945 = vadd.f32 %v2906, %v2916
      %v2946 = vadd.f32 %v2907, %v2916
      %v2947 = vadd.f32 %v2908, %v2916
      %v2948 = vadd.f32 %v2909, %v2916
      %v2949 = vadd.f32 %v2910, %v2916
      %v2950 = vmul.f32 %v2918, 0.5
      %v2951 = vmul.f32 %v2919, 0.5
      %v2952 = vmul.f32 %v2920, 0.5
      %v2953 = vmul.f32 %v2921, 0.5
      %v2954 = vmul.f32 %v2922, 0.5
      %v2955 = vmul.f32 %v2923, 0.5
      %v2956 = vmul.f32 %v2924, 0.5
      %v2957 = vmul.f32 %v2925, 0.5
      %v2958 = vmul.f32 %v2926, 0.5
      %v2959 = vmul.f32 %v2927, 0.5
      %v2960 = vmul.f32 %v2928, 0.5
      %v2961 = vmul.f32 %v2929, 0.5
      %v2962 = vmul.f32 %v2930, 0.5
      %v2963 = vmul.f32 %v2931, 0.5
      %v2964 = vmul.f32 %v2932, 0.5
      %v2965 = vmul.f32 %v2933, 0.5
      %v2966 = vmul.f32 %v2934, 0.5
      %v2967 = vmul.f32 %v2935, 0.5
      %v2968 = vmul.f32 %v2936, 0.5
      %v2969 = vmul.f32 %v2937, 0.5
      %v2970 = vmul.f32 %v2938, 0.5
      %v2971 = vmul.f32 %v2939, 0.5
      %v2972 = vmul.f32 %v2940, 0.5
      %v2973 = vmul.f32 %v2941, 0.5
      %v2974 = vmul.f32 %v2942, 0.5
      %v2975 = vmul.f32 %v2943, 0.5
      %v2976 = vmul.f32 %v2944, 0.5
      %v2977 = vmul.f32 %v2945, 0.5
      %v2978 = vmul.f32 %v2946, 0.5
      %v2979 = vmul.f32 %v2947, 0.5
      %v2980 = vmul.f32 %v2948, 0.5
      %v2981 = vmul.f32 %v2949, 0.5
      %v2982 = vtanh.pop %v2950
      %v2983 = vtanh.pop %v2951
      %v2984 = vtanh.pop %v2952
      %v2985 = vtanh.pop %v2953
      %v2986 = vtanh.pop %v2954
      %v2987 = vtanh.pop %v2955
      %v2988 = vtanh.pop %v2956
      %v2989 = vtanh.pop %v2957
      %v2990 = vtanh.pop %v2958
      %v2991 = vtanh.pop %v2959
      %v2992 = vtanh.pop %v2960
      %v2993 = vtanh.pop %v2961
      %v2994 = vtanh.pop %v2962
      %v2995 = vtanh.pop %v2963
      %v2996 = vtanh.pop %v2964
      %v2997 = vtanh.pop %v2965
      %v2998 = vtanh.pop %v2966
      %v2999 = vtanh.pop %v2967
      %v3000 = vtanh.pop %v2968
      %v3001 = vtanh.pop %v2969
      %v3002 = vtanh.pop %v2970
      %v3003 = vtanh.pop %v2971
      %v3004 = vtanh.pop %v2972
      %v3005 = vtanh.pop %v2973
      %v3006 = vtanh.pop %v2974
      %v3007 = vtanh.pop %v2975
      %v3008 = vtanh.pop %v2976
      %v3009 = vtanh.pop %v2977
      %v3010 = vtanh.pop %v2978
      %v3011 = vtanh.pop %v2979
      %v3012 = vtanh.pop %v2980
      %v3013 = vtanh.pop %v2981
      %v3014 = vadd.f32 %v2982, 1.0
      %v3015 = vadd.f32 %v2983, 1.0
      %v3016 = vadd.f32 %v2984, 1.0
      %v3017 = vadd.f32 %v2985, 1.0
      %v3018 = vadd.f32 %v2986, 1.0
      %v3019 = vadd.f32 %v2987, 1.0
      %v3020 = vadd.f32 %v2988, 1.0
      %v3021 = vadd.f32 %v2989, 1.0
      %v3022 = vadd.f32 %v2990, 1.0
      %v3023 = vadd.f32 %v2991, 1.0
      %v3024 = vadd.f32 %v2992, 1.0
      %v3025 = vadd.f32 %v2993, 1.0
      %v3026 = vadd.f32 %v2994, 1.0
      %v3027 = vadd.f32 %v2995, 1.0
      %v3028 = vadd.f32 %v2996, 1.0
      %v3029 = vadd.f32 %v2997, 1.0
      %v3030 = vadd.f32 %v2998, 1.0
      %v3031 = vadd.f32 %v2999, 1.0
      %v3032 = vadd.f32 %v3000, 1.0
      %v3033 = vadd.f32 %v3001, 1.0
      %v3034 = vadd.f32 %v3002, 1.0
      %v3035 = vadd.f32 %v3003, 1.0
      %v3036 = vadd.f32 %v3004, 1.0
      %v3037 = vadd.f32 %v3005, 1.0
      %v3038 = vadd.f32 %v3006, 1.0
      %v3039 = vadd.f32 %v3007, 1.0
      %v3040 = vadd.f32 %v3008, 1.0
      %v3041 = vadd.f32 %v3009, 1.0
      %v3042 = vadd.f32 %v3010, 1.0
      %v3043 = vadd.f32 %v3011, 1.0
      %v3044 = vadd.f32 %v3012, 1.0
      %v3045 = vadd.f32 %v3013, 1.0
      %v3046 = vmul.f32 %v2950, %v3014
      %v3047 = vmul.f32 %v2951, %v3015
      %v3048 = vmul.f32 %v2952, %v3016
      %v3049 = vmul.f32 %v2953, %v3017
      %v3050 = vmul.f32 %v2954, %v3018
      %v3051 = vmul.f32 %v2955, %v3019
      %v3052 = vmul.f32 %v2956, %v3020
      %v3053 = vmul.f32 %v2957, %v3021
      %v3054 = vmul.f32 %v2958, %v3022
      %v3055 = vmul.f32 %v2959, %v3023
      %v3056 = vmul.f32 %v2960, %v3024
      %v3057 = vmul.f32 %v2961, %v3025
      %v3058 = vmul.f32 %v2962, %v3026
      %v3059 = vmul.f32 %v2963, %v3027
      %v3060 = vmul.f32 %v2964, %v3028
      %v3061 = vmul.f32 %v2965, %v3029
      %v3062 = vmul.f32 %v2966, %v3030
      %v3063 = vmul.f32 %v2967, %v3031
      %v3064 = vmul.f32 %v2968, %v3032
      %v3065 = vmul.f32 %v2969, %v3033
      %v3066 = vmul.f32 %v2970, %v3034
      %v3067 = vmul.f32 %v2971, %v3035
      %v3068 = vmul.f32 %v2972, %v3036
      %v3069 = vmul.f32 %v2973, %v3037
      %v3070 = vmul.f32 %v2974, %v3038
      %v3071 = vmul.f32 %v2975, %v3039
      %v3072 = vmul.f32 %v2976, %v3040
      %v3073 = vmul.f32 %v2977, %v3041
      %v3074 = vmul.f32 %v2978, %v3042
      %v3075 = vmul.f32 %v2979, %v3043
      %v3076 = vmul.f32 %v2980, %v3044
      %v3077 = vmul.f32 %v2981, %v3045
      %v3078 = vpack.c.bf16 %v3047, %v3046
      %v3079 = vpack.c.bf16 %v3049, %v3048
      %v3080 = vpack.c.bf16 %v3051, %v3050
      %v3081 = vpack.c.bf16 %v3053, %v3052
      %v3082 = vpack.c.bf16 %v3055, %v3054
      %v3083 = vpack.c.bf16 %v3057, %v3056
      %v3084 = vpack.c.bf16 %v3059, %v3058
      %v3085 = vpack.c.bf16 %v3061, %v3060
      %v3086 = vpack.c.bf16 %v3063, %v3062
      %v3087 = vpack.c.bf16 %v3065, %v3064
      %v3088 = vpack.c.bf16 %v3067, %v3066
      %v3089 = vpack.c.bf16 %v3069, %v3068
      %v3090 = vpack.c.bf16 %v3071, %v3070
      %v3091 = vpack.c.bf16 %v3073, %v3072
      %v3092 = vpack.c.bf16 %v3075, %v3074
      %v3093 = vpack.c.bf16 %v3077, %v3076
      %v3110 = vunpack.c.l.b16 %v3078
      %v3111 = vunpack.c.h.b16 %v3078
      %v3112 = vunpack.c.l.b16 %v3079
      %v3113 = vunpack.c.h.b16 %v3079
      %v3114 = vunpack.c.l.b16 %v3080
      %v3115 = vunpack.c.h.b16 %v3080
      %v3116 = vunpack.c.l.b16 %v3081
      %v3117 = vunpack.c.h.b16 %v3081
      %v3118 = vunpack.c.l.b16 %v3082
      %v3119 = vunpack.c.h.b16 %v3082
      %v3120 = vunpack.c.l.b16 %v3083
      %v3121 = vunpack.c.h.b16 %v3083
      %v3122 = vunpack.c.l.b16 %v3084
      %v3123 = vunpack.c.h.b16 %v3084
      %v3124 = vunpack.c.l.b16 %v3085
      %v3125 = vunpack.c.h.b16 %v3085
      %v3126 = vunpack.c.l.b16 %v3086
      %v3127 = vunpack.c.h.b16 %v3086
      %v3128 = vunpack.c.l.b16 %v3087
      %v3129 = vunpack.c.h.b16 %v3087
      %v3130 = vunpack.c.l.b16 %v3088
      %v3131 = vunpack.c.h.b16 %v3088
      %v3132 = vunpack.c.l.b16 %v3089
      %v3133 = vunpack.c.h.b16 %v3089
      %v3134 = vunpack.c.l.b16 %v3090
      %v3135 = vunpack.c.h.b16 %v3090
      %v3136 = vunpack.c.l.b16 %v3091
      %v3137 = vunpack.c.h.b16 %v3091
      %v3138 = vunpack.c.l.b16 %v3092
      %v3139 = vunpack.c.h.b16 %v3092
      %v3140 = vunpack.c.l.b16 %v3093
      %v3141 = vunpack.c.h.b16 %v3093
      %v3142 = vpack.c.b16 %v3110, %v3110
      %v3143 = vpack.c.b16 %v3111, %v3111
      %v3144 = vpack.c.b16 %v3112, %v3112
      %v3145 = vpack.c.b16 %v3113, %v3113
      %v3146 = vpack.c.b16 %v3114, %v3114
      %v3147 = vpack.c.b16 %v3115, %v3115
      %v3148 = vpack.c.b16 %v3116, %v3116
      %v3149 = vpack.c.b16 %v3117, %v3117
      %v3150 = vpack.c.b16 %v3118, %v3118
      %v3151 = vpack.c.b16 %v3119, %v3119
      %v3152 = vpack.c.b16 %v3120, %v3120
      %v3153 = vpack.c.b16 %v3121, %v3121
      %v3154 = vpack.c.b16 %v3122, %v3122
      %v3155 = vpack.c.b16 %v3123, %v3123
      %v3156 = vpack.c.b16 %v3124, %v3124
      %v3157 = vpack.c.b16 %v3125, %v3125
      %v3158 = vpack.c.b16 %v3126, %v3126
      %v3159 = vpack.c.b16 %v3127, %v3127
      %v3160 = vpack.c.b16 %v3128, %v3128
      %v3161 = vpack.c.b16 %v3129, %v3129
      %v3162 = vpack.c.b16 %v3130, %v3130
      %v3163 = vpack.c.b16 %v3131, %v3131
      %v3164 = vpack.c.b16 %v3132, %v3132
      %v3165 = vpack.c.b16 %v3133, %v3133
      %v3166 = vpack.c.b16 %v3134, %v3134
      %v3167 = vpack.c.b16 %v3135, %v3135
      %v3168 = vpack.c.b16 %v3136, %v3136
      %v3169 = vpack.c.b16 %v3137, %v3137
      %v3170 = vpack.c.b16 %v3138, %v3138
      %v3171 = vpack.c.b16 %v3139, %v3139
      %v3172 = vpack.c.b16 %v3140, %v3140
      %v3173 = vpack.c.b16 %v3141, %v3141
      %vm3206 = vcmask 60416
      %3207 = vst.msk [vmem:[%s193] sm:$0xf] %vm3206, %v3142
      %3208 = vst.msk [vmem:[%s193 + $0x4] sm:$0xf] %vm3206, %v3143
      %3209 = vst.msk [vmem:[%s193 + $0x8] sm:$0xf] %vm3206, %v3144
      %3210 = vst.msk [vmem:[%s193 + $0xc] sm:$0xf] %vm3206, %v3145
      %3211 = vst.msk [vmem:[%s193 + $0x10] sm:$0xf] %vm3206, %v3146
      %3212 = vst.msk [vmem:[%s193 + $0x14] sm:$0xf] %vm3206, %v3147
      %3213 = vst.msk [vmem:[%s193 + $0x18] sm:$0xf] %vm3206, %v3148
      %3214 = vst.msk [vmem:[%s193 + $0x1c] sm:$0xf] %vm3206, %v3149
      %3215 = vst.msk [vmem:[%s193 + $0x20] sm:$0xf] %vm3206, %v3150
      %3216 = vst.msk [vmem:[%s193 + $0x24] sm:$0xf] %vm3206, %v3151
      %3217 = vst.msk [vmem:[%s193 + $0x28] sm:$0xf] %vm3206, %v3152
      %3218 = vst.msk [vmem:[%s193 + $0x2c] sm:$0xf] %vm3206, %v3153
      %3219 = vst.msk [vmem:[%s193 + $0x30] sm:$0xf] %vm3206, %v3154
      %3220 = vst.msk [vmem:[%s193 + $0x34] sm:$0xf] %vm3206, %v3155
      %3221 = vst.msk [vmem:[%s193 + $0x38] sm:$0xf] %vm3206, %v3156
      %3222 = vst.msk [vmem:[%s193 + $0x3c] sm:$0xf] %vm3206, %v3157
      %3223 = vst.msk [vmem:[%s193 + $0x40] sm:$0xf] %vm3206, %v3158
      %3224 = vst.msk [vmem:[%s193 + $0x44] sm:$0xf] %vm3206, %v3159
      %3225 = vst.msk [vmem:[%s193 + $0x48] sm:$0xf] %vm3206, %v3160
      %3226 = vst.msk [vmem:[%s193 + $0x4c] sm:$0xf] %vm3206, %v3161
      %3227 = vst.msk [vmem:[%s193 + $0x50] sm:$0xf] %vm3206, %v3162
      %3228 = vst.msk [vmem:[%s193 + $0x54] sm:$0xf] %vm3206, %v3163
      %3229 = vst.msk [vmem:[%s193 + $0x58] sm:$0xf] %vm3206, %v3164
      %3230 = vst.msk [vmem:[%s193 + $0x5c] sm:$0xf] %vm3206, %v3165
      %3231 = vst.msk [vmem:[%s193 + $0x60] sm:$0xf] %vm3206, %v3166
      %3232 = vst.msk [vmem:[%s193 + $0x64] sm:$0xf] %vm3206, %v3167
      %3233 = vst.msk [vmem:[%s193 + $0x68] sm:$0xf] %vm3206, %v3168
      %3234 = vst.msk [vmem:[%s193 + $0x6c] sm:$0xf] %vm3206, %v3169
      %3235 = vst.msk [vmem:[%s193 + $0x70] sm:$0xf] %vm3206, %v3170
      %3236 = vst.msk [vmem:[%s193 + $0x74] sm:$0xf] %vm3206, %v3171
      %3237 = vst.msk [vmem:[%s193 + $0x78] sm:$0xf] %vm3206, %v3172
      %3238 = vst.msk [vmem:[%s193 + $0x7c] sm:$0xf] %vm3206, %v3173
      %s3239 = sadd.s32 %s18, %s19
      %p3240 = scmp.lt.s32.totalorder %s3239, 1
      %s3241 = scalar_select %p3240, %s3239, 1
      %s3242 = smul.addr %s3241, 32
      %s3243 = smul.addr %s3242, 4
      %s3244 = scalar_lea.vmem %s3, %s3243
      // Predicated region
      $region33: #{cnn_block_forward.3} parent=31 // pred_check
        %p3245 = pneg %p116
      $region34: #{cnn_block_forward.3} parent=31 // pred_check_branch
        %3247 = sbr.rel (%p3245) target = $region36
      $region35: #{cnn_block_forward.3} parent=31 // pred_region
        %s3248 = sadd.s32 %s18, %s19
      $region36: #{cnn_block_forward.3} parent=31 // pred_fallthru
        _
    $region32: #{cnn_block_forward.3} parent=5 // pred_fallthru
      _
    %p3249 = scmp.le.s32.totalorder 2, %s9
    // Predicated region
    $region37: #{cnn_block_forward.3} parent=5 // pred_check
      %p3250 = pneg %p3249
    $region38: #{cnn_block_forward.3} parent=5 // pred_check_branch
      %3252 = sbr.rel (%p3250) target = $region40
    $region39: #{cnn_block_forward.3} parent=5 // pred_region
      %s3253 = ssub.s32 %s9, 2
      // Predicated region
      $region41: #{cnn_block_forward.3} parent=39 // pred_check
        %p3254 = pneg %p122
      $region42: #{cnn_block_forward.3} parent=39 // pred_check_branch
        %3256 = sbr.rel (%p3254) target = $region44
      $region43: #{cnn_block_forward.3} parent=39 // pred_region
        %s3257 = sadd.s32 %s20, %s21
        %p3258 = scmp.lt.s32.totalorder %s3257, 1
        %s3259 = scalar_select %p3258, %s3257, 1
        %s3260 = smul.addr %s3259, 32
        %s3261 = smul.addr %s3260, 4
        %s3262 = scalar_lea.vmem %s3, %s3261
      $region44: #{cnn_block_forward.3} parent=39 // pred_fallthru
        _
    $region40: #{cnn_block_forward.3} parent=5 // pred_fallthru
      _
  $region6: #{cnn_block_forward.3} parent=0 // loop_footer
    %s13 = sadd.s32 1, %s9
  $region7: #{cnn_block_forward.3} parent=0 // loop_footer_branch
    %8 = sbr.rel target = $region3
  $region8: #{cnn_block_forward.3} parent=0 // loop_exit
    _

</llo_original>
